<compile_context>
chip_gen: v7x
topology: tpu7x:2x2x1
jax: 0.10.0
libtpu: 0.0.40
codegen_flags: <defaults>
</compile_context>

<pallas_src>
import functools

import jax
import jax.numpy as jnp
from jax.experimental import pallas as pl
from jax.experimental.pallas import tpu as pltpu

LANE = 128     # logits are zero-padded to this many columns -> lane-dense vst
SUBLANE = 8

_DTYPES = {"bfloat16": jnp.bfloat16, "float32": jnp.float32}


def _round_up(x, m):
    return (x + m - 1) // m * m


def _device_kind():
    try:
        return jax.devices()[0].device_kind.lower()
    except Exception:
        return ""


def _default_bm():
    """Batch tile: 256 on dual-TC v7x (>=2 parallel steps per 512 rows),
    512 on single-TC v5e/v6e (fewest grid steps)."""
    return 256 if "v7" in _device_kind() else 512


def _epilogue_dtype_name():
    """bf16 bias+ReLU epilogue on v6e/v7x; f32 on v5e/v4 (no bf16 VPU)."""
    kind = _device_kind()
    return "bfloat16" if ("v6" in kind or "v7" in kind) else "float32"


def mlp_kernel(x_ref, w1_ref, b1_ref, w2_ref, b2_ref, w3_ref, b3_ref, o_ref,
               *, act_dtype):
    # fc1 + bias + ReLU  (bf16 MXU operands, f32 accumulation; dropout = identity)
    h1 = jnp.dot(x_ref[...], w1_ref[...], preferred_element_type=jnp.float32)
    h1 = jnp.maximum(h1.astype(act_dtype) + b1_ref[...], 0.0).astype(jnp.bfloat16)
    # fc2 + bias + ReLU  (dropout = identity)
    h2 = jnp.dot(h1, w2_ref[...], preferred_element_type=jnp.float32)
    h2 = jnp.maximum(h2.astype(act_dtype) + b2_ref[...], 0.0).astype(jnp.bfloat16)
    # fc3 logits (lane-padded to 128 columns); bias add + store in f32.
    o = jnp.dot(h2, w3_ref[...], preferred_element_type=jnp.float32)
    o_ref[...] = (o + b3_ref[...]).astype(o_ref.dtype)


def prepare_params(w1, b1, w2, b2, w3, b3):
    """One-time parameter prep, hoisted out of the per-call forward.

    Weights (in, out layout) are pre-cast to bf16, fc3/b3 are pre-padded to a
    multiple of 128 output columns, fc1/fc2 biases are stored in the epilogue
    dtype.  Returns (prepped_params, num_classes).
    """
    act_dtype = _DTYPES[_epilogue_dtype_name()]
    H2, C = w3.shape
    C_pad = _round_up(C, LANE)
    w3_pad = jnp.zeros((H2, C_pad), jnp.bfloat16).at[:, :C].set(w3.astype(jnp.bfloat16))
    b3_pad = jnp.zeros((1, C_pad), jnp.float32).at[:, :C].set(b3.astype(jnp.float32))
    prepped = (
        w1.astype(jnp.bfloat16), b1.astype(act_dtype),
        w2.astype(jnp.bfloat16), b2.astype(act_dtype),
        w3_pad, b3_pad,
    )
    return prepped, C


@functools.partial(jax.jit, static_argnames=("num_classes", "bm", "act_dtype_name"))
def _forward(x, w1, b1, w2, b2, w3, b3, *, num_classes, bm, act_dtype_name):
    B, D_in = x.shape
    H1 = w1.shape[1]           # 1024
    H2 = w2.shape[1]           # 512
    C_pad = w3.shape[1]        # num_classes rounded up to 128
    act_dtype = _DTYPES[act_dtype_name]

    # Balanced batch tiling: n_steps = ceil(B/bm) grid steps, <=7 padded rows.
    n_steps = max(1, -(-B // bm))
    bm_eff = _round_up(-(-B // n_steps), SUBLANE)
    B_pad = bm_eff * n_steps

    x_b = x.astype(jnp.bfloat16)
    if B_pad != B:  # skip the pad copy when the batch is already tile-aligned
        x_b = jnp.zeros((B_pad, D_in), jnp.bfloat16).at[:B].set(x_b)

    out = pl.pallas_call(
        functools.partial(mlp_kernel, act_dtype=act_dtype),
        out_shape=jax.ShapeDtypeStruct((B_pad, C_pad), jnp.float32),
        grid_spec=pltpu.PrefetchScalarGridSpec(
            num_scalar_prefetch=0,
            grid=(n_steps,),
            in_specs=[
                pl.BlockSpec((bm_eff, D_in), lambda i: (i, 0)),  # x batch tile
                pl.BlockSpec((D_in, H1), lambda i: (0, 0)),      # w1 (resident)
                pl.BlockSpec((1, H1), lambda i: (0, 0)),         # b1
                pl.BlockSpec((H1, H2), lambda i: (0, 0)),        # w2 (resident)
                pl.BlockSpec((1, H2), lambda i: (0, 0)),         # b2
                pl.BlockSpec((H2, C_pad), lambda i: (0, 0)),     # w3 (lane-padded)
                pl.BlockSpec((1, C_pad), lambda i: (0, 0)),      # b3 (lane-padded)
            ],
            out_specs=pl.BlockSpec((bm_eff, C_pad), lambda i: (i, 0)),
        ),
        compiler_params=pltpu.CompilerParams(
            dimension_semantics=("parallel",)),  # batch axis -> megacore on v7x
    )(x_b, w1, b1, w2, b2, w3, b3)

    return out[:B, :num_classes]


def large_model_forward(x, prepped_params, num_classes, *, bm=None):
    """y = fc3(relu(fc2(relu(fc1(x))))) on pre-prepared params (eval-mode dropout)."""
    if bm is None:
        bm = _default_bm()
    return _forward(x, *prepped_params, num_classes=num_classes, bm=bm,
                    act_dtype_name=_epilogue_dtype_name())


def init_params(key, input_size, num_classes):
    """Deterministic init mirroring nn.Linear's U(-1/sqrt(fan_in), 1/sqrt(fan_in))."""
    def linear(k, fan_in, fan_out):
        kw, kb = jax.random.split(k)
        bound = 1.0 / jnp.sqrt(jnp.float32(fan_in))
        w = jax.random.uniform(kw, (fan_in, fan_out), jnp.float32, -bound, bound)
        b = jax.random.uniform(kb, (1, fan_out), jnp.float32, -bound, bound)
        return w, b

    k1, k2, k3 = jax.random.split(key, 3)
    w1, b1 = linear(k1, input_size, 1024)
    w2, b2 = linear(k2, 1024, 512)
    w3, b3 = linear(k3, 512, num_classes)
    return w1, b1, w2, b2, w3, b3


if __name__ == "__main__":
    input_size = 32
    num_classes = 2
    batch = 256  # small, tile-aligned: single grid step on every generation

    key = jax.random.PRNGKey(0)
    kx, kp = jax.random.split(key)
    x = jax.random.normal(kx, (batch, input_size), jnp.float32)
    raw_params = init_params(kp, input_size, num_classes)

    # One-time param prep (hoisted out of the forward path, per perf review).
    prepped, n_cls = prepare_params(*raw_params)
    prepped = jax.block_until_ready(prepped)

    out = large_model_forward(x, prepped, n_cls)
    out = jax.block_until_ready(out)
    assert out.shape == (batch, num_classes)
    assert out.dtype == jnp.float32

    # Pure-f32 reference (true PyTorch semantics, eval-mode dropout = identity).
    # The kernel uses bf16 MXU operands, so allow bf16-level tolerance.
    w1, b1, w2, b2, w3, b3 = raw_params
    h1 = jnp.maximum(x @ w1 + b1, 0.0)
    h2 = jnp.maximum(h1 @ w2 + b2, 0.0)
    ref = h2 @ w3 + b3
    assert jnp.allclose(out, ref, atol=5e-2, rtol=5e-2), (
        float(jnp.max(jnp.abs(out - ref))))

    print("KERNEL_OK")
</pallas_src>

<mosaic_0001>
module attributes {stable_mosaic.version = 11 : i64} {
  func.func @mlp_kernel(%arg0: i32, %arg1: memref<256x32xbf16, #tpu.memory_space<vmem>>, %arg2: memref<32x1024xbf16, #tpu.memory_space<vmem>>, %arg3: memref<1x1024xf32, #tpu.memory_space<vmem>>, %arg4: memref<1024x512xbf16, #tpu.memory_space<vmem>>, %arg5: memref<1x512xf32, #tpu.memory_space<vmem>>, %arg6: memref<512x128xbf16, #tpu.memory_space<vmem>>, %arg7: memref<1x128xf32, #tpu.memory_space<vmem>>, %arg8: memref<256x128xf32, #tpu.memory_space<vmem>>) attributes {dimension_semantics = [#tpu.dimension_semantics<parallel>], iteration_bounds = array<i64: 1>, scalar_prefetch = 0 : i64, scratch_operands = 0 : i64, tpu.core_type = #tpu.core_type<tc>, window_params = [{transform_indices = @transform_0, window_bounds = array<i64: 256, 32>}, {pipeline_mode = #tpu.pipeline_mode<synchronous>, transform_indices = @transform_1, window_bounds = array<i64: 32, 1024>}, {pipeline_mode = #tpu.pipeline_mode<synchronous>, transform_indices = @transform_2, window_bounds = array<i64: 1, 1024>}, {pipeline_mode = #tpu.pipeline_mode<synchronous>, transform_indices = @transform_3, window_bounds = array<i64: 1024, 512>}, {pipeline_mode = #tpu.pipeline_mode<synchronous>, transform_indices = @transform_4, window_bounds = array<i64: 1, 512>}, {pipeline_mode = #tpu.pipeline_mode<synchronous>, transform_indices = @transform_5, window_bounds = array<i64: 512, 128>}, {pipeline_mode = #tpu.pipeline_mode<synchronous>, transform_indices = @transform_6, window_bounds = array<i64: 1, 128>}, {transform_indices = @transform_7, window_bounds = array<i64: 256, 128>}]} {
    %c0 = arith.constant 0 : index
    %c0_0 = arith.constant 0 : index
    %0 = vector.load %arg1[%c0, %c0_0] : memref<256x32xbf16, #tpu.memory_space<vmem>>, vector<256x32xbf16>
    %c0_1 = arith.constant 0 : index
    %c0_2 = arith.constant 0 : index
    %1 = vector.load %arg2[%c0_1, %c0_2] : memref<32x1024xbf16, #tpu.memory_space<vmem>>, vector<32x1024xbf16>
    %cst = arith.constant dense<0.000000e+00> : vector<256x1024xf32>
    %2 = tpu.matmul %0, %1, %cst {dimension_numbers = #tpu.dot_dimension_numbers<[1], [0], [0], [1], [0, 0, 1, 1], [], []>} : vector<256x32xbf16>, vector<32x1024xbf16>, vector<256x1024xf32> -> vector<256x1024xf32>
    %c0_3 = arith.constant 0 : index
    %c0_4 = arith.constant 0 : index
    %3 = vector.load %arg3[%c0_3, %c0_4] : memref<1x1024xf32, #tpu.memory_space<vmem>>, vector<1x1024xf32>
    %4 = vector.broadcast %3 : vector<1x1024xf32> to vector<256x1024xf32>
    %5 = arith.addf %2, %4 : vector<256x1024xf32>
    %cst_5 = arith.constant 0.000000e+00 : f32
    %6 = vector.broadcast %cst_5 : f32 to vector<256x1024xf32>
    %7 = arith.maximumf %5, %6 : vector<256x1024xf32>
    %8 = arith.truncf %7 : vector<256x1024xf32> to vector<256x1024xbf16>
    %c0_6 = arith.constant 0 : index
    %c0_7 = arith.constant 0 : index
    %9 = vector.load %arg4[%c0_6, %c0_7] : memref<1024x512xbf16, #tpu.memory_space<vmem>>, vector<1024x512xbf16>
    %cst_8 = arith.constant dense<0.000000e+00> : vector<256x512xf32>
    %10 = tpu.matmul %8, %9, %cst_8 {dimension_numbers = #tpu.dot_dimension_numbers<[1], [0], [0], [1], [0, 0, 1, 1], [], []>} : vector<256x1024xbf16>, vector<1024x512xbf16>, vector<256x512xf32> -> vector<256x512xf32>
    %c0_9 = arith.constant 0 : index
    %c0_10 = arith.constant 0 : index
    %11 = vector.load %arg5[%c0_9, %c0_10] : memref<1x512xf32, #tpu.memory_space<vmem>>, vector<1x512xf32>
    %12 = vector.broadcast %11 : vector<1x512xf32> to vector<256x512xf32>
    %13 = arith.addf %10, %12 : vector<256x512xf32>
    %cst_11 = arith.constant 0.000000e+00 : f32
    %14 = vector.broadcast %cst_11 : f32 to vector<256x512xf32>
    %15 = arith.maximumf %13, %14 : vector<256x512xf32>
    %16 = arith.truncf %15 : vector<256x512xf32> to vector<256x512xbf16>
    %c0_12 = arith.constant 0 : index
    %c0_13 = arith.constant 0 : index
    %17 = vector.load %arg6[%c0_12, %c0_13] : memref<512x128xbf16, #tpu.memory_space<vmem>>, vector<512x128xbf16>
    %cst_14 = arith.constant dense<0.000000e+00> : vector<256x128xf32>
    %18 = tpu.matmul %16, %17, %cst_14 {dimension_numbers = #tpu.dot_dimension_numbers<[1], [0], [0], [1], [0, 0, 1, 1], [], []>} : vector<256x512xbf16>, vector<512x128xbf16>, vector<256x128xf32> -> vector<256x128xf32>
    %c0_15 = arith.constant 0 : index
    %c0_16 = arith.constant 0 : index
    %19 = vector.load %arg7[%c0_15, %c0_16] : memref<1x128xf32, #tpu.memory_space<vmem>>, vector<1x128xf32>
    %20 = vector.broadcast %19 : vector<1x128xf32> to vector<256x128xf32>
    %21 = arith.addf %18, %20 : vector<256x128xf32>
    %c0_17 = arith.constant 0 : index
    %c0_18 = arith.constant 0 : index
    %22 = vector.load %arg8[%c0_17, %c0_18] : memref<256x128xf32, #tpu.memory_space<vmem>>, vector<256x128xf32>
    tpu.vector_store %arg8[%c0_17, %c0_18], %21 {strides = array<i32>} : memref<256x128xf32, #tpu.memory_space<vmem>>, vector<256x128xf32>,
    return
  }
  func.func @transform_0(%arg0: i32) -> (i32, i32) {
    %c0_i32 = arith.constant 0 : i32
    %c0_i32_0 = arith.constant 0 : i32
    return %arg0, %c0_i32 : i32, i32
  }
  func.func @transform_1(%arg0: i32) -> (i32, i32) {
    %c0_i32 = arith.constant 0 : i32
    %c0_i32_0 = arith.constant 0 : i32
    %c0_i32_1 = arith.constant 0 : i32
    return %c0_i32, %c0_i32_0 : i32, i32
  }
  func.func @transform_2(%arg0: i32) -> (i32, i32) {
    %c0_i32 = arith.constant 0 : i32
    %c0_i32_0 = arith.constant 0 : i32
    %c0_i32_1 = arith.constant 0 : i32
    return %c0_i32, %c0_i32_0 : i32, i32
  }
  func.func @transform_3(%arg0: i32) -> (i32, i32) {
    %c0_i32 = arith.constant 0 : i32
    %c0_i32_0 = arith.constant 0 : i32
    %c0_i32_1 = arith.constant 0 : i32
    return %c0_i32, %c0_i32_0 : i32, i32
  }
  func.func @transform_4(%arg0: i32) -> (i32, i32) {
    %c0_i32 = arith.constant 0 : i32
    %c0_i32_0 = arith.constant 0 : i32
    %c0_i32_1 = arith.constant 0 : i32
    return %c0_i32, %c0_i32_0 : i32, i32
  }
  func.func @transform_5(%arg0: i32) -> (i32, i32) {
    %c0_i32 = arith.constant 0 : i32
    %c0_i32_0 = arith.constant 0 : i32
    %c0_i32_1 = arith.constant 0 : i32
    return %c0_i32, %c0_i32_0 : i32, i32
  }
  func.func @transform_6(%arg0: i32) -> (i32, i32) {
    %c0_i32 = arith.constant 0 : i32
    %c0_i32_0 = arith.constant 0 : i32
    %c0_i32_1 = arith.constant 0 : i32
    return %c0_i32, %c0_i32_0 : i32, i32
  }
  func.func @transform_7(%arg0: i32) -> (i32, i32) {
    %c0_i32 = arith.constant 0 : i32
    %c0_i32_0 = arith.constant 0 : i32
    return %arg0, %c0_i32 : i32, i32
  }
}

</mosaic_0001>

<llo_original>
// kernel: _forward.1
$region0: #{_forward.1}
  #allocation0 [shape = 'u32[]', space=smem, size = 0x4, offset = 0x4, fixed_abs, tag = 'smem constant byte address 0x4 - core index']
  #allocation1 [shape = 'u32[144,128]{1,0:T(1,128)}', space=vmem, size = 0x12000, scoped, tag = 'internal scratch']
  %s0 = inlined_call_operand.vmem [shape: bf16[256,32], index: 0, kind: input, shape index: {}]
  %s1 = inlined_call_operand.hbm [shape: bf16[32,1024], index: 1, kind: input, shape index: {}]
  %s2 = inlined_call_operand.vmem [shape: f32[1,1024], index: 2, kind: input, shape index: {}]
  %s3 = inlined_call_operand.hbm [shape: bf16[1024,512], index: 3, kind: input, shape index: {}]
  %s4 = inlined_call_operand.vmem [shape: f32[1,512], index: 4, kind: input, shape index: {}]
  %s5 = inlined_call_operand.vmem [shape: bf16[512,128], index: 5, kind: input, shape index: {}]
  %s6 = inlined_call_operand.vmem [shape: f32[1,128], index: 6, kind: input, shape index: {}]
  %s7 = inlined_call_operand.vmem [shape: f32[256,128], index: 7, kind: output, shape index: {}]
  %s8 = sld [smem:[#allocation0]]
  $region46: #{_forward.1} parent=0
    _
  %s10 = ssub.s32 1, %s8
  %s11 = scalar_select 0, %s10, %s8
  $region1: #{_forward.1} parent=0
    #allocation2 [shape = 'u8[65536]{0}', space=vmem, size = 0x10000, scoped, tag = 'input window, operand 1, single buffered']
    #allocation3 [shape = 's32[1]{0}', space=sflag, size = 0x4, scoped, tag = 'scoped memory for _forward.1']
    #allocation4 [shape = 'u8[1048576]{0}', space=vmem, size = 0x100000, scoped, tag = 'input window, operand 3, single buffered']
    #allocation5 [shape = 's32[1]{0}', space=sflag, size = 0x4, scoped, tag = 'scoped memory for _forward.1']
    %12 = vsyncpa [#allocation3], 0
    %13 = vsyncpa [#allocation5], 0
    // Predicated region
    $region2: #{_forward.1} parent=1 // pred_check
      _
    $region3: #{_forward.1} parent=1 // pred_check_branch
      %15 = sbr.rel (0) target = $region5
    $region4: #{_forward.1} parent=1 // pred_region
      _
    $region5: #{_forward.1} parent=1 // pred_fallthru
      _
    // Predicated region
    $region6: #{_forward.1} parent=1 // pred_check
      _
    $region7: #{_forward.1} parent=1 // pred_check_branch
      %17 = sbr.rel (0) target = $region9
    $region8: #{_forward.1} parent=1 // pred_region
      %s19 = ssub.s32 2048, 2048
      %20 = vsyncadd [#allocation3], %s19
      %s21 = sshll.u32 [#allocation2], 4
      %s22 = int_to_ptr.vmem [resolvable:$true] %s21
      %27 = dma.hbm_to_vmem [thread:$0]  %s1, 2048, %s22, [#allocation3], 512, 512, 32
    $region9: #{_forward.1} parent=1 // pred_fallthru
      _
    // Predicated region
    $region10: #{_forward.1} parent=1 // pred_check
      _
    $region11: #{_forward.1} parent=1 // pred_check_branch
      %29 = sbr.rel (0) target = $region13
    $region12: #{_forward.1} parent=1 // pred_region
      _
    $region13: #{_forward.1} parent=1 // pred_fallthru
      _
    // Predicated region
    $region14: #{_forward.1} parent=1 // pred_check
      _
    $region15: #{_forward.1} parent=1 // pred_check_branch
      %31 = sbr.rel (0) target = $region17
    $region16: #{_forward.1} parent=1 // pred_region
      %s33 = ssub.s32 32768, 32768
      %34 = vsyncadd [#allocation5], %s33
      %s35 = sshll.u32 [#allocation4], 4
      %s36 = int_to_ptr.vmem [resolvable:$true] %s35
      %41 = dma.hbm_to_vmem [thread:$0]  %s3, 32768, %s36, [#allocation5], 256, 256, 16
    $region17: #{_forward.1} parent=1 // pred_fallthru
      _
    // Predicated region
    $region18: #{_forward.1} parent=1 // pred_check
      _
    $region19: #{_forward.1} parent=1 // pred_check_branch
      %43 = sbr.rel (0) target = $region21
    $region20: #{_forward.1} parent=1 // pred_region
      _
    $region21: #{_forward.1} parent=1 // pred_fallthru
      _
    // Predicated region
    $region22: #{_forward.1} parent=1 // pred_check
      _
    $region23: #{_forward.1} parent=1 // pred_check_branch
      %45 = sbr.rel (0) target = $region25
    $region24: #{_forward.1} parent=1 // pred_region
      _
    $region25: #{_forward.1} parent=1 // pred_fallthru
      _
    // Predicated region
    $region26: #{_forward.1} parent=1 // pred_check
      _
    $region27: #{_forward.1} parent=1 // pred_check_branch
      %47 = sbr.rel (0) target = $region29
    $region28: #{_forward.1} parent=1 // pred_region
      _
    $region29: #{_forward.1} parent=1 // pred_fallthru
      _
    // Predicated region
    $region30: #{_forward.1} parent=1 // pred_check
      _
    $region31: #{_forward.1} parent=1 // pred_check_branch
      %49 = sbr.rel (0) target = $region33
    $region32: #{_forward.1} parent=1 // pred_region
      %50 = dma.done [#allocation3], 2048
    $region33: #{_forward.1} parent=1 // pred_fallthru
      _
    // Predicated region
    $region34: #{_forward.1} parent=1 // pred_check
      _
    $region35: #{_forward.1} parent=1 // pred_check_branch
      %52 = sbr.rel (0) target = $region37
    $region36: #{_forward.1} parent=1 // pred_region
      %53 = dma.done [#allocation5], 32768
    $region37: #{_forward.1} parent=1 // pred_fallthru
      _
    %v55 = vld [vmem:[%s0] sm:$0xf]
    %v56 = vld [vmem:[%s0 + $0x4] sm:$0xf]
    %v57 = vld [vmem:[%s0 + $0x8] sm:$0xf]
    %v58 = vld [vmem:[%s0 + $0xc] sm:$0xf]
    %v59 = vld [vmem:[%s0 + $0x10] sm:$0xf]
    %v60 = vld [vmem:[%s0 + $0x14] sm:$0xf]
    %v61 = vld [vmem:[%s0 + $0x18] sm:$0xf]
    %v62 = vld [vmem:[%s0 + $0x1c] sm:$0xf]
    %v63 = vld [vmem:[%s0 + $0x20] sm:$0xf]
    %v64 = vld [vmem:[%s0 + $0x24] sm:$0xf]
    %v65 = vld [vmem:[%s0 + $0x28] sm:$0xf]
    %v66 = vld [vmem:[%s0 + $0x2c] sm:$0xf]
    %v67 = vld [vmem:[%s0 + $0x30] sm:$0xf]
    %v68 = vld [vmem:[%s0 + $0x34] sm:$0xf]
    %v69 = vld [vmem:[%s0 + $0x38] sm:$0xf]
    %v70 = vld [vmem:[%s0 + $0x3c] sm:$0xf]
    %v71 = vld [vmem:[%s0 + $0x40] sm:$0xf]
    %v72 = vld [vmem:[%s0 + $0x44] sm:$0xf]
    %v73 = vld [vmem:[%s0 + $0x48] sm:$0xf]
    %v74 = vld [vmem:[%s0 + $0x4c] sm:$0xf]
    %v75 = vld [vmem:[%s0 + $0x50] sm:$0xf]
    %v76 = vld [vmem:[%s0 + $0x54] sm:$0xf]
    %v77 = vld [vmem:[%s0 + $0x58] sm:$0xf]
    %v78 = vld [vmem:[%s0 + $0x5c] sm:$0xf]
    %v79 = vld [vmem:[%s0 + $0x60] sm:$0xf]
    %v80 = vld [vmem:[%s0 + $0x64] sm:$0xf]
    %v81 = vld [vmem:[%s0 + $0x68] sm:$0xf]
    %v82 = vld [vmem:[%s0 + $0x6c] sm:$0xf]
    %v83 = vld [vmem:[%s0 + $0x70] sm:$0xf]
    %v84 = vld [vmem:[%s0 + $0x74] sm:$0xf]
    %v85 = vld [vmem:[%s0 + $0x78] sm:$0xf]
    %v86 = vld [vmem:[%s0 + $0x7c] sm:$0xf]
    %v87 = vld [vmem:[#allocation2] sm:$0xff]
    %v88 = vld [vmem:[#allocation2 + $0x8] sm:$0xff]
    %v89 = vld [vmem:[#allocation2 + $0x10] sm:$0xff]
    %v90 = vld [vmem:[#allocation2 + $0x18] sm:$0xff]
    %v91 = vld [vmem:[#allocation2 + $0x20] sm:$0xff]
    %v92 = vld [vmem:[#allocation2 + $0x28] sm:$0xff]
    %v93 = vld [vmem:[#allocation2 + $0x30] sm:$0xff]
    %v94 = vld [vmem:[#allocation2 + $0x38] sm:$0xff]
    %v95 = vld [vmem:[#allocation2 + $0x40] sm:$0xff]
    %v96 = vld [vmem:[#allocation2 + $0x48] sm:$0xff]
    %v97 = vld [vmem:[#allocation2 + $0x50] sm:$0xff]
    %v98 = vld [vmem:[#allocation2 + $0x58] sm:$0xff]
    %v99 = vld [vmem:[#allocation2 + $0x60] sm:$0xff]
    %v100 = vld [vmem:[#allocation2 + $0x68] sm:$0xff]
    %v101 = vld [vmem:[#allocation2 + $0x70] sm:$0xff]
    %v102 = vld [vmem:[#allocation2 + $0x78] sm:$0xff]
    %v103 = vld [vmem:[%s2] sm:$0xff]
    %v105 = vlaneseq
    %v106 = vshrl.u32 %v105, 7
    %v107 = vsub.s32 0, %v106
    %v108 = vrot.slane %v103, %v107
    %v109 = vlaneseq
    %v110 = vshrl.u32 %v109, 7
    %v111 = vsub.s32 1, %v110
    %v112 = vrot.slane %v103, %v111
    %v113 = vlaneseq
    %v114 = vshrl.u32 %v113, 7
    %v115 = vsub.s32 2, %v114
    %v116 = vrot.slane %v103, %v115
    %v117 = vlaneseq
    %v118 = vshrl.u32 %v117, 7
    %v119 = vsub.s32 3, %v118
    %v120 = vrot.slane %v103, %v119
    %v121 = vlaneseq
    %v122 = vshrl.u32 %v121, 7
    %v123 = vsub.s32 4, %v122
    %v124 = vrot.slane %v103, %v123
    %v125 = vlaneseq
    %v126 = vshrl.u32 %v125, 7
    %v127 = vsub.s32 5, %v126
    %v128 = vrot.slane %v103, %v127
    %v129 = vlaneseq
    %v130 = vshrl.u32 %v129, 7
    %v131 = vsub.s32 6, %v130
    %v132 = vrot.slane %v103, %v131
    %v133 = vlaneseq
    %v134 = vshrl.u32 %v133, 7
    %v135 = vsub.s32 7, %v134
    %v136 = vrot.slane %v103, %v135
    %v177 = vunpack.c.l.b16 %v55
    %v178 = vunpack.c.l.b16 %v56
    %v179 = vunpack.c.l.b16 %v57
    %v180 = vunpack.c.l.b16 %v58
    %v181 = vunpack.c.l.b16 %v59
    %v182 = vunpack.c.l.b16 %v60
    %v183 = vunpack.c.l.b16 %v61
    %v184 = vunpack.c.l.b16 %v62
    %v185 = vunpack.c.l.b16 %v63
    %v186 = vunpack.c.l.b16 %v64
    %v187 = vunpack.c.l.b16 %v65
    %v188 = vunpack.c.l.b16 %v66
    %v189 = vunpack.c.l.b16 %v67
    %v190 = vunpack.c.l.b16 %v68
    %v191 = vunpack.c.l.b16 %v69
    %v192 = vunpack.c.l.b16 %v70
    %v193 = vunpack.c.l.b16 %v71
    %v194 = vunpack.c.l.b16 %v72
    %v195 = vunpack.c.l.b16 %v73
    %v196 = vunpack.c.l.b16 %v74
    %v197 = vunpack.c.l.b16 %v75
    %v198 = vunpack.c.l.b16 %v76
    %v199 = vunpack.c.l.b16 %v77
    %v200 = vunpack.c.l.b16 %v78
    %v201 = vunpack.c.l.b16 %v79
    %v202 = vunpack.c.l.b16 %v80
    %v203 = vunpack.c.l.b16 %v81
    %v204 = vunpack.c.l.b16 %v82
    %v205 = vunpack.c.l.b16 %v83
    %v206 = vunpack.c.l.b16 %v84
    %v207 = vunpack.c.l.b16 %v85
    %v208 = vunpack.c.l.b16 %v86
    %v209 = vpack.c.b16 %v178, %v177
    %v210 = vpack.c.b16 %v180, %v179
    %v211 = vpack.c.b16 %v182, %v181
    %v212 = vpack.c.b16 %v184, %v183
    %v213 = vpack.c.b16 %v186, %v185
    %v214 = vpack.c.b16 %v188, %v187
    %v215 = vpack.c.b16 %v190, %v189
    %v216 = vpack.c.b16 %v192, %v191
    %v217 = vpack.c.b16 %v194, %v193
    %v218 = vpack.c.b16 %v196, %v195
    %v219 = vpack.c.b16 %v198, %v197
    %v220 = vpack.c.b16 %v200, %v199
    %v221 = vpack.c.b16 %v202, %v201
    %v222 = vpack.c.b16 %v204, %v203
    %v223 = vpack.c.b16 %v206, %v205
    %v224 = vpack.c.b16 %v208, %v207
    %v241 = vunpack.c.l.b16 %v87
    %v242 = vunpack.c.h.b16 %v87
    %v243 = vunpack.c.l.b16 %v88
    %v244 = vunpack.c.h.b16 %v88
    %v245 = vunpack.c.l.b16 %v89
    %v246 = vunpack.c.h.b16 %v89
    %v247 = vunpack.c.l.b16 %v90
    %v248 = vunpack.c.h.b16 %v90
    %v249 = vunpack.c.l.b16 %v91
    %v250 = vunpack.c.h.b16 %v91
    %v251 = vunpack.c.l.b16 %v92
    %v252 = vunpack.c.h.b16 %v92
    %v253 = vunpack.c.l.b16 %v93
    %v254 = vunpack.c.h.b16 %v93
    %v255 = vunpack.c.l.b16 %v94
    %v256 = vunpack.c.h.b16 %v94
    %v257 = vunpack.c.l.b16 %v95
    %v258 = vunpack.c.h.b16 %v95
    %v259 = vunpack.c.l.b16 %v96
    %v260 = vunpack.c.h.b16 %v96
    %v261 = vunpack.c.l.b16 %v97
    %v262 = vunpack.c.h.b16 %v97
    %v263 = vunpack.c.l.b16 %v98
    %v264 = vunpack.c.h.b16 %v98
    %v265 = vunpack.c.l.b16 %v99
    %v266 = vunpack.c.h.b16 %v99
    %v267 = vunpack.c.l.b16 %v100
    %v268 = vunpack.c.h.b16 %v100
    %v269 = vunpack.c.l.b16 %v101
    %v270 = vunpack.c.h.b16 %v101
    %v271 = vunpack.c.l.b16 %v102
    %v272 = vunpack.c.h.b16 %v102
    %v273 = vpack.c.b16 %v249, %v241
    %v274 = vpack.c.b16 %v250, %v242
    %v275 = vpack.c.b16 %v251, %v243
    %v276 = vpack.c.b16 %v252, %v244
    %v277 = vpack.c.b16 %v253, %v245
    %v278 = vpack.c.b16 %v254, %v246
    %v279 = vpack.c.b16 %v255, %v247
    %v280 = vpack.c.b16 %v256, %v248
    %v281 = vpack.c.b16 %v265, %v257
    %v282 = vpack.c.b16 %v266, %v258
    %v283 = vpack.c.b16 %v267, %v259
    %v284 = vpack.c.b16 %v268, %v260
    %v285 = vpack.c.b16 %v269, %v261
    %v286 = vpack.c.b16 %v270, %v262
    %v287 = vpack.c.b16 %v271, %v263
    %v288 = vpack.c.b16 %v272, %v264
    %vm305 = vcmask 261120
    %v307 = vsel %vm305, %v209, 0
    %v310 = vsel %vm305, %v210, 0
    %v313 = vsel %vm305, %v211, 0
    %v316 = vsel %vm305, %v212, 0
    %v319 = vsel %vm305, %v213, 0
    %v322 = vsel %vm305, %v214, 0
    %v325 = vsel %vm305, %v215, 0
    %v328 = vsel %vm305, %v216, 0
    %v331 = vsel %vm305, %v217, 0
    %v334 = vsel %vm305, %v218, 0
    %v337 = vsel %vm305, %v219, 0
    %v340 = vsel %vm305, %v220, 0
    %v343 = vsel %vm305, %v221, 0
    %v346 = vsel %vm305, %v222, 0
    %v349 = vsel %vm305, %v223, 0
    %v352 = vsel %vm305, %v224, 0
    %354 = vmatprep.subr.bf16.mxu0 %v274
    %355 = vmatpush1.bf16.msra.mxu0 %v273
    %356 = vmatprep.subr.bf16.mxu0 %v282
    %357 = vmatpush1.bf16.msra.mxu0 %v281
    %358 = vmatprep.subr.bf16.mxu0 0
    %359 = vmatpush1.bf16.msra.mxu0 0
    %360 = vmatprep.subr.bf16.mxu0 0
    %361 = vmatpush1.bf16.msra.mxu0 0
    %362 = vmatprep.subr.bf16.mxu0 0
    %363 = vmatpush1.bf16.msra.mxu0 0
    %364 = vmatprep.subr.bf16.mxu0 0
    %365 = vmatpush1.bf16.msra.mxu0 0
    %366 = vmatprep.subr.bf16.mxu0 0
    %367 = vmatpush1.bf16.msra.mxu0 0
    %368 = vmatprep.subr.bf16.mxu0 0
    %369 = vmatpush1.bf16.msra.mxu0 0
    %370 = vmatprep.subr.bf16.mxu0 0
    %371 = vmatpush1.bf16.msra.mxu0 0
    %372 = vmatprep.subr.bf16.mxu0 0
    %373 = vmatpush1.bf16.msra.mxu0 0
    %374 = vmatprep.subr.bf16.mxu0 0
    %375 = vmatpush1.bf16.msra.mxu0 0
    %376 = vmatprep.subr.bf16.mxu0 0
    %377 = vmatpush1.bf16.msra.mxu0 0
    %378 = vmatprep.subr.bf16.mxu0 0
    %379 = vmatpush1.bf16.msra.mxu0 0
    %380 = vmatprep.subr.bf16.mxu0 0
    %381 = vmatpush1.bf16.msra.mxu0 0
    %382 = vmatprep.subr.bf16.mxu0 0
    %383 = vmatpush1.bf16.msra.mxu0 0
    %384 = vmatprep.subr.bf16.mxu0 0
    %385 = vmatpush1.bf16.msra.mxu0 0
    %386 = vmatprep.mubr.bf16.mxu0 0
    %387 = vmatmul.mubr.bf16.gmra.mrb[0].mxu0 %v307
    %v388 = vpop.f32.mrb[0].mxu0
    %v389 = vadd.f32 %v108, %v388
    %v390 = vpop.f32.mrb[0].mxu0
    %v391 = vadd.f32 %v112, %v390
    %v392 = vpop.f32.mrb[0].mxu0
    %v393 = vadd.f32 %v108, %v392
    %v394 = vpop.f32.mrb[0].mxu0
    %v395 = vadd.f32 %v112, %v394
    %396 = vmatprep.mubr.bf16.mxu0 0
    %397 = vmatmul.mubr.bf16.gmra.mrb[0].mxu0 %v310
    %v398 = vpop.f32.mrb[0].mxu0
    %v399 = vadd.f32 %v108, %v398
    %v400 = vpop.f32.mrb[0].mxu0
    %v401 = vadd.f32 %v112, %v400
    %v402 = vpop.f32.mrb[0].mxu0
    %v403 = vadd.f32 %v108, %v402
    %v404 = vpop.f32.mrb[0].mxu0
    %v405 = vadd.f32 %v112, %v404
    %406 = vmatprep.mubr.bf16.mxu0 0
    %407 = vmatmul.mubr.bf16.gmra.mrb[0].mxu0 %v313
    %v408 = vpop.f32.mrb[0].mxu0
    %v409 = vadd.f32 %v108, %v408
    %v410 = vpop.f32.mrb[0].mxu0
    %v411 = vadd.f32 %v112, %v410
    %v412 = vpop.f32.mrb[0].mxu0
    %v413 = vadd.f32 %v108, %v412
    %v414 = vpop.f32.mrb[0].mxu0
    %v415 = vadd.f32 %v112, %v414
    %416 = vmatprep.mubr.bf16.mxu0 0
    %417 = vmatmul.mubr.bf16.gmra.mrb[0].mxu0 %v316
    %v418 = vpop.f32.mrb[0].mxu0
    %v419 = vadd.f32 %v108, %v418
    %v420 = vpop.f32.mrb[0].mxu0
    %v421 = vadd.f32 %v112, %v420
    %v422 = vpop.f32.mrb[0].mxu0
    %v423 = vadd.f32 %v108, %v422
    %v424 = vpop.f32.mrb[0].mxu0
    %v425 = vadd.f32 %v112, %v424
    %426 = vmatprep.mubr.bf16.mxu0 0
    %427 = vmatmul.mubr.bf16.gmra.mrb[0].mxu0 %v319
    %v428 = vpop.f32.mrb[0].mxu0
    %v429 = vadd.f32 %v108, %v428
    %v430 = vpop.f32.mrb[0].mxu0
    %v431 = vadd.f32 %v112, %v430
    %v432 = vpop.f32.mrb[0].mxu0
    %v433 = vadd.f32 %v108, %v432
    %v434 = vpop.f32.mrb[0].mxu0
    %v435 = vadd.f32 %v112, %v434
    %436 = vmatprep.mubr.bf16.mxu0 0
    %437 = vmatmul.mubr.bf16.gmra.mrb[0].mxu0 %v322
    %v438 = vpop.f32.mrb[0].mxu0
    %v439 = vadd.f32 %v108, %v438
    %v440 = vpop.f32.mrb[0].mxu0
    %v441 = vadd.f32 %v112, %v440
    %v442 = vpop.f32.mrb[0].mxu0
    %v443 = vadd.f32 %v108, %v442
    %v444 = vpop.f32.mrb[0].mxu0
    %v445 = vadd.f32 %v112, %v444
    %446 = vmatprep.mubr.bf16.mxu0 0
    %447 = vmatmul.mubr.bf16.gmra.mrb[0].mxu0 %v325
    %v448 = vpop.f32.mrb[0].mxu0
    %v449 = vadd.f32 %v108, %v448
    %v450 = vpop.f32.mrb[0].mxu0
    %v451 = vadd.f32 %v112, %v450
    %v452 = vpop.f32.mrb[0].mxu0
    %v453 = vadd.f32 %v108, %v452
    %v454 = vpop.f32.mrb[0].mxu0
    %v455 = vadd.f32 %v112, %v454
    %456 = vmatprep.mubr.bf16.mxu0 0
    %457 = vmatmul.mubr.bf16.gmra.mrb[0].mxu0 %v328
    %v458 = vpop.f32.mrb[0].mxu0
    %v459 = vadd.f32 %v108, %v458
    %v460 = vpop.f32.mrb[0].mxu0
    %v461 = vadd.f32 %v112, %v460
    %v462 = vpop.f32.mrb[0].mxu0
    %v463 = vadd.f32 %v108, %v462
    %v464 = vpop.f32.mrb[0].mxu0
    %v465 = vadd.f32 %v112, %v464
    %466 = vmatprep.mubr.bf16.mxu0 0
    %467 = vmatmul.mubr.bf16.gmra.mrb[0].mxu0 %v331
    %v468 = vpop.f32.mrb[0].mxu0
    %v469 = vadd.f32 %v108, %v468
    %v470 = vpop.f32.mrb[0].mxu0
    %v471 = vadd.f32 %v112, %v470
    %v472 = vpop.f32.mrb[0].mxu0
    %v473 = vadd.f32 %v108, %v472
    %v474 = vpop.f32.mrb[0].mxu0
    %v475 = vadd.f32 %v112, %v474
    %476 = vmatprep.mubr.bf16.mxu0 0
    %477 = vmatmul.mubr.bf16.gmra.mrb[0].mxu0 %v334
    %v478 = vpop.f32.mrb[0].mxu0
    %v479 = vadd.f32 %v108, %v478
    %v480 = vpop.f32.mrb[0].mxu0
    %v481 = vadd.f32 %v112, %v480
    %v482 = vpop.f32.mrb[0].mxu0
    %v483 = vadd.f32 %v108, %v482
    %v484 = vpop.f32.mrb[0].mxu0
    %v485 = vadd.f32 %v112, %v484
    %486 = vmatprep.mubr.bf16.mxu0 0
    %487 = vmatmul.mubr.bf16.gmra.mrb[0].mxu0 %v337
    %v488 = vpop.f32.mrb[0].mxu0
    %v489 = vadd.f32 %v108, %v488
    %v490 = vpop.f32.mrb[0].mxu0
    %v491 = vadd.f32 %v112, %v490
    %v492 = vpop.f32.mrb[0].mxu0
    %v493 = vadd.f32 %v108, %v492
    %v494 = vpop.f32.mrb[0].mxu0
    %v495 = vadd.f32 %v112, %v494
    %496 = vmatprep.mubr.bf16.mxu0 0
    %497 = vmatmul.mubr.bf16.gmra.mrb[0].mxu0 %v340
    %v498 = vpop.f32.mrb[0].mxu0
    %v499 = vadd.f32 %v108, %v498
    %v500 = vpop.f32.mrb[0].mxu0
    %v501 = vadd.f32 %v112, %v500
    %v502 = vpop.f32.mrb[0].mxu0
    %v503 = vadd.f32 %v108, %v502
    %v504 = vpop.f32.mrb[0].mxu0
    %v505 = vadd.f32 %v112, %v504
    %506 = vmatprep.mubr.bf16.mxu0 0
    %507 = vmatmul.mubr.bf16.gmra.mrb[0].mxu0 %v343
    %v508 = vpop.f32.mrb[0].mxu0
    %v509 = vadd.f32 %v108, %v508
    %v510 = vpop.f32.mrb[0].mxu0
    %v511 = vadd.f32 %v112, %v510
    %v512 = vpop.f32.mrb[0].mxu0
    %v513 = vadd.f32 %v108, %v512
    %v514 = vpop.f32.mrb[0].mxu0
    %v515 = vadd.f32 %v112, %v514
    %516 = vmatprep.mubr.bf16.mxu0 0
    %517 = vmatmul.mubr.bf16.gmra.mrb[0].mxu0 %v346
    %v518 = vpop.f32.mrb[0].mxu0
    %v519 = vadd.f32 %v108, %v518
    %v520 = vpop.f32.mrb[0].mxu0
    %v521 = vadd.f32 %v112, %v520
    %v522 = vpop.f32.mrb[0].mxu0
    %v523 = vadd.f32 %v108, %v522
    %v524 = vpop.f32.mrb[0].mxu0
    %v525 = vadd.f32 %v112, %v524
    %526 = vmatprep.mubr.bf16.mxu0 0
    %527 = vmatmul.mubr.bf16.gmra.mrb[0].mxu0 %v349
    %v528 = vpop.f32.mrb[0].mxu0
    %v529 = vadd.f32 %v108, %v528
    %v530 = vpop.f32.mrb[0].mxu0
    %v531 = vadd.f32 %v112, %v530
    %v532 = vpop.f32.mrb[0].mxu0
    %v533 = vadd.f32 %v108, %v532
    %v534 = vpop.f32.mrb[0].mxu0
    %v535 = vadd.f32 %v112, %v534
    %536 = vmatprep.mubr.bf16.mxu0 0
    %537 = vmatmul.mubr.bf16.gmra.mrb[0].mxu0 %v352
    %v538 = vpop.f32.mrb[0].mxu0
    %v539 = vadd.f32 %v108, %v538
    %v540 = vpop.f32.mrb[0].mxu0
    %v541 = vadd.f32 %v112, %v540
    %v542 = vpop.f32.mrb[0].mxu0
    %v543 = vadd.f32 %v108, %v542
    %v544 = vpop.f32.mrb[0].mxu0
    %v545 = vadd.f32 %v112, %v544
    %546 = vdwg.mxu0
    %547 = vmatprep.subr.bf16.mxu0 %v276
    %548 = vmatpush1.bf16.msra.mxu0 %v275
    %549 = vmatprep.subr.bf16.mxu0 %v284
    %550 = vmatpush1.bf16.msra.mxu0 %v283
    %551 = vmatprep.subr.bf16.mxu0 0
    %552 = vmatpush1.bf16.msra.mxu0 0
    %553 = vmatprep.subr.bf16.mxu0 0
    %554 = vmatpush1.bf16.msra.mxu0 0
    %555 = vmatprep.subr.bf16.mxu0 0
    %556 = vmatpush1.bf16.msra.mxu0 0
    %557 = vmatprep.subr.bf16.mxu0 0
    %558 = vmatpush1.bf16.msra.mxu0 0
    %559 = vmatprep.subr.bf16.mxu0 0
    %560 = vmatpush1.bf16.msra.mxu0 0
    %561 = vmatprep.subr.bf16.mxu0 0
    %562 = vmatpush1.bf16.msra.mxu0 0
    %563 = vmatprep.subr.bf16.mxu0 0
    %564 = vmatpush1.bf16.msra.mxu0 0
    %565 = vmatprep.subr.bf16.mxu0 0
    %566 = vmatpush1.bf16.msra.mxu0 0
    %567 = vmatprep.subr.bf16.mxu0 0
    %568 = vmatpush1.bf16.msra.mxu0 0
    %569 = vmatprep.subr.bf16.mxu0 0
    %570 = vmatpush1.bf16.msra.mxu0 0
    %571 = vmatprep.subr.bf16.mxu0 0
    %572 = vmatpush1.bf16.msra.mxu0 0
    %573 = vmatprep.subr.bf16.mxu0 0
    %574 = vmatpush1.bf16.msra.mxu0 0
    %575 = vmatprep.subr.bf16.mxu0 0
    %576 = vmatpush1.bf16.msra.mxu0 0
    %577 = vmatprep.subr.bf16.mxu0 0
    %578 = vmatpush1.bf16.msra.mxu0 0
    %579 = vmatprep.mubr.bf16.mxu0 0
    %580 = vmatmul.mubr.bf16.gmra.mrb[0].mxu0 %v307
    %v581 = vpop.f32.mrb[0].mxu0
    %v582 = vadd.f32 %v116, %v581
    %v583 = vpop.f32.mrb[0].mxu0
    %v584 = vadd.f32 %v120, %v583
    %v585 = vpop.f32.mrb[0].mxu0
    %v586 = vadd.f32 %v116, %v585
    %v587 = vpop.f32.mrb[0].mxu0
    %v588 = vadd.f32 %v120, %v587
    %589 = vmatprep.mubr.bf16.mxu0 0
    %590 = vmatmul.mubr.bf16.gmra.mrb[0].mxu0 %v310
    %v591 = vpop.f32.mrb[0].mxu0
    %v592 = vadd.f32 %v116, %v591
    %v593 = vpop.f32.mrb[0].mxu0
    %v594 = vadd.f32 %v120, %v593
    %v595 = vpop.f32.mrb[0].mxu0
    %v596 = vadd.f32 %v116, %v595
    %v597 = vpop.f32.mrb[0].mxu0
    %v598 = vadd.f32 %v120, %v597
    %599 = vmatprep.mubr.bf16.mxu0 0
    %600 = vmatmul.mubr.bf16.gmra.mrb[0].mxu0 %v313
    %v601 = vpop.f32.mrb[0].mxu0
    %v602 = vadd.f32 %v116, %v601
    %v603 = vpop.f32.mrb[0].mxu0
    %v604 = vadd.f32 %v120, %v603
    %v605 = vpop.f32.mrb[0].mxu0
    %v606 = vadd.f32 %v116, %v605
    %v607 = vpop.f32.mrb[0].mxu0
    %v608 = vadd.f32 %v120, %v607
    %609 = vmatprep.mubr.bf16.mxu0 0
    %610 = vmatmul.mubr.bf16.gmra.mrb[0].mxu0 %v316
    %v611 = vpop.f32.mrb[0].mxu0
    %v612 = vadd.f32 %v116, %v611
    %v613 = vpop.f32.mrb[0].mxu0
    %v614 = vadd.f32 %v120, %v613
    %v615 = vpop.f32.mrb[0].mxu0
    %v616 = vadd.f32 %v116, %v615
    %v617 = vpop.f32.mrb[0].mxu0
    %v618 = vadd.f32 %v120, %v617
    %619 = vmatprep.mubr.bf16.mxu0 0
    %620 = vmatmul.mubr.bf16.gmra.mrb[0].mxu0 %v319
    %v621 = vpop.f32.mrb[0].mxu0
    %v622 = vadd.f32 %v116, %v621
    %v623 = vpop.f32.mrb[0].mxu0
    %v624 = vadd.f32 %v120, %v623
    %v625 = vpop.f32.mrb[0].mxu0
    %v626 = vadd.f32 %v116, %v625
    %v627 = vpop.f32.mrb[0].mxu0
    %v628 = vadd.f32 %v120, %v627
    %629 = vmatprep.mubr.bf16.mxu0 0
    %630 = vmatmul.mubr.bf16.gmra.mrb[0].mxu0 %v322
    %v631 = vpop.f32.mrb[0].mxu0
    %v632 = vadd.f32 %v116, %v631
    %v633 = vpop.f32.mrb[0].mxu0
    %v634 = vadd.f32 %v120, %v633
    %v635 = vpop.f32.mrb[0].mxu0
    %v636 = vadd.f32 %v116, %v635
    %v637 = vpop.f32.mrb[0].mxu0
    %v638 = vadd.f32 %v120, %v637
    %639 = vmatprep.mubr.bf16.mxu0 0
    %640 = vmatmul.mubr.bf16.gmra.mrb[0].mxu0 %v325
    %v641 = vpop.f32.mrb[0].mxu0
    %v642 = vadd.f32 %v116, %v641
    %v643 = vpop.f32.mrb[0].mxu0
    %v644 = vadd.f32 %v120, %v643
    %v645 = vpop.f32.mrb[0].mxu0
    %v646 = vadd.f32 %v116, %v645
    %v647 = vpop.f32.mrb[0].mxu0
    %v648 = vadd.f32 %v120, %v647
    %649 = vmatprep.mubr.bf16.mxu0 0
    %650 = vmatmul.mubr.bf16.gmra.mrb[0].mxu0 %v328
    %v651 = vpop.f32.mrb[0].mxu0
    %v652 = vadd.f32 %v116, %v651
    %v653 = vpop.f32.mrb[0].mxu0
    %v654 = vadd.f32 %v120, %v653
    %v655 = vpop.f32.mrb[0].mxu0
    %v656 = vadd.f32 %v116, %v655
    %v657 = vpop.f32.mrb[0].mxu0
    %v658 = vadd.f32 %v120, %v657
    %659 = vmatprep.mubr.bf16.mxu0 0
    %660 = vmatmul.mubr.bf16.gmra.mrb[0].mxu0 %v331
    %v661 = vpop.f32.mrb[0].mxu0
    %v662 = vadd.f32 %v116, %v661
    %v663 = vpop.f32.mrb[0].mxu0
    %v664 = vadd.f32 %v120, %v663
    %v665 = vpop.f32.mrb[0].mxu0
    %v666 = vadd.f32 %v116, %v665
    %v667 = vpop.f32.mrb[0].mxu0
    %v668 = vadd.f32 %v120, %v667
    %669 = vmatprep.mubr.bf16.mxu0 0
    %670 = vmatmul.mubr.bf16.gmra.mrb[0].mxu0 %v334
    %v671 = vpop.f32.mrb[0].mxu0
    %v672 = vadd.f32 %v116, %v671
    %v673 = vpop.f32.mrb[0].mxu0
    %v674 = vadd.f32 %v120, %v673
    %v675 = vpop.f32.mrb[0].mxu0
    %v676 = vadd.f32 %v116, %v675
    %v677 = vpop.f32.mrb[0].mxu0
    %v678 = vadd.f32 %v120, %v677
    %679 = vmatprep.mubr.bf16.mxu0 0
    %680 = vmatmul.mubr.bf16.gmra.mrb[0].mxu0 %v337
    %v681 = vpop.f32.mrb[0].mxu0
    %v682 = vadd.f32 %v116, %v681
    %v683 = vpop.f32.mrb[0].mxu0
    %v684 = vadd.f32 %v120, %v683
    %v685 = vpop.f32.mrb[0].mxu0
    %v686 = vadd.f32 %v116, %v685
    %v687 = vpop.f32.mrb[0].mxu0
    %v688 = vadd.f32 %v120, %v687
    %689 = vmatprep.mubr.bf16.mxu0 0
    %690 = vmatmul.mubr.bf16.gmra.mrb[0].mxu0 %v340
    %v691 = vpop.f32.mrb[0].mxu0
    %v692 = vadd.f32 %v116, %v691
    %v693 = vpop.f32.mrb[0].mxu0
    %v694 = vadd.f32 %v120, %v693
    %v695 = vpop.f32.mrb[0].mxu0
    %v696 = vadd.f32 %v116, %v695
    %v697 = vpop.f32.mrb[0].mxu0
    %v698 = vadd.f32 %v120, %v697
    %699 = vmatprep.mubr.bf16.mxu0 0
    %700 = vmatmul.mubr.bf16.gmra.mrb[0].mxu0 %v343
    %v701 = vpop.f32.mrb[0].mxu0
    %v702 = vadd.f32 %v116, %v701
    %v703 = vpop.f32.mrb[0].mxu0
    %v704 = vadd.f32 %v120, %v703
    %v705 = vpop.f32.mrb[0].mxu0
    %v706 = vadd.f32 %v116, %v705
    %v707 = vpop.f32.mrb[0].mxu0
    %v708 = vadd.f32 %v120, %v707
    %709 = vmatprep.mubr.bf16.mxu0 0
    %710 = vmatmul.mubr.bf16.gmra.mrb[0].mxu0 %v346
    %v711 = vpop.f32.mrb[0].mxu0
    %v712 = vadd.f32 %v116, %v711
    %v713 = vpop.f32.mrb[0].mxu0
    %v714 = vadd.f32 %v120, %v713
    %v715 = vpop.f32.mrb[0].mxu0
    %v716 = vadd.f32 %v116, %v715
    %v717 = vpop.f32.mrb[0].mxu0
    %v718 = vadd.f32 %v120, %v717
    %719 = vmatprep.mubr.bf16.mxu0 0
    %720 = vmatmul.mubr.bf16.gmra.mrb[0].mxu0 %v349
    %v721 = vpop.f32.mrb[0].mxu0
    %v722 = vadd.f32 %v116, %v721
    %v723 = vpop.f32.mrb[0].mxu0
    %v724 = vadd.f32 %v120, %v723
    %v725 = vpop.f32.mrb[0].mxu0
    %v726 = vadd.f32 %v116, %v725
    %v727 = vpop.f32.mrb[0].mxu0
    %v728 = vadd.f32 %v120, %v727
    %729 = vmatprep.mubr.bf16.mxu0 0
    %730 = vmatmul.mubr.bf16.gmra.mrb[0].mxu0 %v352
    %v731 = vpop.f32.mrb[0].mxu0
    %v732 = vadd.f32 %v116, %v731
    %v733 = vpop.f32.mrb[0].mxu0
    %v734 = vadd.f32 %v120, %v733
    %v735 = vpop.f32.mrb[0].mxu0
    %v736 = vadd.f32 %v116, %v735
    %v737 = vpop.f32.mrb[0].mxu0
    %v738 = vadd.f32 %v120, %v737
    %739 = vdwg.mxu0
    %740 = vmatprep.subr.bf16.mxu0 %v278
    %741 = vmatpush1.bf16.msra.mxu0 %v277
    %742 = vmatprep.subr.bf16.mxu0 %v286
    %743 = vmatpush1.bf16.msra.mxu0 %v285
    %744 = vmatprep.subr.bf16.mxu0 0
    %745 = vmatpush1.bf16.msra.mxu0 0
    %746 = vmatprep.subr.bf16.mxu0 0
    %747 = vmatpush1.bf16.msra.mxu0 0
    %748 = vmatprep.subr.bf16.mxu0 0
    %749 = vmatpush1.bf16.msra.mxu0 0
    %750 = vmatprep.subr.bf16.mxu0 0
    %751 = vmatpush1.bf16.msra.mxu0 0
    %752 = vmatprep.subr.bf16.mxu0 0
    %753 = vmatpush1.bf16.msra.mxu0 0
    %754 = vmatprep.subr.bf16.mxu0 0
    %755 = vmatpush1.bf16.msra.mxu0 0
    %756 = vmatprep.subr.bf16.mxu0 0
    %757 = vmatpush1.bf16.msra.mxu0 0
    %758 = vmatprep.subr.bf16.mxu0 0
    %759 = vmatpush1.bf16.msra.mxu0 0
    %760 = vmatprep.subr.bf16.mxu0 0
    %761 = vmatpush1.bf16.msra.mxu0 0
    %762 = vmatprep.subr.bf16.mxu0 0
    %763 = vmatpush1.bf16.msra.mxu0 0
    %764 = vmatprep.subr.bf16.mxu0 0
    %765 = vmatpush1.bf16.msra.mxu0 0
    %766 = vmatprep.subr.bf16.mxu0 0
    %767 = vmatpush1.bf16.msra.mxu0 0
    %768 = vmatprep.subr.bf16.mxu0 0
    %769 = vmatpush1.bf16.msra.mxu0 0
    %770 = vmatprep.subr.bf16.mxu0 0
    %771 = vmatpush1.bf16.msra.mxu0 0
    %772 = vmatprep.mubr.bf16.mxu0 0
    %773 = vmatmul.mubr.bf16.gmra.mrb[0].mxu0 %v307
    %v774 = vpop.f32.mrb[0].mxu0
    %v775 = vadd.f32 %v124, %v774
    %v776 = vpop.f32.mrb[0].mxu0
    %v777 = vadd.f32 %v128, %v776
    %v778 = vpop.f32.mrb[0].mxu0
    %v779 = vadd.f32 %v124, %v778
    %v780 = vpop.f32.mrb[0].mxu0
    %v781 = vadd.f32 %v128, %v780
    %782 = vmatprep.mubr.bf16.mxu0 0
    %783 = vmatmul.mubr.bf16.gmra.mrb[0].mxu0 %v310
    %v784 = vpop.f32.mrb[0].mxu0
    %v785 = vadd.f32 %v124, %v784
    %v786 = vpop.f32.mrb[0].mxu0
    %v787 = vadd.f32 %v128, %v786
    %v788 = vpop.f32.mrb[0].mxu0
    %v789 = vadd.f32 %v124, %v788
    %v790 = vpop.f32.mrb[0].mxu0
    %v791 = vadd.f32 %v128, %v790
    %792 = vmatprep.mubr.bf16.mxu0 0
    %793 = vmatmul.mubr.bf16.gmra.mrb[0].mxu0 %v313
    %v794 = vpop.f32.mrb[0].mxu0
    %v795 = vadd.f32 %v124, %v794
    %v796 = vpop.f32.mrb[0].mxu0
    %v797 = vadd.f32 %v128, %v796
    %v798 = vpop.f32.mrb[0].mxu0
    %v799 = vadd.f32 %v124, %v798
    %v800 = vpop.f32.mrb[0].mxu0
    %v801 = vadd.f32 %v128, %v800
    %802 = vmatprep.mubr.bf16.mxu0 0
    %803 = vmatmul.mubr.bf16.gmra.mrb[0].mxu0 %v316
    %v804 = vpop.f32.mrb[0].mxu0
    %v805 = vadd.f32 %v124, %v804
    %v806 = vpop.f32.mrb[0].mxu0
    %v807 = vadd.f32 %v128, %v806
    %v808 = vpop.f32.mrb[0].mxu0
    %v809 = vadd.f32 %v124, %v808
    %v810 = vpop.f32.mrb[0].mxu0
    %v811 = vadd.f32 %v128, %v810
    %812 = vmatprep.mubr.bf16.mxu0 0
    %813 = vmatmul.mubr.bf16.gmra.mrb[0].mxu0 %v319
    %v814 = vpop.f32.mrb[0].mxu0
    %v815 = vadd.f32 %v124, %v814
    %v816 = vpop.f32.mrb[0].mxu0
    %v817 = vadd.f32 %v128, %v816
    %v818 = vpop.f32.mrb[0].mxu0
    %v819 = vadd.f32 %v124, %v818
    %v820 = vpop.f32.mrb[0].mxu0
    %v821 = vadd.f32 %v128, %v820
    %822 = vmatprep.mubr.bf16.mxu0 0
    %823 = vmatmul.mubr.bf16.gmra.mrb[0].mxu0 %v322
    %v824 = vpop.f32.mrb[0].mxu0
    %v825 = vadd.f32 %v124, %v824
    %v826 = vpop.f32.mrb[0].mxu0
    %v827 = vadd.f32 %v128, %v826
    %v828 = vpop.f32.mrb[0].mxu0
    %v829 = vadd.f32 %v124, %v828
    %v830 = vpop.f32.mrb[0].mxu0
    %v831 = vadd.f32 %v128, %v830
    %832 = vmatprep.mubr.bf16.mxu0 0
    %833 = vmatmul.mubr.bf16.gmra.mrb[0].mxu0 %v325
    %v834 = vpop.f32.mrb[0].mxu0
    %v835 = vadd.f32 %v124, %v834
    %v836 = vpop.f32.mrb[0].mxu0
    %v837 = vadd.f32 %v128, %v836
    %v838 = vpop.f32.mrb[0].mxu0
    %v839 = vadd.f32 %v124, %v838
    %v840 = vpop.f32.mrb[0].mxu0
    %v841 = vadd.f32 %v128, %v840
    %842 = vmatprep.mubr.bf16.mxu0 0
    %843 = vmatmul.mubr.bf16.gmra.mrb[0].mxu0 %v328
    %v844 = vpop.f32.mrb[0].mxu0
    %v845 = vadd.f32 %v124, %v844
    %v846 = vpop.f32.mrb[0].mxu0
    %v847 = vadd.f32 %v128, %v846
    %v848 = vpop.f32.mrb[0].mxu0
    %v849 = vadd.f32 %v124, %v848
    %v850 = vpop.f32.mrb[0].mxu0
    %v851 = vadd.f32 %v128, %v850
    %852 = vmatprep.mubr.bf16.mxu0 0
    %853 = vmatmul.mubr.bf16.gmra.mrb[0].mxu0 %v331
    %v854 = vpop.f32.mrb[0].mxu0
    %v855 = vadd.f32 %v124, %v854
    %v856 = vpop.f32.mrb[0].mxu0
    %v857 = vadd.f32 %v128, %v856
    %v858 = vpop.f32.mrb[0].mxu0
    %v859 = vadd.f32 %v124, %v858
    %v860 = vpop.f32.mrb[0].mxu0
    %v861 = vadd.f32 %v128, %v860
    %862 = vmatprep.mubr.bf16.mxu0 0
    %863 = vmatmul.mubr.bf16.gmra.mrb[0].mxu0 %v334
    %v864 = vpop.f32.mrb[0].mxu0
    %v865 = vadd.f32 %v124, %v864
    %v866 = vpop.f32.mrb[0].mxu0
    %v867 = vadd.f32 %v128, %v866
    %v868 = vpop.f32.mrb[0].mxu0
    %v869 = vadd.f32 %v124, %v868
    %v870 = vpop.f32.mrb[0].mxu0
    %v871 = vadd.f32 %v128, %v870
    %872 = vmatprep.mubr.bf16.mxu0 0
    %873 = vmatmul.mubr.bf16.gmra.mrb[0].mxu0 %v337
    %v874 = vpop.f32.mrb[0].mxu0
    %v875 = vadd.f32 %v124, %v874
    %v876 = vpop.f32.mrb[0].mxu0
    %v877 = vadd.f32 %v128, %v876
    %v878 = vpop.f32.mrb[0].mxu0
    %v879 = vadd.f32 %v124, %v878
    %v880 = vpop.f32.mrb[0].mxu0
    %v881 = vadd.f32 %v128, %v880
    %882 = vmatprep.mubr.bf16.mxu0 0
    %883 = vmatmul.mubr.bf16.gmra.mrb[0].mxu0 %v340
    %v884 = vpop.f32.mrb[0].mxu0
    %v885 = vadd.f32 %v124, %v884
    %v886 = vpop.f32.mrb[0].mxu0
    %v887 = vadd.f32 %v128, %v886
    %v888 = vpop.f32.mrb[0].mxu0
    %v889 = vadd.f32 %v124, %v888
    %v890 = vpop.f32.mrb[0].mxu0
    %v891 = vadd.f32 %v128, %v890
    %892 = vmatprep.mubr.bf16.mxu0 0
    %893 = vmatmul.mubr.bf16.gmra.mrb[0].mxu0 %v343
    %v894 = vpop.f32.mrb[0].mxu0
    %v895 = vadd.f32 %v124, %v894
    %v896 = vpop.f32.mrb[0].mxu0
    %v897 = vadd.f32 %v128, %v896
    %v898 = vpop.f32.mrb[0].mxu0
    %v899 = vadd.f32 %v124, %v898
    %v900 = vpop.f32.mrb[0].mxu0
    %v901 = vadd.f32 %v128, %v900
    %902 = vmatprep.mubr.bf16.mxu0 0
    %903 = vmatmul.mubr.bf16.gmra.mrb[0].mxu0 %v346
    %v904 = vpop.f32.mrb[0].mxu0
    %v905 = vadd.f32 %v124, %v904
    %v906 = vpop.f32.mrb[0].mxu0
    %v907 = vadd.f32 %v128, %v906
    %v908 = vpop.f32.mrb[0].mxu0
    %v909 = vadd.f32 %v124, %v908
    %v910 = vpop.f32.mrb[0].mxu0
    %v911 = vadd.f32 %v128, %v910
    %912 = vmatprep.mubr.bf16.mxu0 0
    %913 = vmatmul.mubr.bf16.gmra.mrb[0].mxu0 %v349
    %v914 = vpop.f32.mrb[0].mxu0
    %v915 = vadd.f32 %v124, %v914
    %v916 = vpop.f32.mrb[0].mxu0
    %v917 = vadd.f32 %v128, %v916
    %v918 = vpop.f32.mrb[0].mxu0
    %v919 = vadd.f32 %v124, %v918
    %v920 = vpop.f32.mrb[0].mxu0
    %v921 = vadd.f32 %v128, %v920
    %922 = vmatprep.mubr.bf16.mxu0 0
    %923 = vmatmul.mubr.bf16.gmra.mrb[0].mxu0 %v352
    %v924 = vpop.f32.mrb[0].mxu0
    %v925 = vadd.f32 %v124, %v924
    %v926 = vpop.f32.mrb[0].mxu0
    %v927 = vadd.f32 %v128, %v926
    %v928 = vpop.f32.mrb[0].mxu0
    %v929 = vadd.f32 %v124, %v928
    %v930 = vpop.f32.mrb[0].mxu0
    %v931 = vadd.f32 %v128, %v930
    %932 = vdwg.mxu0
    %933 = vmatprep.subr.bf16.mxu0 %v280
    %934 = vmatpush1.bf16.msra.mxu0 %v279
    %935 = vmatprep.subr.bf16.mxu0 %v288
    %936 = vmatpush1.bf16.msra.mxu0 %v287
    %937 = vmatprep.subr.bf16.mxu0 0
    %938 = vmatpush1.bf16.msra.mxu0 0
    %939 = vmatprep.subr.bf16.mxu0 0
    %940 = vmatpush1.bf16.msra.mxu0 0
    %941 = vmatprep.subr.bf16.mxu0 0
    %942 = vmatpush1.bf16.msra.mxu0 0
    %943 = vmatprep.subr.bf16.mxu0 0
    %944 = vmatpush1.bf16.msra.mxu0 0
    %945 = vmatprep.subr.bf16.mxu0 0
    %946 = vmatpush1.bf16.msra.mxu0 0
    %947 = vmatprep.subr.bf16.mxu0 0
    %948 = vmatpush1.bf16.msra.mxu0 0
    %949 = vmatprep.subr.bf16.mxu0 0
    %950 = vmatpush1.bf16.msra.mxu0 0
    %951 = vmatprep.subr.bf16.mxu0 0
    %952 = vmatpush1.bf16.msra.mxu0 0
    %953 = vmatprep.subr.bf16.mxu0 0
    %954 = vmatpush1.bf16.msra.mxu0 0
    %955 = vmatprep.subr.bf16.mxu0 0
    %956 = vmatpush1.bf16.msra.mxu0 0
    %957 = vmatprep.subr.bf16.mxu0 0
    %958 = vmatpush1.bf16.msra.mxu0 0
    %959 = vmatprep.subr.bf16.mxu0 0
    %960 = vmatpush1.bf16.msra.mxu0 0
    %961 = vmatprep.subr.bf16.mxu0 0
    %962 = vmatpush1.bf16.msra.mxu0 0
    %963 = vmatprep.subr.bf16.mxu0 0
    %964 = vmatpush1.bf16.msra.mxu0 0
    %965 = vmatprep.mubr.bf16.mxu0 0
    %966 = vmatmul.mubr.bf16.gmra.mrb[0].mxu0 %v307
    %v967 = vpop.f32.mrb[0].mxu0
    %v968 = vadd.f32 %v132, %v967
    %v969 = vpop.f32.mrb[0].mxu0
    %v970 = vadd.f32 %v136, %v969
    %v971 = vpop.f32.mrb[0].mxu0
    %v972 = vadd.f32 %v132, %v971
    %v973 = vpop.f32.mrb[0].mxu0
    %v974 = vadd.f32 %v136, %v973
    %975 = vmatprep.mubr.bf16.mxu0 0
    %976 = vmatmul.mubr.bf16.gmra.mrb[0].mxu0 %v310
    %v977 = vpop.f32.mrb[0].mxu0
    %v978 = vadd.f32 %v132, %v977
    %v979 = vpop.f32.mrb[0].mxu0
    %v980 = vadd.f32 %v136, %v979
    %v981 = vpop.f32.mrb[0].mxu0
    %v982 = vadd.f32 %v132, %v981
    %v983 = vpop.f32.mrb[0].mxu0
    %v984 = vadd.f32 %v136, %v983
    %985 = vmatprep.mubr.bf16.mxu0 0
    %986 = vmatmul.mubr.bf16.gmra.mrb[0].mxu0 %v313
    %v987 = vpop.f32.mrb[0].mxu0
    %v988 = vadd.f32 %v132, %v987
    %v989 = vpop.f32.mrb[0].mxu0
    %v990 = vadd.f32 %v136, %v989
    %v991 = vpop.f32.mrb[0].mxu0
    %v992 = vadd.f32 %v132, %v991
    %v993 = vpop.f32.mrb[0].mxu0
    %v994 = vadd.f32 %v136, %v993
    %995 = vmatprep.mubr.bf16.mxu0 0
    %996 = vmatmul.mubr.bf16.gmra.mrb[0].mxu0 %v316
    %v997 = vpop.f32.mrb[0].mxu0
    %v998 = vadd.f32 %v132, %v997
    %v999 = vpop.f32.mrb[0].mxu0
    %v1000 = vadd.f32 %v136, %v999
    %v1001 = vpop.f32.mrb[0].mxu0
    %v1002 = vadd.f32 %v132, %v1001
    %v1003 = vpop.f32.mrb[0].mxu0
    %v1004 = vadd.f32 %v136, %v1003
    %1005 = vmatprep.mubr.bf16.mxu0 0
    %1006 = vmatmul.mubr.bf16.gmra.mrb[0].mxu0 %v319
    %v1007 = vpop.f32.mrb[0].mxu0
    %v1008 = vadd.f32 %v132, %v1007
    %v1009 = vpop.f32.mrb[0].mxu0
    %v1010 = vadd.f32 %v136, %v1009
    %v1011 = vpop.f32.mrb[0].mxu0
    %v1012 = vadd.f32 %v132, %v1011
    %v1013 = vpop.f32.mrb[0].mxu0
    %v1014 = vadd.f32 %v136, %v1013
    %1015 = vmatprep.mubr.bf16.mxu0 0
    %1016 = vmatmul.mubr.bf16.gmra.mrb[0].mxu0 %v322
    %v1017 = vpop.f32.mrb[0].mxu0
    %v1018 = vadd.f32 %v132, %v1017
    %v1019 = vpop.f32.mrb[0].mxu0
    %v1020 = vadd.f32 %v136, %v1019
    %v1021 = vpop.f32.mrb[0].mxu0
    %v1022 = vadd.f32 %v132, %v1021
    %v1023 = vpop.f32.mrb[0].mxu0
    %v1024 = vadd.f32 %v136, %v1023
    %1025 = vmatprep.mubr.bf16.mxu0 0
    %1026 = vmatmul.mubr.bf16.gmra.mrb[0].mxu0 %v325
    %v1027 = vpop.f32.mrb[0].mxu0
    %v1028 = vadd.f32 %v132, %v1027
    %v1029 = vpop.f32.mrb[0].mxu0
    %v1030 = vadd.f32 %v136, %v1029
    %v1031 = vpop.f32.mrb[0].mxu0
    %v1032 = vadd.f32 %v132, %v1031
    %v1033 = vpop.f32.mrb[0].mxu0
    %v1034 = vadd.f32 %v136, %v1033
    %1035 = vmatprep.mubr.bf16.mxu0 0
    %1036 = vmatmul.mubr.bf16.gmra.mrb[0].mxu0 %v328
    %v1037 = vpop.f32.mrb[0].mxu0
    %v1038 = vadd.f32 %v132, %v1037
    %v1039 = vpop.f32.mrb[0].mxu0
    %v1040 = vadd.f32 %v136, %v1039
    %v1041 = vpop.f32.mrb[0].mxu0
    %v1042 = vadd.f32 %v132, %v1041
    %v1043 = vpop.f32.mrb[0].mxu0
    %v1044 = vadd.f32 %v136, %v1043
    %1045 = vmatprep.mubr.bf16.mxu0 0
    %1046 = vmatmul.mubr.bf16.gmra.mrb[0].mxu0 %v331
    %v1047 = vpop.f32.mrb[0].mxu0
    %v1048 = vadd.f32 %v132, %v1047
    %v1049 = vpop.f32.mrb[0].mxu0
    %v1050 = vadd.f32 %v136, %v1049
    %v1051 = vpop.f32.mrb[0].mxu0
    %v1052 = vadd.f32 %v132, %v1051
    %v1053 = vpop.f32.mrb[0].mxu0
    %v1054 = vadd.f32 %v136, %v1053
    %1055 = vmatprep.mubr.bf16.mxu0 0
    %1056 = vmatmul.mubr.bf16.gmra.mrb[0].mxu0 %v334
    %v1057 = vpop.f32.mrb[0].mxu0
    %v1058 = vadd.f32 %v132, %v1057
    %v1059 = vpop.f32.mrb[0].mxu0
    %v1060 = vadd.f32 %v136, %v1059
    %v1061 = vpop.f32.mrb[0].mxu0
    %v1062 = vadd.f32 %v132, %v1061
    %v1063 = vpop.f32.mrb[0].mxu0
    %v1064 = vadd.f32 %v136, %v1063
    %1065 = vmatprep.mubr.bf16.mxu0 0
    %1066 = vmatmul.mubr.bf16.gmra.mrb[0].mxu0 %v337
    %v1067 = vpop.f32.mrb[0].mxu0
    %v1068 = vadd.f32 %v132, %v1067
    %v1069 = vpop.f32.mrb[0].mxu0
    %v1070 = vadd.f32 %v136, %v1069
    %v1071 = vpop.f32.mrb[0].mxu0
    %v1072 = vadd.f32 %v132, %v1071
    %v1073 = vpop.f32.mrb[0].mxu0
    %v1074 = vadd.f32 %v136, %v1073
    %1075 = vmatprep.mubr.bf16.mxu0 0
    %1076 = vmatmul.mubr.bf16.gmra.mrb[0].mxu0 %v340
    %v1077 = vpop.f32.mrb[0].mxu0
    %v1078 = vadd.f32 %v132, %v1077
    %v1079 = vpop.f32.mrb[0].mxu0
    %v1080 = vadd.f32 %v136, %v1079
    %v1081 = vpop.f32.mrb[0].mxu0
    %v1082 = vadd.f32 %v132, %v1081
    %v1083 = vpop.f32.mrb[0].mxu0
    %v1084 = vadd.f32 %v136, %v1083
    %1085 = vmatprep.mubr.bf16.mxu0 0
    %1086 = vmatmul.mubr.bf16.gmra.mrb[0].mxu0 %v343
    %v1087 = vpop.f32.mrb[0].mxu0
    %v1088 = vadd.f32 %v132, %v1087
    %v1089 = vpop.f32.mrb[0].mxu0
    %v1090 = vadd.f32 %v136, %v1089
    %v1091 = vpop.f32.mrb[0].mxu0
    %v1092 = vadd.f32 %v132, %v1091
    %v1093 = vpop.f32.mrb[0].mxu0
    %v1094 = vadd.f32 %v136, %v1093
    %1095 = vmatprep.mubr.bf16.mxu0 0
    %1096 = vmatmul.mubr.bf16.gmra.mrb[0].mxu0 %v346
    %v1097 = vpop.f32.mrb[0].mxu0
    %v1098 = vadd.f32 %v132, %v1097
    %v1099 = vpop.f32.mrb[0].mxu0
    %v1100 = vadd.f32 %v136, %v1099
    %v1101 = vpop.f32.mrb[0].mxu0
    %v1102 = vadd.f32 %v132, %v1101
    %v1103 = vpop.f32.mrb[0].mxu0
    %v1104 = vadd.f32 %v136, %v1103
    %1105 = vmatprep.mubr.bf16.mxu0 0
    %1106 = vmatmul.mubr.bf16.gmra.mrb[0].mxu0 %v349
    %v1107 = vpop.f32.mrb[0].mxu0
    %v1108 = vadd.f32 %v132, %v1107
    %v1109 = vpop.f32.mrb[0].mxu0
    %v1110 = vadd.f32 %v136, %v1109
    %v1111 = vpop.f32.mrb[0].mxu0
    %v1112 = vadd.f32 %v132, %v1111
    %v1113 = vpop.f32.mrb[0].mxu0
    %v1114 = vadd.f32 %v136, %v1113
    %1115 = vmatprep.mubr.bf16.mxu0 0
    %1116 = vmatmul.mubr.bf16.gmra.mrb[0].mxu0 %v352
    %v1117 = vpop.f32.mrb[0].mxu0
    %v1118 = vadd.f32 %v132, %v1117
    %v1119 = vpop.f32.mrb[0].mxu0
    %v1120 = vadd.f32 %v136, %v1119
    %v1121 = vpop.f32.mrb[0].mxu0
    %v1122 = vadd.f32 %v132, %v1121
    %v1123 = vpop.f32.mrb[0].mxu0
    %v1124 = vadd.f32 %v136, %v1123
    %1125 = vdwg.mxu0
    %v1126 = vmax.f32 %v389, 0.0
    %v1127 = vmax.f32 %v391, 0.0
    %v1128 = vmax.f32 %v582, 0.0
    %v1129 = vmax.f32 %v584, 0.0
    %v1130 = vmax.f32 %v775, 0.0
    %v1131 = vmax.f32 %v777, 0.0
    %v1132 = vmax.f32 %v968, 0.0
    %v1133 = vmax.f32 %v970, 0.0
    %v1134 = vmax.f32 %v393, 0.0
    %v1135 = vmax.f32 %v395, 0.0
    %v1136 = vmax.f32 %v586, 0.0
    %v1137 = vmax.f32 %v588, 0.0
    %v1138 = vmax.f32 %v779, 0.0
    %v1139 = vmax.f32 %v781, 0.0
    %v1140 = vmax.f32 %v972, 0.0
    %v1141 = vmax.f32 %v974, 0.0
    %v1142 = vmax.f32 %v399, 0.0
    %v1143 = vmax.f32 %v401, 0.0
    %v1144 = vmax.f32 %v592, 0.0
    %v1145 = vmax.f32 %v594, 0.0
    %v1146 = vmax.f32 %v785, 0.0
    %v1147 = vmax.f32 %v787, 0.0
    %v1148 = vmax.f32 %v978, 0.0
    %v1149 = vmax.f32 %v980, 0.0
    %v1150 = vmax.f32 %v403, 0.0
    %v1151 = vmax.f32 %v405, 0.0
    %v1152 = vmax.f32 %v596, 0.0
    %v1153 = vmax.f32 %v598, 0.0
    %v1154 = vmax.f32 %v789, 0.0
    %v1155 = vmax.f32 %v791, 0.0
    %v1156 = vmax.f32 %v982, 0.0
    %v1157 = vmax.f32 %v984, 0.0
    %v1158 = vmax.f32 %v409, 0.0
    %v1159 = vmax.f32 %v411, 0.0
    %v1160 = vmax.f32 %v602, 0.0
    %v1161 = vmax.f32 %v604, 0.0
    %v1162 = vmax.f32 %v795, 0.0
    %v1163 = vmax.f32 %v797, 0.0
    %v1164 = vmax.f32 %v988, 0.0
    %v1165 = vmax.f32 %v990, 0.0
    %v1166 = vmax.f32 %v413, 0.0
    %v1167 = vmax.f32 %v415, 0.0
    %v1168 = vmax.f32 %v606, 0.0
    %v1169 = vmax.f32 %v608, 0.0
    %v1170 = vmax.f32 %v799, 0.0
    %v1171 = vmax.f32 %v801, 0.0
    %v1172 = vmax.f32 %v992, 0.0
    %v1173 = vmax.f32 %v994, 0.0
    %v1174 = vmax.f32 %v419, 0.0
    %v1175 = vmax.f32 %v421, 0.0
    %v1176 = vmax.f32 %v612, 0.0
    %v1177 = vmax.f32 %v614, 0.0
    %v1178 = vmax.f32 %v805, 0.0
    %v1179 = vmax.f32 %v807, 0.0
    %v1180 = vmax.f32 %v998, 0.0
    %v1181 = vmax.f32 %v1000, 0.0
    %v1182 = vmax.f32 %v423, 0.0
    %v1183 = vmax.f32 %v425, 0.0
    %v1184 = vmax.f32 %v616, 0.0
    %v1185 = vmax.f32 %v618, 0.0
    %v1186 = vmax.f32 %v809, 0.0
    %v1187 = vmax.f32 %v811, 0.0
    %v1188 = vmax.f32 %v1002, 0.0
    %v1189 = vmax.f32 %v1004, 0.0
    %v1190 = vmax.f32 %v429, 0.0
    %v1191 = vmax.f32 %v431, 0.0
    %v1192 = vmax.f32 %v622, 0.0
    %v1193 = vmax.f32 %v624, 0.0
    %v1194 = vmax.f32 %v815, 0.0
    %v1195 = vmax.f32 %v817, 0.0
    %v1196 = vmax.f32 %v1008, 0.0
    %v1197 = vmax.f32 %v1010, 0.0
    %v1198 = vmax.f32 %v433, 0.0
    %v1199 = vmax.f32 %v435, 0.0
    %v1200 = vmax.f32 %v626, 0.0
    %v1201 = vmax.f32 %v628, 0.0
    %v1202 = vmax.f32 %v819, 0.0
    %v1203 = vmax.f32 %v821, 0.0
    %v1204 = vmax.f32 %v1012, 0.0
    %v1205 = vmax.f32 %v1014, 0.0
    %v1206 = vmax.f32 %v439, 0.0
    %v1207 = vmax.f32 %v441, 0.0
    %v1208 = vmax.f32 %v632, 0.0
    %v1209 = vmax.f32 %v634, 0.0
    %v1210 = vmax.f32 %v825, 0.0
    %v1211 = vmax.f32 %v827, 0.0
    %v1212 = vmax.f32 %v1018, 0.0
    %v1213 = vmax.f32 %v1020, 0.0
    %v1214 = vmax.f32 %v443, 0.0
    %v1215 = vmax.f32 %v445, 0.0
    %v1216 = vmax.f32 %v636, 0.0
    %v1217 = vmax.f32 %v638, 0.0
    %v1218 = vmax.f32 %v829, 0.0
    %v1219 = vmax.f32 %v831, 0.0
    %v1220 = vmax.f32 %v1022, 0.0
    %v1221 = vmax.f32 %v1024, 0.0
    %v1222 = vmax.f32 %v449, 0.0
    %v1223 = vmax.f32 %v451, 0.0
    %v1224 = vmax.f32 %v642, 0.0
    %v1225 = vmax.f32 %v644, 0.0
    %v1226 = vmax.f32 %v835, 0.0
    %v1227 = vmax.f32 %v837, 0.0
    %v1228 = vmax.f32 %v1028, 0.0
    %v1229 = vmax.f32 %v1030, 0.0
    %v1230 = vmax.f32 %v453, 0.0
    %v1231 = vmax.f32 %v455, 0.0
    %v1232 = vmax.f32 %v646, 0.0
    %v1233 = vmax.f32 %v648, 0.0
    %v1234 = vmax.f32 %v839, 0.0
    %v1235 = vmax.f32 %v841, 0.0
    %v1236 = vmax.f32 %v1032, 0.0
    %v1237 = vmax.f32 %v1034, 0.0
    %v1238 = vmax.f32 %v459, 0.0
    %v1239 = vmax.f32 %v461, 0.0
    %v1240 = vmax.f32 %v652, 0.0
    %v1241 = vmax.f32 %v654, 0.0
    %v1242 = vmax.f32 %v845, 0.0
    %v1243 = vmax.f32 %v847, 0.0
    %v1244 = vmax.f32 %v1038, 0.0
    %v1245 = vmax.f32 %v1040, 0.0
    %v1246 = vmax.f32 %v463, 0.0
    %v1247 = vmax.f32 %v465, 0.0
    %v1248 = vmax.f32 %v656, 0.0
    %v1249 = vmax.f32 %v658, 0.0
    %v1250 = vmax.f32 %v849, 0.0
    %v1251 = vmax.f32 %v851, 0.0
    %v1252 = vmax.f32 %v1042, 0.0
    %v1253 = vmax.f32 %v1044, 0.0
    %v1254 = vmax.f32 %v469, 0.0
    %v1255 = vmax.f32 %v471, 0.0
    %v1256 = vmax.f32 %v662, 0.0
    %v1257 = vmax.f32 %v664, 0.0
    %v1258 = vmax.f32 %v855, 0.0
    %v1259 = vmax.f32 %v857, 0.0
    %v1260 = vmax.f32 %v1048, 0.0
    %v1261 = vmax.f32 %v1050, 0.0
    %v1262 = vmax.f32 %v473, 0.0
    %v1263 = vmax.f32 %v475, 0.0
    %v1264 = vmax.f32 %v666, 0.0
    %v1265 = vmax.f32 %v668, 0.0
    %v1266 = vmax.f32 %v859, 0.0
    %v1267 = vmax.f32 %v861, 0.0
    %v1268 = vmax.f32 %v1052, 0.0
    %v1269 = vmax.f32 %v1054, 0.0
    %v1270 = vmax.f32 %v479, 0.0
    %v1271 = vmax.f32 %v481, 0.0
    %v1272 = vmax.f32 %v672, 0.0
    %v1273 = vmax.f32 %v674, 0.0
    %v1274 = vmax.f32 %v865, 0.0
    %v1275 = vmax.f32 %v867, 0.0
    %v1276 = vmax.f32 %v1058, 0.0
    %v1277 = vmax.f32 %v1060, 0.0
    %v1278 = vmax.f32 %v483, 0.0
    %v1279 = vmax.f32 %v485, 0.0
    %v1280 = vmax.f32 %v676, 0.0
    %v1281 = vmax.f32 %v678, 0.0
    %v1282 = vmax.f32 %v869, 0.0
    %v1283 = vmax.f32 %v871, 0.0
    %v1284 = vmax.f32 %v1062, 0.0
    %v1285 = vmax.f32 %v1064, 0.0
    %v1286 = vmax.f32 %v489, 0.0
    %v1287 = vmax.f32 %v491, 0.0
    %v1288 = vmax.f32 %v682, 0.0
    %v1289 = vmax.f32 %v684, 0.0
    %v1290 = vmax.f32 %v875, 0.0
    %v1291 = vmax.f32 %v877, 0.0
    %v1292 = vmax.f32 %v1068, 0.0
    %v1293 = vmax.f32 %v1070, 0.0
    %v1294 = vmax.f32 %v493, 0.0
    %v1295 = vmax.f32 %v495, 0.0
    %v1296 = vmax.f32 %v686, 0.0
    %v1297 = vmax.f32 %v688, 0.0
    %v1298 = vmax.f32 %v879, 0.0
    %v1299 = vmax.f32 %v881, 0.0
    %v1300 = vmax.f32 %v1072, 0.0
    %v1301 = vmax.f32 %v1074, 0.0
    %v1302 = vmax.f32 %v499, 0.0
    %v1303 = vmax.f32 %v501, 0.0
    %v1304 = vmax.f32 %v692, 0.0
    %v1305 = vmax.f32 %v694, 0.0
    %v1306 = vmax.f32 %v885, 0.0
    %v1307 = vmax.f32 %v887, 0.0
    %v1308 = vmax.f32 %v1078, 0.0
    %v1309 = vmax.f32 %v1080, 0.0
    %v1310 = vmax.f32 %v503, 0.0
    %v1311 = vmax.f32 %v505, 0.0
    %v1312 = vmax.f32 %v696, 0.0
    %v1313 = vmax.f32 %v698, 0.0
    %v1314 = vmax.f32 %v889, 0.0
    %v1315 = vmax.f32 %v891, 0.0
    %v1316 = vmax.f32 %v1082, 0.0
    %v1317 = vmax.f32 %v1084, 0.0
    %v1318 = vmax.f32 %v509, 0.0
    %v1319 = vmax.f32 %v511, 0.0
    %v1320 = vmax.f32 %v702, 0.0
    %v1321 = vmax.f32 %v704, 0.0
    %v1322 = vmax.f32 %v895, 0.0
    %v1323 = vmax.f32 %v897, 0.0
    %v1324 = vmax.f32 %v1088, 0.0
    %v1325 = vmax.f32 %v1090, 0.0
    %v1326 = vmax.f32 %v513, 0.0
    %v1327 = vmax.f32 %v515, 0.0
    %v1328 = vmax.f32 %v706, 0.0
    %v1329 = vmax.f32 %v708, 0.0
    %v1330 = vmax.f32 %v899, 0.0
    %v1331 = vmax.f32 %v901, 0.0
    %v1332 = vmax.f32 %v1092, 0.0
    %v1333 = vmax.f32 %v1094, 0.0
    %v1334 = vmax.f32 %v519, 0.0
    %v1335 = vmax.f32 %v521, 0.0
    %v1336 = vmax.f32 %v712, 0.0
    %v1337 = vmax.f32 %v714, 0.0
    %v1338 = vmax.f32 %v905, 0.0
    %v1339 = vmax.f32 %v907, 0.0
    %v1340 = vmax.f32 %v1098, 0.0
    %v1341 = vmax.f32 %v1100, 0.0
    %v1342 = vmax.f32 %v523, 0.0
    %v1343 = vmax.f32 %v525, 0.0
    %v1344 = vmax.f32 %v716, 0.0
    %v1345 = vmax.f32 %v718, 0.0
    %v1346 = vmax.f32 %v909, 0.0
    %v1347 = vmax.f32 %v911, 0.0
    %v1348 = vmax.f32 %v1102, 0.0
    %v1349 = vmax.f32 %v1104, 0.0
    %v1350 = vmax.f32 %v529, 0.0
    %v1351 = vmax.f32 %v531, 0.0
    %v1352 = vmax.f32 %v722, 0.0
    %v1353 = vmax.f32 %v724, 0.0
    %v1354 = vmax.f32 %v915, 0.0
    %v1355 = vmax.f32 %v917, 0.0
    %v1356 = vmax.f32 %v1108, 0.0
    %v1357 = vmax.f32 %v1110, 0.0
    %v1358 = vmax.f32 %v533, 0.0
    %v1359 = vmax.f32 %v535, 0.0
    %v1360 = vmax.f32 %v726, 0.0
    %v1361 = vmax.f32 %v728, 0.0
    %v1362 = vmax.f32 %v919, 0.0
    %v1363 = vmax.f32 %v921, 0.0
    %v1364 = vmax.f32 %v1112, 0.0
    %v1365 = vmax.f32 %v1114, 0.0
    %v1366 = vmax.f32 %v539, 0.0
    %v1367 = vmax.f32 %v541, 0.0
    %v1368 = vmax.f32 %v732, 0.0
    %v1369 = vmax.f32 %v734, 0.0
    %v1370 = vmax.f32 %v925, 0.0
    %v1371 = vmax.f32 %v927, 0.0
    %v1372 = vmax.f32 %v1118, 0.0
    %v1373 = vmax.f32 %v1120, 0.0
    %v1374 = vmax.f32 %v543, 0.0
    %v1375 = vmax.f32 %v545, 0.0
    %v1376 = vmax.f32 %v736, 0.0
    %v1377 = vmax.f32 %v738, 0.0
    %v1378 = vmax.f32 %v929, 0.0
    %v1379 = vmax.f32 %v931, 0.0
    %v1380 = vmax.f32 %v1122, 0.0
    %v1381 = vmax.f32 %v1124, 0.0
    %v1382 = vpack.c.bf16 %v1134, %v1126
    %v1383 = vpack.c.bf16 %v1135, %v1127
    %v1384 = vpack.c.bf16 %v1136, %v1128
    %v1385 = vpack.c.bf16 %v1137, %v1129
    %v1386 = vpack.c.bf16 %v1138, %v1130
    %v1387 = vpack.c.bf16 %v1139, %v1131
    %v1388 = vpack.c.bf16 %v1140, %v1132
    %v1389 = vpack.c.bf16 %v1141, %v1133
    %v1390 = vpack.c.bf16 %v1150, %v1142
    %v1391 = vpack.c.bf16 %v1151, %v1143
    %v1392 = vpack.c.bf16 %v1152, %v1144
    %v1393 = vpack.c.bf16 %v1153, %v1145
    %v1394 = vpack.c.bf16 %v1154, %v1146
    %v1395 = vpack.c.bf16 %v1155, %v1147
    %v1396 = vpack.c.bf16 %v1156, %v1148
    %v1397 = vpack.c.bf16 %v1157, %v1149
    %v1398 = vpack.c.bf16 %v1166, %v1158
    %v1399 = vpack.c.bf16 %v1167, %v1159
    %v1400 = vpack.c.bf16 %v1168, %v1160
    %v1401 = vpack.c.bf16 %v1169, %v1161
    %v1402 = vpack.c.bf16 %v1170, %v1162
    %v1403 = vpack.c.bf16 %v1171, %v1163
    %v1404 = vpack.c.bf16 %v1172, %v1164
    %v1405 = vpack.c.bf16 %v1173, %v1165
    %v1406 = vpack.c.bf16 %v1182, %v1174
    %v1407 = vpack.c.bf16 %v1183, %v1175
    %v1408 = vpack.c.bf16 %v1184, %v1176
    %v1409 = vpack.c.bf16 %v1185, %v1177
    %v1410 = vpack.c.bf16 %v1186, %v1178
    %v1411 = vpack.c.bf16 %v1187, %v1179
    %v1412 = vpack.c.bf16 %v1188, %v1180
    %v1413 = vpack.c.bf16 %v1189, %v1181
    %v1414 = vpack.c.bf16 %v1198, %v1190
    %v1415 = vpack.c.bf16 %v1199, %v1191
    %v1416 = vpack.c.bf16 %v1200, %v1192
    %v1417 = vpack.c.bf16 %v1201, %v1193
    %v1418 = vpack.c.bf16 %v1202, %v1194
    %v1419 = vpack.c.bf16 %v1203, %v1195
    %v1420 = vpack.c.bf16 %v1204, %v1196
    %v1421 = vpack.c.bf16 %v1205, %v1197
    %v1422 = vpack.c.bf16 %v1214, %v1206
    %v1423 = vpack.c.bf16 %v1215, %v1207
    %v1424 = vpack.c.bf16 %v1216, %v1208
    %v1425 = vpack.c.bf16 %v1217, %v1209
    %v1426 = vpack.c.bf16 %v1218, %v1210
    %v1427 = vpack.c.bf16 %v1219, %v1211
    %v1428 = vpack.c.bf16 %v1220, %v1212
    %v1429 = vpack.c.bf16 %v1221, %v1213
    %v1430 = vpack.c.bf16 %v1230, %v1222
    %v1431 = vpack.c.bf16 %v1231, %v1223
    %v1432 = vpack.c.bf16 %v1232, %v1224
    %v1433 = vpack.c.bf16 %v1233, %v1225
    %v1434 = vpack.c.bf16 %v1234, %v1226
    %v1435 = vpack.c.bf16 %v1235, %v1227
    %v1436 = vpack.c.bf16 %v1236, %v1228
    %v1437 = vpack.c.bf16 %v1237, %v1229
    %v1438 = vpack.c.bf16 %v1246, %v1238
    %v1439 = vpack.c.bf16 %v1247, %v1239
    %v1440 = vpack.c.bf16 %v1248, %v1240
    %v1441 = vpack.c.bf16 %v1249, %v1241
    %v1442 = vpack.c.bf16 %v1250, %v1242
    %v1443 = vpack.c.bf16 %v1251, %v1243
    %v1444 = vpack.c.bf16 %v1252, %v1244
    %v1445 = vpack.c.bf16 %v1253, %v1245
    %v1446 = vpack.c.bf16 %v1262, %v1254
    %v1447 = vpack.c.bf16 %v1263, %v1255
    %v1448 = vpack.c.bf16 %v1264, %v1256
    %v1449 = vpack.c.bf16 %v1265, %v1257
    %v1450 = vpack.c.bf16 %v1266, %v1258
    %v1451 = vpack.c.bf16 %v1267, %v1259
    %v1452 = vpack.c.bf16 %v1268, %v1260
    %v1453 = vpack.c.bf16 %v1269, %v1261
    %v1454 = vpack.c.bf16 %v1278, %v1270
    %v1455 = vpack.c.bf16 %v1279, %v1271
    %v1456 = vpack.c.bf16 %v1280, %v1272
    %v1457 = vpack.c.bf16 %v1281, %v1273
    %v1458 = vpack.c.bf16 %v1282, %v1274
    %v1459 = vpack.c.bf16 %v1283, %v1275
    %v1460 = vpack.c.bf16 %v1284, %v1276
    %v1461 = vpack.c.bf16 %v1285, %v1277
    %v1462 = vpack.c.bf16 %v1294, %v1286
    %v1463 = vpack.c.bf16 %v1295, %v1287
    %v1464 = vpack.c.bf16 %v1296, %v1288
    %v1465 = vpack.c.bf16 %v1297, %v1289
    %v1466 = vpack.c.bf16 %v1298, %v1290
    %v1467 = vpack.c.bf16 %v1299, %v1291
    %v1468 = vpack.c.bf16 %v1300, %v1292
    %v1469 = vpack.c.bf16 %v1301, %v1293
    %v1470 = vpack.c.bf16 %v1310, %v1302
    %v1471 = vpack.c.bf16 %v1311, %v1303
    %v1472 = vpack.c.bf16 %v1312, %v1304
    %v1473 = vpack.c.bf16 %v1313, %v1305
    %v1474 = vpack.c.bf16 %v1314, %v1306
    %v1475 = vpack.c.bf16 %v1315, %v1307
    %v1476 = vpack.c.bf16 %v1316, %v1308
    %v1477 = vpack.c.bf16 %v1317, %v1309
    %v1478 = vpack.c.bf16 %v1326, %v1318
    %v1479 = vpack.c.bf16 %v1327, %v1319
    %v1480 = vpack.c.bf16 %v1328, %v1320
    %v1481 = vpack.c.bf16 %v1329, %v1321
    %v1482 = vpack.c.bf16 %v1330, %v1322
    %v1483 = vpack.c.bf16 %v1331, %v1323
    %v1484 = vpack.c.bf16 %v1332, %v1324
    %v1485 = vpack.c.bf16 %v1333, %v1325
    %v1486 = vpack.c.bf16 %v1342, %v1334
    %v1487 = vpack.c.bf16 %v1343, %v1335
    %v1488 = vpack.c.bf16 %v1344, %v1336
    %v1489 = vpack.c.bf16 %v1345, %v1337
    %v1490 = vpack.c.bf16 %v1346, %v1338
    %v1491 = vpack.c.bf16 %v1347, %v1339
    %v1492 = vpack.c.bf16 %v1348, %v1340
    %v1493 = vpack.c.bf16 %v1349, %v1341
    %v1494 = vpack.c.bf16 %v1358, %v1350
    %v1495 = vpack.c.bf16 %v1359, %v1351
    %v1496 = vpack.c.bf16 %v1360, %v1352
    %v1497 = vpack.c.bf16 %v1361, %v1353
    %v1498 = vpack.c.bf16 %v1362, %v1354
    %v1499 = vpack.c.bf16 %v1363, %v1355
    %v1500 = vpack.c.bf16 %v1364, %v1356
    %v1501 = vpack.c.bf16 %v1365, %v1357
    %v1502 = vpack.c.bf16 %v1374, %v1366
    %v1503 = vpack.c.bf16 %v1375, %v1367
    %v1504 = vpack.c.bf16 %v1376, %v1368
    %v1505 = vpack.c.bf16 %v1377, %v1369
    %v1506 = vpack.c.bf16 %v1378, %v1370
    %v1507 = vpack.c.bf16 %v1379, %v1371
    %v1508 = vpack.c.bf16 %v1380, %v1372
    %v1509 = vpack.c.bf16 %v1381, %v1373
    %v1510 = vld [vmem:[#allocation4] sm:$0xff]
    %v1511 = vld [vmem:[#allocation4 + $0x8] sm:$0xff]
    %v1512 = vld [vmem:[#allocation4 + $0x10] sm:$0xff]
    %v1513 = vld [vmem:[#allocation4 + $0x18] sm:$0xff]
    %v1514 = vld [vmem:[#allocation4 + $0x20] sm:$0xff]
    %v1515 = vld [vmem:[#allocation4 + $0x28] sm:$0xff]
    %v1516 = vld [vmem:[#allocation4 + $0x30] sm:$0xff]
    %v1517 = vld [vmem:[#allocation4 + $0x38] sm:$0xff]
    %v1518 = vld [vmem:[#allocation4 + $0x40] sm:$0xff]
    %v1519 = vld [vmem:[#allocation4 + $0x48] sm:$0xff]
    %v1520 = vld [vmem:[#allocation4 + $0x50] sm:$0xff]
    %v1521 = vld [vmem:[#allocation4 + $0x58] sm:$0xff]
    %v1522 = vld [vmem:[#allocation4 + $0x60] sm:$0xff]
    %v1523 = vld [vmem:[#allocation4 + $0x68] sm:$0xff]
    %v1524 = vld [vmem:[#allocation4 + $0x70] sm:$0xff]
    %v1525 = vld [vmem:[#allocation4 + $0x78] sm:$0xff]
    %v1526 = vld [vmem:[#allocation4 + $0x80] sm:$0xff]
    %v1527 = vld [vmem:[#allocation4 + $0x88] sm:$0xff]
    %v1528 = vld [vmem:[#allocation4 + $0x90] sm:$0xff]
    %v1529 = vld [vmem:[#allocation4 + $0x98] sm:$0xff]
    %v1530 = vld [vmem:[#allocation4 + $0xa0] sm:$0xff]
    %v1531 = vld [vmem:[#allocation4 + $0xa8] sm:$0xff]
    %v1532 = vld [vmem:[#allocation4 + $0xb0] sm:$0xff]
    %v1533 = vld [vmem:[#allocation4 + $0xb8] sm:$0xff]
    %v1534 = vld [vmem:[#allocation4 + $0xc0] sm:$0xff]
    %v1535 = vld [vmem:[#allocation4 + $0xc8] sm:$0xff]
    %v1536 = vld [vmem:[#allocation4 + $0xd0] sm:$0xff]
    %v1537 = vld [vmem:[#allocation4 + $0xd8] sm:$0xff]
    %v1538 = vld [vmem:[#allocation4 + $0xe0] sm:$0xff]
    %v1539 = vld [vmem:[#allocation4 + $0xe8] sm:$0xff]
    %v1540 = vld [vmem:[#allocation4 + $0xf0] sm:$0xff]
    %v1541 = vld [vmem:[#allocation4 + $0xf8] sm:$0xff]
    %v1542 = vld [vmem:[#allocation4 + $0x100] sm:$0xff]
    %v1543 = vld [vmem:[#allocation4 + $0x108] sm:$0xff]
    %v1544 = vld [vmem:[#allocation4 + $0x110] sm:$0xff]
    %v1545 = vld [vmem:[#allocation4 + $0x118] sm:$0xff]
    %v1546 = vld [vmem:[#allocation4 + $0x120] sm:$0xff]
    %v1547 = vld [vmem:[#allocation4 + $0x128] sm:$0xff]
    %v1548 = vld [vmem:[#allocation4 + $0x130] sm:$0xff]
    %v1549 = vld [vmem:[#allocation4 + $0x138] sm:$0xff]
    %v1550 = vld [vmem:[#allocation4 + $0x140] sm:$0xff]
    %v1551 = vld [vmem:[#allocation4 + $0x148] sm:$0xff]
    %v1552 = vld [vmem:[#allocation4 + $0x150] sm:$0xff]
    %v1553 = vld [vmem:[#allocation4 + $0x158] sm:$0xff]
    %v1554 = vld [vmem:[#allocation4 + $0x160] sm:$0xff]
    %v1555 = vld [vmem:[#allocation4 + $0x168] sm:$0xff]
    %v1556 = vld [vmem:[#allocation4 + $0x170] sm:$0xff]
    %v1557 = vld [vmem:[#allocation4 + $0x178] sm:$0xff]
    %v1558 = vld [vmem:[#allocation4 + $0x180] sm:$0xff]
    %v1559 = vld [vmem:[#allocation4 + $0x188] sm:$0xff]
    %v1560 = vld [vmem:[#allocation4 + $0x190] sm:$0xff]
    %v1561 = vld [vmem:[#allocation4 + $0x198] sm:$0xff]
    %v1562 = vld [vmem:[#allocation4 + $0x1a0] sm:$0xff]
    %v1563 = vld [vmem:[#allocation4 + $0x1a8] sm:$0xff]
    %v1564 = vld [vmem:[#allocation4 + $0x1b0] sm:$0xff]
    %v1565 = vld [vmem:[#allocation4 + $0x1b8] sm:$0xff]
    %v1566 = vld [vmem:[#allocation4 + $0x1c0] sm:$0xff]
    %v1567 = vld [vmem:[#allocation4 + $0x1c8] sm:$0xff]
    %v1568 = vld [vmem:[#allocation4 + $0x1d0] sm:$0xff]
    %v1569 = vld [vmem:[#allocation4 + $0x1d8] sm:$0xff]
    %v1570 = vld [vmem:[#allocation4 + $0x1e0] sm:$0xff]
    %v1571 = vld [vmem:[#allocation4 + $0x1e8] sm:$0xff]
    %v1572 = vld [vmem:[#allocation4 + $0x1f0] sm:$0xff]
    %v1573 = vld [vmem:[#allocation4 + $0x1f8] sm:$0xff]
    %v1574 = vld [vmem:[#allocation4 + $0x200] sm:$0xff]
    %v1575 = vld [vmem:[#allocation4 + $0x208] sm:$0xff]
    %v1576 = vld [vmem:[#allocation4 + $0x210] sm:$0xff]
    %v1577 = vld [vmem:[#allocation4 + $0x218] sm:$0xff]
    %v1578 = vld [vmem:[#allocation4 + $0x220] sm:$0xff]
    %v1579 = vld [vmem:[#allocation4 + $0x228] sm:$0xff]
    %v1580 = vld [vmem:[#allocation4 + $0x230] sm:$0xff]
    %v1581 = vld [vmem:[#allocation4 + $0x238] sm:$0xff]
    %v1582 = vld [vmem:[#allocation4 + $0x240] sm:$0xff]
    %v1583 = vld [vmem:[#allocation4 + $0x248] sm:$0xff]
    %v1584 = vld [vmem:[#allocation4 + $0x250] sm:$0xff]
    %v1585 = vld [vmem:[#allocation4 + $0x258] sm:$0xff]
    %v1586 = vld [vmem:[#allocation4 + $0x260] sm:$0xff]
    %v1587 = vld [vmem:[#allocation4 + $0x268] sm:$0xff]
    %v1588 = vld [vmem:[#allocation4 + $0x270] sm:$0xff]
    %v1589 = vld [vmem:[#allocation4 + $0x278] sm:$0xff]
    %v1590 = vld [vmem:[#allocation4 + $0x280] sm:$0xff]
    %v1591 = vld [vmem:[#allocation4 + $0x288] sm:$0xff]
    %v1592 = vld [vmem:[#allocation4 + $0x290] sm:$0xff]
    %v1593 = vld [vmem:[#allocation4 + $0x298] sm:$0xff]
    %v1594 = vld [vmem:[#allocation4 + $0x2a0] sm:$0xff]
    %v1595 = vld [vmem:[#allocation4 + $0x2a8] sm:$0xff]
    %v1596 = vld [vmem:[#allocation4 + $0x2b0] sm:$0xff]
    %v1597 = vld [vmem:[#allocation4 + $0x2b8] sm:$0xff]
    %v1598 = vld [vmem:[#allocation4 + $0x2c0] sm:$0xff]
    %v1599 = vld [vmem:[#allocation4 + $0x2c8] sm:$0xff]
    %v1600 = vld [vmem:[#allocation4 + $0x2d0] sm:$0xff]
    %v1601 = vld [vmem:[#allocation4 + $0x2d8] sm:$0xff]
    %v1602 = vld [vmem:[#allocation4 + $0x2e0] sm:$0xff]
    %v1603 = vld [vmem:[#allocation4 + $0x2e8] sm:$0xff]
    %v1604 = vld [vmem:[#allocation4 + $0x2f0] sm:$0xff]
    %v1605 = vld [vmem:[#allocation4 + $0x2f8] sm:$0xff]
    %v1606 = vld [vmem:[#allocation4 + $0x300] sm:$0xff]
    %v1607 = vld [vmem:[#allocation4 + $0x308] sm:$0xff]
    %v1608 = vld [vmem:[#allocation4 + $0x310] sm:$0xff]
    %v1609 = vld [vmem:[#allocation4 + $0x318] sm:$0xff]
    %v1610 = vld [vmem:[#allocation4 + $0x320] sm:$0xff]
    %v1611 = vld [vmem:[#allocation4 + $0x328] sm:$0xff]
    %v1612 = vld [vmem:[#allocation4 + $0x330] sm:$0xff]
    %v1613 = vld [vmem:[#allocation4 + $0x338] sm:$0xff]
    %v1614 = vld [vmem:[#allocation4 + $0x340] sm:$0xff]
    %v1615 = vld [vmem:[#allocation4 + $0x348] sm:$0xff]
    %v1616 = vld [vmem:[#allocation4 + $0x350] sm:$0xff]
    %v1617 = vld [vmem:[#allocation4 + $0x358] sm:$0xff]
    %v1618 = vld [vmem:[#allocation4 + $0x360] sm:$0xff]
    %v1619 = vld [vmem:[#allocation4 + $0x368] sm:$0xff]
    %v1620 = vld [vmem:[#allocation4 + $0x370] sm:$0xff]
    %v1621 = vld [vmem:[#allocation4 + $0x378] sm:$0xff]
    %v1622 = vld [vmem:[#allocation4 + $0x380] sm:$0xff]
    %v1623 = vld [vmem:[#allocation4 + $0x388] sm:$0xff]
    %v1624 = vld [vmem:[#allocation4 + $0x390] sm:$0xff]
    %v1625 = vld [vmem:[#allocation4 + $0x398] sm:$0xff]
    %v1626 = vld [vmem:[#allocation4 + $0x3a0] sm:$0xff]
    %v1627 = vld [vmem:[#allocation4 + $0x3a8] sm:$0xff]
    %v1628 = vld [vmem:[#allocation4 + $0x3b0] sm:$0xff]
    %v1629 = vld [vmem:[#allocation4 + $0x3b8] sm:$0xff]
    %v1630 = vld [vmem:[#allocation4 + $0x3c0] sm:$0xff]
    %v1631 = vld [vmem:[#allocation4 + $0x3c8] sm:$0xff]
    %v1632 = vld [vmem:[#allocation4 + $0x3d0] sm:$0xff]
    %v1633 = vld [vmem:[#allocation4 + $0x3d8] sm:$0xff]
    %v1634 = vld [vmem:[#allocation4 + $0x3e0] sm:$0xff]
    %v1635 = vld [vmem:[#allocation4 + $0x3e8] sm:$0xff]
    %v1636 = vld [vmem:[#allocation4 + $0x3f0] sm:$0xff]
    %v1637 = vld [vmem:[#allocation4 + $0x3f8] sm:$0xff]
    %v1638 = vld [vmem:[#allocation4 + $0x400] sm:$0xff]
    %v1639 = vld [vmem:[#allocation4 + $0x408] sm:$0xff]
    %v1640 = vld [vmem:[#allocation4 + $0x410] sm:$0xff]
    %v1641 = vld [vmem:[#allocation4 + $0x418] sm:$0xff]
    %v1642 = vld [vmem:[#allocation4 + $0x420] sm:$0xff]
    %v1643 = vld [vmem:[#allocation4 + $0x428] sm:$0xff]
    %v1644 = vld [vmem:[#allocation4 + $0x430] sm:$0xff]
    %v1645 = vld [vmem:[#allocation4 + $0x438] sm:$0xff]
    %v1646 = vld [vmem:[#allocation4 + $0x440] sm:$0xff]
    %v1647 = vld [vmem:[#allocation4 + $0x448] sm:$0xff]
    %v1648 = vld [vmem:[#allocation4 + $0x450] sm:$0xff]
    %v1649 = vld [vmem:[#allocation4 + $0x458] sm:$0xff]
    %v1650 = vld [vmem:[#allocation4 + $0x460] sm:$0xff]
    %v1651 = vld [vmem:[#allocation4 + $0x468] sm:$0xff]
    %v1652 = vld [vmem:[#allocation4 + $0x470] sm:$0xff]
    %v1653 = vld [vmem:[#allocation4 + $0x478] sm:$0xff]
    %v1654 = vld [vmem:[#allocation4 + $0x480] sm:$0xff]
    %v1655 = vld [vmem:[#allocation4 + $0x488] sm:$0xff]
    %v1656 = vld [vmem:[#allocation4 + $0x490] sm:$0xff]
    %v1657 = vld [vmem:[#allocation4 + $0x498] sm:$0xff]
    %v1658 = vld [vmem:[#allocation4 + $0x4a0] sm:$0xff]
    %v1659 = vld [vmem:[#allocation4 + $0x4a8] sm:$0xff]
    %v1660 = vld [vmem:[#allocation4 + $0x4b0] sm:$0xff]
    %v1661 = vld [vmem:[#allocation4 + $0x4b8] sm:$0xff]
    %v1662 = vld [vmem:[#allocation4 + $0x4c0] sm:$0xff]
    %v1663 = vld [vmem:[#allocation4 + $0x4c8] sm:$0xff]
    %v1664 = vld [vmem:[#allocation4 + $0x4d0] sm:$0xff]
    %v1665 = vld [vmem:[#allocation4 + $0x4d8] sm:$0xff]
    %v1666 = vld [vmem:[#allocation4 + $0x4e0] sm:$0xff]
    %v1667 = vld [vmem:[#allocation4 + $0x4e8] sm:$0xff]
    %v1668 = vld [vmem:[#allocation4 + $0x4f0] sm:$0xff]
    %v1669 = vld [vmem:[#allocation4 + $0x4f8] sm:$0xff]
    %v1670 = vld [vmem:[#allocation4 + $0x500] sm:$0xff]
    %v1671 = vld [vmem:[#allocation4 + $0x508] sm:$0xff]
    %v1672 = vld [vmem:[#allocation4 + $0x510] sm:$0xff]
    %v1673 = vld [vmem:[#allocation4 + $0x518] sm:$0xff]
    %v1674 = vld [vmem:[#allocation4 + $0x520] sm:$0xff]
    %v1675 = vld [vmem:[#allocation4 + $0x528] sm:$0xff]
    %v1676 = vld [vmem:[#allocation4 + $0x530] sm:$0xff]
    %v1677 = vld [vmem:[#allocation4 + $0x538] sm:$0xff]
    %v1678 = vld [vmem:[#allocation4 + $0x540] sm:$0xff]
    %v1679 = vld [vmem:[#allocation4 + $0x548] sm:$0xff]
    %v1680 = vld [vmem:[#allocation4 + $0x550] sm:$0xff]
    %v1681 = vld [vmem:[#allocation4 + $0x558] sm:$0xff]
    %v1682 = vld [vmem:[#allocation4 + $0x560] sm:$0xff]
    %v1683 = vld [vmem:[#allocation4 + $0x568] sm:$0xff]
    %v1684 = vld [vmem:[#allocation4 + $0x570] sm:$0xff]
    %v1685 = vld [vmem:[#allocation4 + $0x578] sm:$0xff]
    %v1686 = vld [vmem:[#allocation4 + $0x580] sm:$0xff]
    %v1687 = vld [vmem:[#allocation4 + $0x588] sm:$0xff]
    %v1688 = vld [vmem:[#allocation4 + $0x590] sm:$0xff]
    %v1689 = vld [vmem:[#allocation4 + $0x598] sm:$0xff]
    %v1690 = vld [vmem:[#allocation4 + $0x5a0] sm:$0xff]
    %v1691 = vld [vmem:[#allocation4 + $0x5a8] sm:$0xff]
    %v1692 = vld [vmem:[#allocation4 + $0x5b0] sm:$0xff]
    %v1693 = vld [vmem:[#allocation4 + $0x5b8] sm:$0xff]
    %v1694 = vld [vmem:[#allocation4 + $0x5c0] sm:$0xff]
    %v1695 = vld [vmem:[#allocation4 + $0x5c8] sm:$0xff]
    %v1696 = vld [vmem:[#allocation4 + $0x5d0] sm:$0xff]
    %v1697 = vld [vmem:[#allocation4 + $0x5d8] sm:$0xff]
    %v1698 = vld [vmem:[#allocation4 + $0x5e0] sm:$0xff]
    %v1699 = vld [vmem:[#allocation4 + $0x5e8] sm:$0xff]
    %v1700 = vld [vmem:[#allocation4 + $0x5f0] sm:$0xff]
    %v1701 = vld [vmem:[#allocation4 + $0x5f8] sm:$0xff]
    %v1702 = vld [vmem:[#allocation4 + $0x600] sm:$0xff]
    %v1703 = vld [vmem:[#allocation4 + $0x608] sm:$0xff]
    %v1704 = vld [vmem:[#allocation4 + $0x610] sm:$0xff]
    %v1705 = vld [vmem:[#allocation4 + $0x618] sm:$0xff]
    %v1706 = vld [vmem:[#allocation4 + $0x620] sm:$0xff]
    %v1707 = vld [vmem:[#allocation4 + $0x628] sm:$0xff]
    %v1708 = vld [vmem:[#allocation4 + $0x630] sm:$0xff]
    %v1709 = vld [vmem:[#allocation4 + $0x638] sm:$0xff]
    %v1710 = vld [vmem:[#allocation4 + $0x640] sm:$0xff]
    %v1711 = vld [vmem:[#allocation4 + $0x648] sm:$0xff]
    %v1712 = vld [vmem:[#allocation4 + $0x650] sm:$0xff]
    %v1713 = vld [vmem:[#allocation4 + $0x658] sm:$0xff]
    %v1714 = vld [vmem:[#allocation4 + $0x660] sm:$0xff]
    %v1715 = vld [vmem:[#allocation4 + $0x668] sm:$0xff]
    %v1716 = vld [vmem:[#allocation4 + $0x670] sm:$0xff]
    %v1717 = vld [vmem:[#allocation4 + $0x678] sm:$0xff]
    %v1718 = vld [vmem:[#allocation4 + $0x680] sm:$0xff]
    %v1719 = vld [vmem:[#allocation4 + $0x688] sm:$0xff]
    %v1720 = vld [vmem:[#allocation4 + $0x690] sm:$0xff]
    %v1721 = vld [vmem:[#allocation4 + $0x698] sm:$0xff]
    %v1722 = vld [vmem:[#allocation4 + $0x6a0] sm:$0xff]
    %v1723 = vld [vmem:[#allocation4 + $0x6a8] sm:$0xff]
    %v1724 = vld [vmem:[#allocation4 + $0x6b0] sm:$0xff]
    %v1725 = vld [vmem:[#allocation4 + $0x6b8] sm:$0xff]
    %v1726 = vld [vmem:[#allocation4 + $0x6c0] sm:$0xff]
    %v1727 = vld [vmem:[#allocation4 + $0x6c8] sm:$0xff]
    %v1728 = vld [vmem:[#allocation4 + $0x6d0] sm:$0xff]
    %v1729 = vld [vmem:[#allocation4 + $0x6d8] sm:$0xff]
    %v1730 = vld [vmem:[#allocation4 + $0x6e0] sm:$0xff]
    %v1731 = vld [vmem:[#allocation4 + $0x6e8] sm:$0xff]
    %v1732 = vld [vmem:[#allocation4 + $0x6f0] sm:$0xff]
    %v1733 = vld [vmem:[#allocation4 + $0x6f8] sm:$0xff]
    %v1734 = vld [vmem:[#allocation4 + $0x700] sm:$0xff]
    %v1735 = vld [vmem:[#allocation4 + $0x708] sm:$0xff]
    %v1736 = vld [vmem:[#allocation4 + $0x710] sm:$0xff]
    %v1737 = vld [vmem:[#allocation4 + $0x718] sm:$0xff]
    %v1738 = vld [vmem:[#allocation4 + $0x720] sm:$0xff]
    %v1739 = vld [vmem:[#allocation4 + $0x728] sm:$0xff]
    %v1740 = vld [vmem:[#allocation4 + $0x730] sm:$0xff]
    %v1741 = vld [vmem:[#allocation4 + $0x738] sm:$0xff]
    %v1742 = vld [vmem:[#allocation4 + $0x740] sm:$0xff]
    %v1743 = vld [vmem:[#allocation4 + $0x748] sm:$0xff]
    %v1744 = vld [vmem:[#allocation4 + $0x750] sm:$0xff]
    %v1745 = vld [vmem:[#allocation4 + $0x758] sm:$0xff]
    %v1746 = vld [vmem:[#allocation4 + $0x760] sm:$0xff]
    %v1747 = vld [vmem:[#allocation4 + $0x768] sm:$0xff]
    %v1748 = vld [vmem:[#allocation4 + $0x770] sm:$0xff]
    %v1749 = vld [vmem:[#allocation4 + $0x778] sm:$0xff]
    %v1750 = vld [vmem:[#allocation4 + $0x780] sm:$0xff]
    %v1751 = vld [vmem:[#allocation4 + $0x788] sm:$0xff]
    %v1752 = vld [vmem:[#allocation4 + $0x790] sm:$0xff]
    %v1753 = vld [vmem:[#allocation4 + $0x798] sm:$0xff]
    %v1754 = vld [vmem:[#allocation4 + $0x7a0] sm:$0xff]
    %v1755 = vld [vmem:[#allocation4 + $0x7a8] sm:$0xff]
    %v1756 = vld [vmem:[#allocation4 + $0x7b0] sm:$0xff]
    %v1757 = vld [vmem:[#allocation4 + $0x7b8] sm:$0xff]
    %v1758 = vld [vmem:[#allocation4 + $0x7c0] sm:$0xff]
    %v1759 = vld [vmem:[#allocation4 + $0x7c8] sm:$0xff]
    %v1760 = vld [vmem:[#allocation4 + $0x7d0] sm:$0xff]
    %v1761 = vld [vmem:[#allocation4 + $0x7d8] sm:$0xff]
    %v1762 = vld [vmem:[#allocation4 + $0x7e0] sm:$0xff]
    %v1763 = vld [vmem:[#allocation4 + $0x7e8] sm:$0xff]
    %v1764 = vld [vmem:[#allocation4 + $0x7f0] sm:$0xff]
    %v1765 = vld [vmem:[#allocation4 + $0x7f8] sm:$0xff]
    %v1766 = vld [vmem:[%s4] sm:$0xf]
    %v1768 = vlaneseq
    %v1769 = vshrl.u32 %v1768, 7
    %v1770 = vsub.s32 0, %v1769
    %v1771 = vrot.slane %v1766, %v1770
    %v1772 = vlaneseq
    %v1773 = vshrl.u32 %v1772, 7
    %v1774 = vsub.s32 1, %v1773
    %v1775 = vrot.slane %v1766, %v1774
    %v1776 = vlaneseq
    %v1777 = vshrl.u32 %v1776, 7
    %v1778 = vsub.s32 2, %v1777
    %v1779 = vrot.slane %v1766, %v1778
    %v1780 = vlaneseq
    %v1781 = vshrl.u32 %v1780, 7
    %v1782 = vsub.s32 3, %v1781
    %v1783 = vrot.slane %v1766, %v1782
    %v2044 = vunpack.c.l.b16 %v1510
    %v2045 = vunpack.c.h.b16 %v1510
    %v2046 = vunpack.c.l.b16 %v1511
    %v2047 = vunpack.c.h.b16 %v1511
    %v2048 = vunpack.c.l.b16 %v1512
    %v2049 = vunpack.c.h.b16 %v1512
    %v2050 = vunpack.c.l.b16 %v1513
    %v2051 = vunpack.c.h.b16 %v1513
    %v2052 = vunpack.c.l.b16 %v1514
    %v2053 = vunpack.c.h.b16 %v1514
    %v2054 = vunpack.c.l.b16 %v1515
    %v2055 = vunpack.c.h.b16 %v1515
    %v2056 = vunpack.c.l.b16 %v1516
    %v2057 = vunpack.c.h.b16 %v1516
    %v2058 = vunpack.c.l.b16 %v1517
    %v2059 = vunpack.c.h.b16 %v1517
    %v2060 = vunpack.c.l.b16 %v1518
    %v2061 = vunpack.c.h.b16 %v1518
    %v2062 = vunpack.c.l.b16 %v1519
    %v2063 = vunpack.c.h.b16 %v1519
    %v2064 = vunpack.c.l.b16 %v1520
    %v2065 = vunpack.c.h.b16 %v1520
    %v2066 = vunpack.c.l.b16 %v1521
    %v2067 = vunpack.c.h.b16 %v1521
    %v2068 = vunpack.c.l.b16 %v1522
    %v2069 = vunpack.c.h.b16 %v1522
    %v2070 = vunpack.c.l.b16 %v1523
    %v2071 = vunpack.c.h.b16 %v1523
    %v2072 = vunpack.c.l.b16 %v1524
    %v2073 = vunpack.c.h.b16 %v1524
    %v2074 = vunpack.c.l.b16 %v1525
    %v2075 = vunpack.c.h.b16 %v1525
    %v2076 = vunpack.c.l.b16 %v1526
    %v2077 = vunpack.c.h.b16 %v1526
    %v2078 = vunpack.c.l.b16 %v1527
    %v2079 = vunpack.c.h.b16 %v1527
    %v2080 = vunpack.c.l.b16 %v1528
    %v2081 = vunpack.c.h.b16 %v1528
    %v2082 = vunpack.c.l.b16 %v1529
    %v2083 = vunpack.c.h.b16 %v1529
    %v2084 = vunpack.c.l.b16 %v1530
    %v2085 = vunpack.c.h.b16 %v1530
    %v2086 = vunpack.c.l.b16 %v1531
    %v2087 = vunpack.c.h.b16 %v1531
    %v2088 = vunpack.c.l.b16 %v1532
    %v2089 = vunpack.c.h.b16 %v1532
    %v2090 = vunpack.c.l.b16 %v1533
    %v2091 = vunpack.c.h.b16 %v1533
    %v2092 = vunpack.c.l.b16 %v1534
    %v2093 = vunpack.c.h.b16 %v1534
    %v2094 = vunpack.c.l.b16 %v1535
    %v2095 = vunpack.c.h.b16 %v1535
    %v2096 = vunpack.c.l.b16 %v1536
    %v2097 = vunpack.c.h.b16 %v1536
    %v2098 = vunpack.c.l.b16 %v1537
    %v2099 = vunpack.c.h.b16 %v1537
    %v2100 = vunpack.c.l.b16 %v1538
    %v2101 = vunpack.c.h.b16 %v1538
    %v2102 = vunpack.c.l.b16 %v1539
    %v2103 = vunpack.c.h.b16 %v1539
    %v2104 = vunpack.c.l.b16 %v1540
    %v2105 = vunpack.c.h.b16 %v1540
    %v2106 = vunpack.c.l.b16 %v1541
    %v2107 = vunpack.c.h.b16 %v1541
    %v2108 = vunpack.c.l.b16 %v1542
    %v2109 = vunpack.c.h.b16 %v1542
    %v2110 = vunpack.c.l.b16 %v1543
    %v2111 = vunpack.c.h.b16 %v1543
    %v2112 = vunpack.c.l.b16 %v1544
    %v2113 = vunpack.c.h.b16 %v1544
    %v2114 = vunpack.c.l.b16 %v1545
    %v2115 = vunpack.c.h.b16 %v1545
    %v2116 = vunpack.c.l.b16 %v1546
    %v2117 = vunpack.c.h.b16 %v1546
    %v2118 = vunpack.c.l.b16 %v1547
    %v2119 = vunpack.c.h.b16 %v1547
    %v2120 = vunpack.c.l.b16 %v1548
    %v2121 = vunpack.c.h.b16 %v1548
    %v2122 = vunpack.c.l.b16 %v1549
    %v2123 = vunpack.c.h.b16 %v1549
    %v2124 = vunpack.c.l.b16 %v1550
    %v2125 = vunpack.c.h.b16 %v1550
    %v2126 = vunpack.c.l.b16 %v1551
    %v2127 = vunpack.c.h.b16 %v1551
    %v2128 = vunpack.c.l.b16 %v1552
    %v2129 = vunpack.c.h.b16 %v1552
    %v2130 = vunpack.c.l.b16 %v1553
    %v2131 = vunpack.c.h.b16 %v1553
    %v2132 = vunpack.c.l.b16 %v1554
    %v2133 = vunpack.c.h.b16 %v1554
    %v2134 = vunpack.c.l.b16 %v1555
    %v2135 = vunpack.c.h.b16 %v1555
    %v2136 = vunpack.c.l.b16 %v1556
    %v2137 = vunpack.c.h.b16 %v1556
    %v2138 = vunpack.c.l.b16 %v1557
    %v2139 = vunpack.c.h.b16 %v1557
    %v2140 = vunpack.c.l.b16 %v1558
    %v2141 = vunpack.c.h.b16 %v1558
    %v2142 = vunpack.c.l.b16 %v1559
    %v2143 = vunpack.c.h.b16 %v1559
    %v2144 = vunpack.c.l.b16 %v1560
    %v2145 = vunpack.c.h.b16 %v1560
    %v2146 = vunpack.c.l.b16 %v1561
    %v2147 = vunpack.c.h.b16 %v1561
    %v2148 = vunpack.c.l.b16 %v1562
    %v2149 = vunpack.c.h.b16 %v1562
    %v2150 = vunpack.c.l.b16 %v1563
    %v2151 = vunpack.c.h.b16 %v1563
    %v2152 = vunpack.c.l.b16 %v1564
    %v2153 = vunpack.c.h.b16 %v1564
    %v2154 = vunpack.c.l.b16 %v1565
    %v2155 = vunpack.c.h.b16 %v1565
    %v2156 = vunpack.c.l.b16 %v1566
    %v2157 = vunpack.c.h.b16 %v1566
    %v2158 = vunpack.c.l.b16 %v1567
    %v2159 = vunpack.c.h.b16 %v1567
    %v2160 = vunpack.c.l.b16 %v1568
    %v2161 = vunpack.c.h.b16 %v1568
    %v2162 = vunpack.c.l.b16 %v1569
    %v2163 = vunpack.c.h.b16 %v1569
    %v2164 = vunpack.c.l.b16 %v1570
    %v2165 = vunpack.c.h.b16 %v1570
    %v2166 = vunpack.c.l.b16 %v1571
    %v2167 = vunpack.c.h.b16 %v1571
    %v2168 = vunpack.c.l.b16 %v1572
    %v2169 = vunpack.c.h.b16 %v1572
    %v2170 = vunpack.c.l.b16 %v1573
    %v2171 = vunpack.c.h.b16 %v1573
    %v2172 = vunpack.c.l.b16 %v1574
    %v2173 = vunpack.c.h.b16 %v1574
    %v2174 = vunpack.c.l.b16 %v1575
    %v2175 = vunpack.c.h.b16 %v1575
    %v2176 = vunpack.c.l.b16 %v1576
    %v2177 = vunpack.c.h.b16 %v1576
    %v2178 = vunpack.c.l.b16 %v1577
    %v2179 = vunpack.c.h.b16 %v1577
    %v2180 = vunpack.c.l.b16 %v1578
    %v2181 = vunpack.c.h.b16 %v1578
    %v2182 = vunpack.c.l.b16 %v1579
    %v2183 = vunpack.c.h.b16 %v1579
    %v2184 = vunpack.c.l.b16 %v1580
    %v2185 = vunpack.c.h.b16 %v1580
    %v2186 = vunpack.c.l.b16 %v1581
    %v2187 = vunpack.c.h.b16 %v1581
    %v2188 = vunpack.c.l.b16 %v1582
    %v2189 = vunpack.c.h.b16 %v1582
    %v2190 = vunpack.c.l.b16 %v1583
    %v2191 = vunpack.c.h.b16 %v1583
    %v2192 = vunpack.c.l.b16 %v1584
    %v2193 = vunpack.c.h.b16 %v1584
    %v2194 = vunpack.c.l.b16 %v1585
    %v2195 = vunpack.c.h.b16 %v1585
    %v2196 = vunpack.c.l.b16 %v1586
    %v2197 = vunpack.c.h.b16 %v1586
    %v2198 = vunpack.c.l.b16 %v1587
    %v2199 = vunpack.c.h.b16 %v1587
    %v2200 = vunpack.c.l.b16 %v1588
    %v2201 = vunpack.c.h.b16 %v1588
    %v2202 = vunpack.c.l.b16 %v1589
    %v2203 = vunpack.c.h.b16 %v1589
    %v2204 = vunpack.c.l.b16 %v1590
    %v2205 = vunpack.c.h.b16 %v1590
    %v2206 = vunpack.c.l.b16 %v1591
    %v2207 = vunpack.c.h.b16 %v1591
    %v2208 = vunpack.c.l.b16 %v1592
    %v2209 = vunpack.c.h.b16 %v1592
    %v2210 = vunpack.c.l.b16 %v1593
    %v2211 = vunpack.c.h.b16 %v1593
    %v2212 = vunpack.c.l.b16 %v1594
    %v2213 = vunpack.c.h.b16 %v1594
    %v2214 = vunpack.c.l.b16 %v1595
    %v2215 = vunpack.c.h.b16 %v1595
    %v2216 = vunpack.c.l.b16 %v1596
    %v2217 = vunpack.c.h.b16 %v1596
    %v2218 = vunpack.c.l.b16 %v1597
    %v2219 = vunpack.c.h.b16 %v1597
    %v2220 = vunpack.c.l.b16 %v1598
    %v2221 = vunpack.c.h.b16 %v1598
    %v2222 = vunpack.c.l.b16 %v1599
    %v2223 = vunpack.c.h.b16 %v1599
    %v2224 = vunpack.c.l.b16 %v1600
    %v2225 = vunpack.c.h.b16 %v1600
    %v2226 = vunpack.c.l.b16 %v1601
    %v2227 = vunpack.c.h.b16 %v1601
    %v2228 = vunpack.c.l.b16 %v1602
    %v2229 = vunpack.c.h.b16 %v1602
    %v2230 = vunpack.c.l.b16 %v1603
    %v2231 = vunpack.c.h.b16 %v1603
    %v2232 = vunpack.c.l.b16 %v1604
    %v2233 = vunpack.c.h.b16 %v1604
    %v2234 = vunpack.c.l.b16 %v1605
    %v2235 = vunpack.c.h.b16 %v1605
    %v2236 = vunpack.c.l.b16 %v1606
    %v2237 = vunpack.c.h.b16 %v1606
    %v2238 = vunpack.c.l.b16 %v1607
    %v2239 = vunpack.c.h.b16 %v1607
    %v2240 = vunpack.c.l.b16 %v1608
    %v2241 = vunpack.c.h.b16 %v1608
    %v2242 = vunpack.c.l.b16 %v1609
    %v2243 = vunpack.c.h.b16 %v1609
    %v2244 = vunpack.c.l.b16 %v1610
    %v2245 = vunpack.c.h.b16 %v1610
    %v2246 = vunpack.c.l.b16 %v1611
    %v2247 = vunpack.c.h.b16 %v1611
    %v2248 = vunpack.c.l.b16 %v1612
    %v2249 = vunpack.c.h.b16 %v1612
    %v2250 = vunpack.c.l.b16 %v1613
    %v2251 = vunpack.c.h.b16 %v1613
    %v2252 = vunpack.c.l.b16 %v1614
    %v2253 = vunpack.c.h.b16 %v1614
    %v2254 = vunpack.c.l.b16 %v1615
    %v2255 = vunpack.c.h.b16 %v1615
    %v2256 = vunpack.c.l.b16 %v1616
    %v2257 = vunpack.c.h.b16 %v1616
    %v2258 = vunpack.c.l.b16 %v1617
    %v2259 = vunpack.c.h.b16 %v1617
    %v2260 = vunpack.c.l.b16 %v1618
    %v2261 = vunpack.c.h.b16 %v1618
    %v2262 = vunpack.c.l.b16 %v1619
    %v2263 = vunpack.c.h.b16 %v1619
    %v2264 = vunpack.c.l.b16 %v1620
    %v2265 = vunpack.c.h.b16 %v1620
    %v2266 = vunpack.c.l.b16 %v1621
    %v2267 = vunpack.c.h.b16 %v1621
    %v2268 = vunpack.c.l.b16 %v1622
    %v2269 = vunpack.c.h.b16 %v1622
    %v2270 = vunpack.c.l.b16 %v1623
    %v2271 = vunpack.c.h.b16 %v1623
    %v2272 = vunpack.c.l.b16 %v1624
    %v2273 = vunpack.c.h.b16 %v1624
    %v2274 = vunpack.c.l.b16 %v1625
    %v2275 = vunpack.c.h.b16 %v1625
    %v2276 = vunpack.c.l.b16 %v1626
    %v2277 = vunpack.c.h.b16 %v1626
    %v2278 = vunpack.c.l.b16 %v1627
    %v2279 = vunpack.c.h.b16 %v1627
    %v2280 = vunpack.c.l.b16 %v1628
    %v2281 = vunpack.c.h.b16 %v1628
    %v2282 = vunpack.c.l.b16 %v1629
    %v2283 = vunpack.c.h.b16 %v1629
    %v2284 = vunpack.c.l.b16 %v1630
    %v2285 = vunpack.c.h.b16 %v1630
    %v2286 = vunpack.c.l.b16 %v1631
    %v2287 = vunpack.c.h.b16 %v1631
    %v2288 = vunpack.c.l.b16 %v1632
    %v2289 = vunpack.c.h.b16 %v1632
    %v2290 = vunpack.c.l.b16 %v1633
    %v2291 = vunpack.c.h.b16 %v1633
    %v2292 = vunpack.c.l.b16 %v1634
    %v2293 = vunpack.c.h.b16 %v1634
    %v2294 = vunpack.c.l.b16 %v1635
    %v2295 = vunpack.c.h.b16 %v1635
    %v2296 = vunpack.c.l.b16 %v1636
    %v2297 = vunpack.c.h.b16 %v1636
    %v2298 = vunpack.c.l.b16 %v1637
    %v2299 = vunpack.c.h.b16 %v1637
    %v2300 = vunpack.c.l.b16 %v1638
    %v2301 = vunpack.c.h.b16 %v1638
    %v2302 = vunpack.c.l.b16 %v1639
    %v2303 = vunpack.c.h.b16 %v1639
    %v2304 = vunpack.c.l.b16 %v1640
    %v2305 = vunpack.c.h.b16 %v1640
    %v2306 = vunpack.c.l.b16 %v1641
    %v2307 = vunpack.c.h.b16 %v1641
    %v2308 = vunpack.c.l.b16 %v1642
    %v2309 = vunpack.c.h.b16 %v1642
    %v2310 = vunpack.c.l.b16 %v1643
    %v2311 = vunpack.c.h.b16 %v1643
    %v2312 = vunpack.c.l.b16 %v1644
    %v2313 = vunpack.c.h.b16 %v1644
    %v2314 = vunpack.c.l.b16 %v1645
    %v2315 = vunpack.c.h.b16 %v1645
    %v2316 = vunpack.c.l.b16 %v1646
    %v2317 = vunpack.c.h.b16 %v1646
    %v2318 = vunpack.c.l.b16 %v1647
    %v2319 = vunpack.c.h.b16 %v1647
    %v2320 = vunpack.c.l.b16 %v1648
    %v2321 = vunpack.c.h.b16 %v1648
    %v2322 = vunpack.c.l.b16 %v1649
    %v2323 = vunpack.c.h.b16 %v1649
    %v2324 = vunpack.c.l.b16 %v1650
    %v2325 = vunpack.c.h.b16 %v1650
    %v2326 = vunpack.c.l.b16 %v1651
    %v2327 = vunpack.c.h.b16 %v1651
    %v2328 = vunpack.c.l.b16 %v1652
    %v2329 = vunpack.c.h.b16 %v1652
    %v2330 = vunpack.c.l.b16 %v1653
    %v2331 = vunpack.c.h.b16 %v1653
    %v2332 = vunpack.c.l.b16 %v1654
    %v2333 = vunpack.c.h.b16 %v1654
    %v2334 = vunpack.c.l.b16 %v1655
    %v2335 = vunpack.c.h.b16 %v1655
    %v2336 = vunpack.c.l.b16 %v1656
    %v2337 = vunpack.c.h.b16 %v1656
    %v2338 = vunpack.c.l.b16 %v1657
    %v2339 = vunpack.c.h.b16 %v1657
    %v2340 = vunpack.c.l.b16 %v1658
    %v2341 = vunpack.c.h.b16 %v1658
    %v2342 = vunpack.c.l.b16 %v1659
    %v2343 = vunpack.c.h.b16 %v1659
    %v2344 = vunpack.c.l.b16 %v1660
    %v2345 = vunpack.c.h.b16 %v1660
    %v2346 = vunpack.c.l.b16 %v1661
    %v2347 = vunpack.c.h.b16 %v1661
    %v2348 = vunpack.c.l.b16 %v1662
    %v2349 = vunpack.c.h.b16 %v1662
    %v2350 = vunpack.c.l.b16 %v1663
    %v2351 = vunpack.c.h.b16 %v1663
    %v2352 = vunpack.c.l.b16 %v1664
    %v2353 = vunpack.c.h.b16 %v1664
    %v2354 = vunpack.c.l.b16 %v1665
    %v2355 = vunpack.c.h.b16 %v1665
    %v2356 = vunpack.c.l.b16 %v1666
    %v2357 = vunpack.c.h.b16 %v1666
    %v2358 = vunpack.c.l.b16 %v1667
    %v2359 = vunpack.c.h.b16 %v1667
    %v2360 = vunpack.c.l.b16 %v1668
    %v2361 = vunpack.c.h.b16 %v1668
    %v2362 = vunpack.c.l.b16 %v1669
    %v2363 = vunpack.c.h.b16 %v1669
    %v2364 = vunpack.c.l.b16 %v1670
    %v2365 = vunpack.c.h.b16 %v1670
    %v2366 = vunpack.c.l.b16 %v1671
    %v2367 = vunpack.c.h.b16 %v1671
    %v2368 = vunpack.c.l.b16 %v1672
    %v2369 = vunpack.c.h.b16 %v1672
    %v2370 = vunpack.c.l.b16 %v1673
    %v2371 = vunpack.c.h.b16 %v1673
    %v2372 = vunpack.c.l.b16 %v1674
    %v2373 = vunpack.c.h.b16 %v1674
    %v2374 = vunpack.c.l.b16 %v1675
    %v2375 = vunpack.c.h.b16 %v1675
    %v2376 = vunpack.c.l.b16 %v1676
    %v2377 = vunpack.c.h.b16 %v1676
    %v2378 = vunpack.c.l.b16 %v1677
    %v2379 = vunpack.c.h.b16 %v1677
    %v2380 = vunpack.c.l.b16 %v1678
    %v2381 = vunpack.c.h.b16 %v1678
    %v2382 = vunpack.c.l.b16 %v1679
    %v2383 = vunpack.c.h.b16 %v1679
    %v2384 = vunpack.c.l.b16 %v1680
    %v2385 = vunpack.c.h.b16 %v1680
    %v2386 = vunpack.c.l.b16 %v1681
    %v2387 = vunpack.c.h.b16 %v1681
    %v2388 = vunpack.c.l.b16 %v1682
    %v2389 = vunpack.c.h.b16 %v1682
    %v2390 = vunpack.c.l.b16 %v1683
    %v2391 = vunpack.c.h.b16 %v1683
    %v2392 = vunpack.c.l.b16 %v1684
    %v2393 = vunpack.c.h.b16 %v1684
    %v2394 = vunpack.c.l.b16 %v1685
    %v2395 = vunpack.c.h.b16 %v1685
    %v2396 = vunpack.c.l.b16 %v1686
    %v2397 = vunpack.c.h.b16 %v1686
    %v2398 = vunpack.c.l.b16 %v1687
    %v2399 = vunpack.c.h.b16 %v1687
    %v2400 = vunpack.c.l.b16 %v1688
    %v2401 = vunpack.c.h.b16 %v1688
    %v2402 = vunpack.c.l.b16 %v1689
    %v2403 = vunpack.c.h.b16 %v1689
    %v2404 = vunpack.c.l.b16 %v1690
    %v2405 = vunpack.c.h.b16 %v1690
    %v2406 = vunpack.c.l.b16 %v1691
    %v2407 = vunpack.c.h.b16 %v1691
    %v2408 = vunpack.c.l.b16 %v1692
    %v2409 = vunpack.c.h.b16 %v1692
    %v2410 = vunpack.c.l.b16 %v1693
    %v2411 = vunpack.c.h.b16 %v1693
    %v2412 = vunpack.c.l.b16 %v1694
    %v2413 = vunpack.c.h.b16 %v1694
    %v2414 = vunpack.c.l.b16 %v1695
    %v2415 = vunpack.c.h.b16 %v1695
    %v2416 = vunpack.c.l.b16 %v1696
    %v2417 = vunpack.c.h.b16 %v1696
    %v2418 = vunpack.c.l.b16 %v1697
    %v2419 = vunpack.c.h.b16 %v1697
    %v2420 = vunpack.c.l.b16 %v1698
    %v2421 = vunpack.c.h.b16 %v1698
    %v2422 = vunpack.c.l.b16 %v1699
    %v2423 = vunpack.c.h.b16 %v1699
    %v2424 = vunpack.c.l.b16 %v1700
    %v2425 = vunpack.c.h.b16 %v1700
    %v2426 = vunpack.c.l.b16 %v1701
    %v2427 = vunpack.c.h.b16 %v1701
    %v2428 = vunpack.c.l.b16 %v1702
    %v2429 = vunpack.c.h.b16 %v1702
    %v2430 = vunpack.c.l.b16 %v1703
    %v2431 = vunpack.c.h.b16 %v1703
    %v2432 = vunpack.c.l.b16 %v1704
    %v2433 = vunpack.c.h.b16 %v1704
    %v2434 = vunpack.c.l.b16 %v1705
    %v2435 = vunpack.c.h.b16 %v1705
    %v2436 = vunpack.c.l.b16 %v1706
    %v2437 = vunpack.c.h.b16 %v1706
    %v2438 = vunpack.c.l.b16 %v1707
    %v2439 = vunpack.c.h.b16 %v1707
    %v2440 = vunpack.c.l.b16 %v1708
    %v2441 = vunpack.c.h.b16 %v1708
    %v2442 = vunpack.c.l.b16 %v1709
    %v2443 = vunpack.c.h.b16 %v1709
    %v2444 = vunpack.c.l.b16 %v1710
    %v2445 = vunpack.c.h.b16 %v1710
    %v2446 = vunpack.c.l.b16 %v1711
    %v2447 = vunpack.c.h.b16 %v1711
    %v2448 = vunpack.c.l.b16 %v1712
    %v2449 = vunpack.c.h.b16 %v1712
    %v2450 = vunpack.c.l.b16 %v1713
    %v2451 = vunpack.c.h.b16 %v1713
    %v2452 = vunpack.c.l.b16 %v1714
    %v2453 = vunpack.c.h.b16 %v1714
    %v2454 = vunpack.c.l.b16 %v1715
    %v2455 = vunpack.c.h.b16 %v1715
    %v2456 = vunpack.c.l.b16 %v1716
    %v2457 = vunpack.c.h.b16 %v1716
    %v2458 = vunpack.c.l.b16 %v1717
    %v2459 = vunpack.c.h.b16 %v1717
    %v2460 = vunpack.c.l.b16 %v1718
    %v2461 = vunpack.c.h.b16 %v1718
    %v2462 = vunpack.c.l.b16 %v1719
    %v2463 = vunpack.c.h.b16 %v1719
    %v2464 = vunpack.c.l.b16 %v1720
    %v2465 = vunpack.c.h.b16 %v1720
    %v2466 = vunpack.c.l.b16 %v1721
    %v2467 = vunpack.c.h.b16 %v1721
    %v2468 = vunpack.c.l.b16 %v1722
    %v2469 = vunpack.c.h.b16 %v1722
    %v2470 = vunpack.c.l.b16 %v1723
    %v2471 = vunpack.c.h.b16 %v1723
    %v2472 = vunpack.c.l.b16 %v1724
    %v2473 = vunpack.c.h.b16 %v1724
    %v2474 = vunpack.c.l.b16 %v1725
    %v2475 = vunpack.c.h.b16 %v1725
    %v2476 = vunpack.c.l.b16 %v1726
    %v2477 = vunpack.c.h.b16 %v1726
    %v2478 = vunpack.c.l.b16 %v1727
    %v2479 = vunpack.c.h.b16 %v1727
    %v2480 = vunpack.c.l.b16 %v1728
    %v2481 = vunpack.c.h.b16 %v1728
    %v2482 = vunpack.c.l.b16 %v1729
    %v2483 = vunpack.c.h.b16 %v1729
    %v2484 = vunpack.c.l.b16 %v1730
    %v2485 = vunpack.c.h.b16 %v1730
    %v2486 = vunpack.c.l.b16 %v1731
    %v2487 = vunpack.c.h.b16 %v1731
    %v2488 = vunpack.c.l.b16 %v1732
    %v2489 = vunpack.c.h.b16 %v1732
    %v2490 = vunpack.c.l.b16 %v1733
    %v2491 = vunpack.c.h.b16 %v1733
    %v2492 = vunpack.c.l.b16 %v1734
    %v2493 = vunpack.c.h.b16 %v1734
    %v2494 = vunpack.c.l.b16 %v1735
    %v2495 = vunpack.c.h.b16 %v1735
    %v2496 = vunpack.c.l.b16 %v1736
    %v2497 = vunpack.c.h.b16 %v1736
    %v2498 = vunpack.c.l.b16 %v1737
    %v2499 = vunpack.c.h.b16 %v1737
    %v2500 = vunpack.c.l.b16 %v1738
    %v2501 = vunpack.c.h.b16 %v1738
    %v2502 = vunpack.c.l.b16 %v1739
    %v2503 = vunpack.c.h.b16 %v1739
    %v2504 = vunpack.c.l.b16 %v1740
    %v2505 = vunpack.c.h.b16 %v1740
    %v2506 = vunpack.c.l.b16 %v1741
    %v2507 = vunpack.c.h.b16 %v1741
    %v2508 = vunpack.c.l.b16 %v1742
    %v2509 = vunpack.c.h.b16 %v1742
    %v2510 = vunpack.c.l.b16 %v1743
    %v2511 = vunpack.c.h.b16 %v1743
    %v2512 = vunpack.c.l.b16 %v1744
    %v2513 = vunpack.c.h.b16 %v1744
    %v2514 = vunpack.c.l.b16 %v1745
    %v2515 = vunpack.c.h.b16 %v1745
    %v2516 = vunpack.c.l.b16 %v1746
    %v2517 = vunpack.c.h.b16 %v1746
    %v2518 = vunpack.c.l.b16 %v1747
    %v2519 = vunpack.c.h.b16 %v1747
    %v2520 = vunpack.c.l.b16 %v1748
    %v2521 = vunpack.c.h.b16 %v1748
    %v2522 = vunpack.c.l.b16 %v1749
    %v2523 = vunpack.c.h.b16 %v1749
    %v2524 = vunpack.c.l.b16 %v1750
    %v2525 = vunpack.c.h.b16 %v1750
    %v2526 = vunpack.c.l.b16 %v1751
    %v2527 = vunpack.c.h.b16 %v1751
    %v2528 = vunpack.c.l.b16 %v1752
    %v2529 = vunpack.c.h.b16 %v1752
    %v2530 = vunpack.c.l.b16 %v1753
    %v2531 = vunpack.c.h.b16 %v1753
    %v2532 = vunpack.c.l.b16 %v1754
    %v2533 = vunpack.c.h.b16 %v1754
    %v2534 = vunpack.c.l.b16 %v1755
    %v2535 = vunpack.c.h.b16 %v1755
    %v2536 = vunpack.c.l.b16 %v1756
    %v2537 = vunpack.c.h.b16 %v1756
    %v2538 = vunpack.c.l.b16 %v1757
    %v2539 = vunpack.c.h.b16 %v1757
    %v2540 = vunpack.c.l.b16 %v1758
    %v2541 = vunpack.c.h.b16 %v1758
    %v2542 = vunpack.c.l.b16 %v1759
    %v2543 = vunpack.c.h.b16 %v1759
    %v2544 = vunpack.c.l.b16 %v1760
    %v2545 = vunpack.c.h.b16 %v1760
    %v2546 = vunpack.c.l.b16 %v1761
    %v2547 = vunpack.c.h.b16 %v1761
    %v2548 = vunpack.c.l.b16 %v1762
    %v2549 = vunpack.c.h.b16 %v1762
    %v2550 = vunpack.c.l.b16 %v1763
    %v2551 = vunpack.c.h.b16 %v1763
    %v2552 = vunpack.c.l.b16 %v1764
    %v2553 = vunpack.c.h.b16 %v1764
    %v2554 = vunpack.c.l.b16 %v1765
    %v2555 = vunpack.c.h.b16 %v1765
    %v2556 = vpack.c.b16 %v2048, %v2044
    %v2557 = vpack.c.b16 %v2049, %v2045
    %v2558 = vpack.c.b16 %v2050, %v2046
    %v2559 = vpack.c.b16 %v2051, %v2047
    %v2560 = vpack.c.b16 %v2056, %v2052
    %v2561 = vpack.c.b16 %v2057, %v2053
    %v2562 = vpack.c.b16 %v2058, %v2054
    %v2563 = vpack.c.b16 %v2059, %v2055
    %v2564 = vpack.c.b16 %v2064, %v2060
    %v2565 = vpack.c.b16 %v2065, %v2061
    %v2566 = vpack.c.b16 %v2066, %v2062
    %v2567 = vpack.c.b16 %v2067, %v2063
    %v2568 = vpack.c.b16 %v2072, %v2068
    %v2569 = vpack.c.b16 %v2073, %v2069
    %v2570 = vpack.c.b16 %v2074, %v2070
    %v2571 = vpack.c.b16 %v2075, %v2071
    %v2572 = vpack.c.b16 %v2080, %v2076
    %v2573 = vpack.c.b16 %v2081, %v2077
    %v2574 = vpack.c.b16 %v2082, %v2078
    %v2575 = vpack.c.b16 %v2083, %v2079
    %v2576 = vpack.c.b16 %v2088, %v2084
    %v2577 = vpack.c.b16 %v2089, %v2085
    %v2578 = vpack.c.b16 %v2090, %v2086
    %v2579 = vpack.c.b16 %v2091, %v2087
    %v2580 = vpack.c.b16 %v2096, %v2092
    %v2581 = vpack.c.b16 %v2097, %v2093
    %v2582 = vpack.c.b16 %v2098, %v2094
    %v2583 = vpack.c.b16 %v2099, %v2095
    %v2584 = vpack.c.b16 %v2104, %v2100
    %v2585 = vpack.c.b16 %v2105, %v2101
    %v2586 = vpack.c.b16 %v2106, %v2102
    %v2587 = vpack.c.b16 %v2107, %v2103
    %v2588 = vpack.c.b16 %v2112, %v2108
    %v2589 = vpack.c.b16 %v2113, %v2109
    %v2590 = vpack.c.b16 %v2114, %v2110
    %v2591 = vpack.c.b16 %v2115, %v2111
    %v2592 = vpack.c.b16 %v2120, %v2116
    %v2593 = vpack.c.b16 %v2121, %v2117
    %v2594 = vpack.c.b16 %v2122, %v2118
    %v2595 = vpack.c.b16 %v2123, %v2119
    %v2596 = vpack.c.b16 %v2128, %v2124
    %v2597 = vpack.c.b16 %v2129, %v2125
    %v2598 = vpack.c.b16 %v2130, %v2126
    %v2599 = vpack.c.b16 %v2131, %v2127
    %v2600 = vpack.c.b16 %v2136, %v2132
    %v2601 = vpack.c.b16 %v2137, %v2133
    %v2602 = vpack.c.b16 %v2138, %v2134
    %v2603 = vpack.c.b16 %v2139, %v2135
    %v2604 = vpack.c.b16 %v2144, %v2140
    %v2605 = vpack.c.b16 %v2145, %v2141
    %v2606 = vpack.c.b16 %v2146, %v2142
    %v2607 = vpack.c.b16 %v2147, %v2143
    %v2608 = vpack.c.b16 %v2152, %v2148
    %v2609 = vpack.c.b16 %v2153, %v2149
    %v2610 = vpack.c.b16 %v2154, %v2150
    %v2611 = vpack.c.b16 %v2155, %v2151
    %v2612 = vpack.c.b16 %v2160, %v2156
    %v2613 = vpack.c.b16 %v2161, %v2157
    %v2614 = vpack.c.b16 %v2162, %v2158
    %v2615 = vpack.c.b16 %v2163, %v2159
    %v2616 = vpack.c.b16 %v2168, %v2164
    %v2617 = vpack.c.b16 %v2169, %v2165
    %v2618 = vpack.c.b16 %v2170, %v2166
    %v2619 = vpack.c.b16 %v2171, %v2167
    %v2620 = vpack.c.b16 %v2176, %v2172
    %v2621 = vpack.c.b16 %v2177, %v2173
    %v2622 = vpack.c.b16 %v2178, %v2174
    %v2623 = vpack.c.b16 %v2179, %v2175
    %v2624 = vpack.c.b16 %v2184, %v2180
    %v2625 = vpack.c.b16 %v2185, %v2181
    %v2626 = vpack.c.b16 %v2186, %v2182
    %v2627 = vpack.c.b16 %v2187, %v2183
    %v2628 = vpack.c.b16 %v2192, %v2188
    %v2629 = vpack.c.b16 %v2193, %v2189
    %v2630 = vpack.c.b16 %v2194, %v2190
    %v2631 = vpack.c.b16 %v2195, %v2191
    %v2632 = vpack.c.b16 %v2200, %v2196
    %v2633 = vpack.c.b16 %v2201, %v2197
    %v2634 = vpack.c.b16 %v2202, %v2198
    %v2635 = vpack.c.b16 %v2203, %v2199
    %v2636 = vpack.c.b16 %v2208, %v2204
    %v2637 = vpack.c.b16 %v2209, %v2205
    %v2638 = vpack.c.b16 %v2210, %v2206
    %v2639 = vpack.c.b16 %v2211, %v2207
    %v2640 = vpack.c.b16 %v2216, %v2212
    %v2641 = vpack.c.b16 %v2217, %v2213
    %v2642 = vpack.c.b16 %v2218, %v2214
    %v2643 = vpack.c.b16 %v2219, %v2215
    %v2644 = vpack.c.b16 %v2224, %v2220
    %v2645 = vpack.c.b16 %v2225, %v2221
    %v2646 = vpack.c.b16 %v2226, %v2222
    %v2647 = vpack.c.b16 %v2227, %v2223
    %v2648 = vpack.c.b16 %v2232, %v2228
    %v2649 = vpack.c.b16 %v2233, %v2229
    %v2650 = vpack.c.b16 %v2234, %v2230
    %v2651 = vpack.c.b16 %v2235, %v2231
    %v2652 = vpack.c.b16 %v2240, %v2236
    %v2653 = vpack.c.b16 %v2241, %v2237
    %v2654 = vpack.c.b16 %v2242, %v2238
    %v2655 = vpack.c.b16 %v2243, %v2239
    %v2656 = vpack.c.b16 %v2248, %v2244
    %v2657 = vpack.c.b16 %v2249, %v2245
    %v2658 = vpack.c.b16 %v2250, %v2246
    %v2659 = vpack.c.b16 %v2251, %v2247
    %v2660 = vpack.c.b16 %v2256, %v2252
    %v2661 = vpack.c.b16 %v2257, %v2253
    %v2662 = vpack.c.b16 %v2258, %v2254
    %v2663 = vpack.c.b16 %v2259, %v2255
    %v2664 = vpack.c.b16 %v2264, %v2260
    %v2665 = vpack.c.b16 %v2265, %v2261
    %v2666 = vpack.c.b16 %v2266, %v2262
    %v2667 = vpack.c.b16 %v2267, %v2263
    %v2668 = vpack.c.b16 %v2272, %v2268
    %v2669 = vpack.c.b16 %v2273, %v2269
    %v2670 = vpack.c.b16 %v2274, %v2270
    %v2671 = vpack.c.b16 %v2275, %v2271
    %v2672 = vpack.c.b16 %v2280, %v2276
    %v2673 = vpack.c.b16 %v2281, %v2277
    %v2674 = vpack.c.b16 %v2282, %v2278
    %v2675 = vpack.c.b16 %v2283, %v2279
    %v2676 = vpack.c.b16 %v2288, %v2284
    %v2677 = vpack.c.b16 %v2289, %v2285
    %v2678 = vpack.c.b16 %v2290, %v2286
    %v2679 = vpack.c.b16 %v2291, %v2287
    %v2680 = vpack.c.b16 %v2296, %v2292
    %v2681 = vpack.c.b16 %v2297, %v2293
    %v2682 = vpack.c.b16 %v2298, %v2294
    %v2683 = vpack.c.b16 %v2299, %v2295
    %v2684 = vpack.c.b16 %v2304, %v2300
    %v2685 = vpack.c.b16 %v2305, %v2301
    %v2686 = vpack.c.b16 %v2306, %v2302
    %v2687 = vpack.c.b16 %v2307, %v2303
    %v2688 = vpack.c.b16 %v2312, %v2308
    %v2689 = vpack.c.b16 %v2313, %v2309
    %v2690 = vpack.c.b16 %v2314, %v2310
    %v2691 = vpack.c.b16 %v2315, %v2311
    %v2692 = vpack.c.b16 %v2320, %v2316
    %v2693 = vpack.c.b16 %v2321, %v2317
    %v2694 = vpack.c.b16 %v2322, %v2318
    %v2695 = vpack.c.b16 %v2323, %v2319
    %v2696 = vpack.c.b16 %v2328, %v2324
    %v2697 = vpack.c.b16 %v2329, %v2325
    %v2698 = vpack.c.b16 %v2330, %v2326
    %v2699 = vpack.c.b16 %v2331, %v2327
    %v2700 = vpack.c.b16 %v2336, %v2332
    %v2701 = vpack.c.b16 %v2337, %v2333
    %v2702 = vpack.c.b16 %v2338, %v2334
    %v2703 = vpack.c.b16 %v2339, %v2335
    %v2704 = vpack.c.b16 %v2344, %v2340
    %v2705 = vpack.c.b16 %v2345, %v2341
    %v2706 = vpack.c.b16 %v2346, %v2342
    %v2707 = vpack.c.b16 %v2347, %v2343
    %v2708 = vpack.c.b16 %v2352, %v2348
    %v2709 = vpack.c.b16 %v2353, %v2349
    %v2710 = vpack.c.b16 %v2354, %v2350
    %v2711 = vpack.c.b16 %v2355, %v2351
    %v2712 = vpack.c.b16 %v2360, %v2356
    %v2713 = vpack.c.b16 %v2361, %v2357
    %v2714 = vpack.c.b16 %v2362, %v2358
    %v2715 = vpack.c.b16 %v2363, %v2359
    %v2716 = vpack.c.b16 %v2368, %v2364
    %v2717 = vpack.c.b16 %v2369, %v2365
    %v2718 = vpack.c.b16 %v2370, %v2366
    %v2719 = vpack.c.b16 %v2371, %v2367
    %v2720 = vpack.c.b16 %v2376, %v2372
    %v2721 = vpack.c.b16 %v2377, %v2373
    %v2722 = vpack.c.b16 %v2378, %v2374
    %v2723 = vpack.c.b16 %v2379, %v2375
    %v2724 = vpack.c.b16 %v2384, %v2380
    %v2725 = vpack.c.b16 %v2385, %v2381
    %v2726 = vpack.c.b16 %v2386, %v2382
    %v2727 = vpack.c.b16 %v2387, %v2383
    %v2728 = vpack.c.b16 %v2392, %v2388
    %v2729 = vpack.c.b16 %v2393, %v2389
    %v2730 = vpack.c.b16 %v2394, %v2390
    %v2731 = vpack.c.b16 %v2395, %v2391
    %v2732 = vpack.c.b16 %v2400, %v2396
    %v2733 = vpack.c.b16 %v2401, %v2397
    %v2734 = vpack.c.b16 %v2402, %v2398
    %v2735 = vpack.c.b16 %v2403, %v2399
    %v2736 = vpack.c.b16 %v2408, %v2404
    %v2737 = vpack.c.b16 %v2409, %v2405
    %v2738 = vpack.c.b16 %v2410, %v2406
    %v2739 = vpack.c.b16 %v2411, %v2407
    %v2740 = vpack.c.b16 %v2416, %v2412
    %v2741 = vpack.c.b16 %v2417, %v2413
    %v2742 = vpack.c.b16 %v2418, %v2414
    %v2743 = vpack.c.b16 %v2419, %v2415
    %v2744 = vpack.c.b16 %v2424, %v2420
    %v2745 = vpack.c.b16 %v2425, %v2421
    %v2746 = vpack.c.b16 %v2426, %v2422
    %v2747 = vpack.c.b16 %v2427, %v2423
    %v2748 = vpack.c.b16 %v2432, %v2428
    %v2749 = vpack.c.b16 %v2433, %v2429
    %v2750 = vpack.c.b16 %v2434, %v2430
    %v2751 = vpack.c.b16 %v2435, %v2431
    %v2752 = vpack.c.b16 %v2440, %v2436
    %v2753 = vpack.c.b16 %v2441, %v2437
    %v2754 = vpack.c.b16 %v2442, %v2438
    %v2755 = vpack.c.b16 %v2443, %v2439
    %v2756 = vpack.c.b16 %v2448, %v2444
    %v2757 = vpack.c.b16 %v2449, %v2445
    %v2758 = vpack.c.b16 %v2450, %v2446
    %v2759 = vpack.c.b16 %v2451, %v2447
    %v2760 = vpack.c.b16 %v2456, %v2452
    %v2761 = vpack.c.b16 %v2457, %v2453
    %v2762 = vpack.c.b16 %v2458, %v2454
    %v2763 = vpack.c.b16 %v2459, %v2455
    %v2764 = vpack.c.b16 %v2464, %v2460
    %v2765 = vpack.c.b16 %v2465, %v2461
    %v2766 = vpack.c.b16 %v2466, %v2462
    %v2767 = vpack.c.b16 %v2467, %v2463
    %v2768 = vpack.c.b16 %v2472, %v2468
    %v2769 = vpack.c.b16 %v2473, %v2469
    %v2770 = vpack.c.b16 %v2474, %v2470
    %v2771 = vpack.c.b16 %v2475, %v2471
    %v2772 = vpack.c.b16 %v2480, %v2476
    %v2773 = vpack.c.b16 %v2481, %v2477
    %v2774 = vpack.c.b16 %v2482, %v2478
    %v2775 = vpack.c.b16 %v2483, %v2479
    %v2776 = vpack.c.b16 %v2488, %v2484
    %v2777 = vpack.c.b16 %v2489, %v2485
    %v2778 = vpack.c.b16 %v2490, %v2486
    %v2779 = vpack.c.b16 %v2491, %v2487
    %v2780 = vpack.c.b16 %v2496, %v2492
    %v2781 = vpack.c.b16 %v2497, %v2493
    %v2782 = vpack.c.b16 %v2498, %v2494
    %v2783 = vpack.c.b16 %v2499, %v2495
    %v2784 = vpack.c.b16 %v2504, %v2500
    %v2785 = vpack.c.b16 %v2505, %v2501
    %v2786 = vpack.c.b16 %v2506, %v2502
    %v2787 = vpack.c.b16 %v2507, %v2503
    %v2788 = vpack.c.b16 %v2512, %v2508
    %v2789 = vpack.c.b16 %v2513, %v2509
    %v2790 = vpack.c.b16 %v2514, %v2510
    %v2791 = vpack.c.b16 %v2515, %v2511
    %v2792 = vpack.c.b16 %v2520, %v2516
    %v2793 = vpack.c.b16 %v2521, %v2517
    %v2794 = vpack.c.b16 %v2522, %v2518
    %v2795 = vpack.c.b16 %v2523, %v2519
    %v2796 = vpack.c.b16 %v2528, %v2524
    %v2797 = vpack.c.b16 %v2529, %v2525
    %v2798 = vpack.c.b16 %v2530, %v2526
    %v2799 = vpack.c.b16 %v2531, %v2527
    %v2800 = vpack.c.b16 %v2536, %v2532
    %v2801 = vpack.c.b16 %v2537, %v2533
    %v2802 = vpack.c.b16 %v2538, %v2534
    %v2803 = vpack.c.b16 %v2539, %v2535
    %v2804 = vpack.c.b16 %v2544, %v2540
    %v2805 = vpack.c.b16 %v2545, %v2541
    %v2806 = vpack.c.b16 %v2546, %v2542
    %v2807 = vpack.c.b16 %v2547, %v2543
    %v2808 = vpack.c.b16 %v2552, %v2548
    %v2809 = vpack.c.b16 %v2553, %v2549
    %v2810 = vpack.c.b16 %v2554, %v2550
    %v2811 = vpack.c.b16 %v2555, %v2551
    %3068 = vmatprep.subr.bf16.mxu0 %v2557
    %3069 = vmatpush1.bf16.msra.mxu0 %v2556
    %3070 = vmatprep.subr.bf16.mxu0 %v2561
    %3071 = vmatpush1.bf16.msra.mxu0 %v2560
    %3072 = vmatprep.subr.bf16.mxu0 %v2565
    %3073 = vmatpush1.bf16.msra.mxu0 %v2564
    %3074 = vmatprep.subr.bf16.mxu0 %v2569
    %3075 = vmatpush1.bf16.msra.mxu0 %v2568
    %3076 = vmatprep.subr.bf16.mxu0 %v2573
    %3077 = vmatpush1.bf16.msra.mxu0 %v2572
    %3078 = vmatprep.subr.bf16.mxu0 %v2577
    %3079 = vmatpush1.bf16.msra.mxu0 %v2576
    %3080 = vmatprep.subr.bf16.mxu0 %v2581
    %3081 = vmatpush1.bf16.msra.mxu0 %v2580
    %3082 = vmatprep.subr.bf16.mxu0 %v2585
    %3083 = vmatpush1.bf16.msra.mxu0 %v2584
    %3084 = vmatprep.subr.bf16.mxu0 %v2589
    %3085 = vmatpush1.bf16.msra.mxu0 %v2588
    %3086 = vmatprep.subr.bf16.mxu0 %v2593
    %3087 = vmatpush1.bf16.msra.mxu0 %v2592
    %3088 = vmatprep.subr.bf16.mxu0 %v2597
    %3089 = vmatpush1.bf16.msra.mxu0 %v2596
    %3090 = vmatprep.subr.bf16.mxu0 %v2601
    %3091 = vmatpush1.bf16.msra.mxu0 %v2600
    %3092 = vmatprep.subr.bf16.mxu0 %v2605
    %3093 = vmatpush1.bf16.msra.mxu0 %v2604
    %3094 = vmatprep.subr.bf16.mxu0 %v2609
    %3095 = vmatpush1.bf16.msra.mxu0 %v2608
    %3096 = vmatprep.subr.bf16.mxu0 %v2613
    %3097 = vmatpush1.bf16.msra.mxu0 %v2612
    %3098 = vmatprep.subr.bf16.mxu0 %v2617
    %3099 = vmatpush1.bf16.msra.mxu0 %v2616
    %3100 = vmatprep.mubr.bf16.mxu0 %v1383
    %3101 = vmatmul.mubr.bf16.gmra.mrb[0].mxu0 %v1382
    %v3102 = vpop.f32.mrb[0].mxu0
    %v3103 = vadd.f32 %v1771, %v3102
    %v3104 = vpop.f32.mrb[0].mxu0
    %v3105 = vadd.f32 %v1775, %v3104
    %v3106 = vpop.f32.mrb[0].mxu0
    %v3107 = vadd.f32 %v1771, %v3106
    %v3108 = vpop.f32.mrb[0].mxu0
    %v3109 = vadd.f32 %v1775, %v3108
    %3110 = vmatprep.mubr.bf16.mxu0 %v1391
    %3111 = vmatmul.mubr.bf16.gmra.mrb[0].mxu0 %v1390
    %v3112 = vpop.f32.mrb[0].mxu0
    %v3113 = vadd.f32 %v1771, %v3112
    %v3114 = vpop.f32.mrb[0].mxu0
    %v3115 = vadd.f32 %v1775, %v3114
    %v3116 = vpop.f32.mrb[0].mxu0
    %v3117 = vadd.f32 %v1771, %v3116
    %v3118 = vpop.f32.mrb[0].mxu0
    %v3119 = vadd.f32 %v1775, %v3118
    %3120 = vmatprep.mubr.bf16.mxu0 %v1399
    %3121 = vmatmul.mubr.bf16.gmra.mrb[0].mxu0 %v1398
    %v3122 = vpop.f32.mrb[0].mxu0
    %v3123 = vadd.f32 %v1771, %v3122
    %v3124 = vpop.f32.mrb[0].mxu0
    %v3125 = vadd.f32 %v1775, %v3124
    %v3126 = vpop.f32.mrb[0].mxu0
    %v3127 = vadd.f32 %v1771, %v3126
    %v3128 = vpop.f32.mrb[0].mxu0
    %v3129 = vadd.f32 %v1775, %v3128
    %3130 = vmatprep.mubr.bf16.mxu0 %v1407
    %3131 = vmatmul.mubr.bf16.gmra.mrb[0].mxu0 %v1406
    %v3132 = vpop.f32.mrb[0].mxu0
    %v3133 = vadd.f32 %v1771, %v3132
    %v3134 = vpop.f32.mrb[0].mxu0
    %v3135 = vadd.f32 %v1775, %v3134
    %v3136 = vpop.f32.mrb[0].mxu0
    %v3137 = vadd.f32 %v1771, %v3136
    %v3138 = vpop.f32.mrb[0].mxu0
    %v3139 = vadd.f32 %v1775, %v3138
    %3140 = vmatprep.mubr.bf16.mxu0 %v1415
    %3141 = vmatmul.mubr.bf16.gmra.mrb[0].mxu0 %v1414
    %v3142 = vpop.f32.mrb[0].mxu0
    %v3143 = vadd.f32 %v1771, %v3142
    %v3144 = vpop.f32.mrb[0].mxu0
    %v3145 = vadd.f32 %v1775, %v3144
    %v3146 = vpop.f32.mrb[0].mxu0
    %v3147 = vadd.f32 %v1771, %v3146
    %v3148 = vpop.f32.mrb[0].mxu0
    %v3149 = vadd.f32 %v1775, %v3148
    %3150 = vmatprep.mubr.bf16.mxu0 %v1423
    %3151 = vmatmul.mubr.bf16.gmra.mrb[0].mxu0 %v1422
    %v3152 = vpop.f32.mrb[0].mxu0
    %v3153 = vadd.f32 %v1771, %v3152
    %v3154 = vpop.f32.mrb[0].mxu0
    %v3155 = vadd.f32 %v1775, %v3154
    %v3156 = vpop.f32.mrb[0].mxu0
    %v3157 = vadd.f32 %v1771, %v3156
    %v3158 = vpop.f32.mrb[0].mxu0
    %v3159 = vadd.f32 %v1775, %v3158
    %3160 = vmatprep.mubr.bf16.mxu0 %v1431
    %3161 = vmatmul.mubr.bf16.gmra.mrb[0].mxu0 %v1430
    %v3162 = vpop.f32.mrb[0].mxu0
    %v3163 = vadd.f32 %v1771, %v3162
    %v3164 = vpop.f32.mrb[0].mxu0
    %v3165 = vadd.f32 %v1775, %v3164
    %v3166 = vpop.f32.mrb[0].mxu0
    %v3167 = vadd.f32 %v1771, %v3166
    %v3168 = vpop.f32.mrb[0].mxu0
    %v3169 = vadd.f32 %v1775, %v3168
    %3170 = vmatprep.mubr.bf16.mxu0 %v1439
    %3171 = vmatmul.mubr.bf16.gmra.mrb[0].mxu0 %v1438
    %v3172 = vpop.f32.mrb[0].mxu0
    %v3173 = vadd.f32 %v1771, %v3172
    %v3174 = vpop.f32.mrb[0].mxu0
    %v3175 = vadd.f32 %v1775, %v3174
    %v3176 = vpop.f32.mrb[0].mxu0
    %v3177 = vadd.f32 %v1771, %v3176
    %v3178 = vpop.f32.mrb[0].mxu0
    %v3179 = vadd.f32 %v1775, %v3178
    %3180 = vmatprep.mubr.bf16.mxu0 %v1447
    %3181 = vmatmul.mubr.bf16.gmra.mrb[0].mxu0 %v1446
    %v3182 = vpop.f32.mrb[0].mxu0
    %v3183 = vadd.f32 %v1771, %v3182
    %v3184 = vpop.f32.mrb[0].mxu0
    %v3185 = vadd.f32 %v1775, %v3184
    %v3186 = vpop.f32.mrb[0].mxu0
    %v3187 = vadd.f32 %v1771, %v3186
    %v3188 = vpop.f32.mrb[0].mxu0
    %v3189 = vadd.f32 %v1775, %v3188
    %3190 = vmatprep.mubr.bf16.mxu0 %v1455
    %3191 = vmatmul.mubr.bf16.gmra.mrb[0].mxu0 %v1454
    %v3192 = vpop.f32.mrb[0].mxu0
    %v3193 = vadd.f32 %v1771, %v3192
    %v3194 = vpop.f32.mrb[0].mxu0
    %v3195 = vadd.f32 %v1775, %v3194
    %v3196 = vpop.f32.mrb[0].mxu0
    %v3197 = vadd.f32 %v1771, %v3196
    %v3198 = vpop.f32.mrb[0].mxu0
    %v3199 = vadd.f32 %v1775, %v3198
    %3200 = vmatprep.mubr.bf16.mxu0 %v1463
    %3201 = vmatmul.mubr.bf16.gmra.mrb[0].mxu0 %v1462
    %v3202 = vpop.f32.mrb[0].mxu0
    %v3203 = vadd.f32 %v1771, %v3202
    %v3204 = vpop.f32.mrb[0].mxu0
    %v3205 = vadd.f32 %v1775, %v3204
    %v3206 = vpop.f32.mrb[0].mxu0
    %v3207 = vadd.f32 %v1771, %v3206
    %v3208 = vpop.f32.mrb[0].mxu0
    %v3209 = vadd.f32 %v1775, %v3208
    %3210 = vmatprep.mubr.bf16.mxu0 %v1471
    %3211 = vmatmul.mubr.bf16.gmra.mrb[0].mxu0 %v1470
    %v3212 = vpop.f32.mrb[0].mxu0
    %v3213 = vadd.f32 %v1771, %v3212
    %v3214 = vpop.f32.mrb[0].mxu0
    %v3215 = vadd.f32 %v1775, %v3214
    %v3216 = vpop.f32.mrb[0].mxu0
    %v3217 = vadd.f32 %v1771, %v3216
    %v3218 = vpop.f32.mrb[0].mxu0
    %v3219 = vadd.f32 %v1775, %v3218
    %3220 = vmatprep.mubr.bf16.mxu0 %v1479
    %3221 = vmatmul.mubr.bf16.gmra.mrb[0].mxu0 %v1478
    %v3222 = vpop.f32.mrb[0].mxu0
    %v3223 = vadd.f32 %v1771, %v3222
    %v3224 = vpop.f32.mrb[0].mxu0
    %v3225 = vadd.f32 %v1775, %v3224
    %v3226 = vpop.f32.mrb[0].mxu0
    %v3227 = vadd.f32 %v1771, %v3226
    %v3228 = vpop.f32.mrb[0].mxu0
    %v3229 = vadd.f32 %v1775, %v3228
    %3230 = vmatprep.mubr.bf16.mxu0 %v1487
    %3231 = vmatmul.mubr.bf16.gmra.mrb[0].mxu0 %v1486
    %v3232 = vpop.f32.mrb[0].mxu0
    %v3233 = vadd.f32 %v1771, %v3232
    %v3234 = vpop.f32.mrb[0].mxu0
    %v3235 = vadd.f32 %v1775, %v3234
    %v3236 = vpop.f32.mrb[0].mxu0
    %v3237 = vadd.f32 %v1771, %v3236
    %v3238 = vpop.f32.mrb[0].mxu0
    %v3239 = vadd.f32 %v1775, %v3238
    %3240 = vmatprep.mubr.bf16.mxu0 %v1495
    %3241 = vmatmul.mubr.bf16.gmra.mrb[0].mxu0 %v1494
    %v3242 = vpop.f32.mrb[0].mxu0
    %v3243 = vadd.f32 %v1771, %v3242
    %v3244 = vpop.f32.mrb[0].mxu0
    %v3245 = vadd.f32 %v1775, %v3244
    %v3246 = vpop.f32.mrb[0].mxu0
    %v3247 = vadd.f32 %v1771, %v3246
    %v3248 = vpop.f32.mrb[0].mxu0
    %v3249 = vadd.f32 %v1775, %v3248
    %3250 = vmatprep.mubr.bf16.mxu0 %v1503
    %3251 = vmatmul.mubr.bf16.gmra.mrb[0].mxu0 %v1502
    %v3252 = vpop.f32.mrb[0].mxu0
    %v3253 = vadd.f32 %v1771, %v3252
    %v3254 = vpop.f32.mrb[0].mxu0
    %v3255 = vadd.f32 %v1775, %v3254
    %v3256 = vpop.f32.mrb[0].mxu0
    %v3257 = vadd.f32 %v1771, %v3256
    %v3258 = vpop.f32.mrb[0].mxu0
    %v3259 = vadd.f32 %v1775, %v3258
    %3260 = vdwg.mxu0
    %3261 = vmatprep.subr.bf16.mxu0 %v2621
    %3262 = vmatpush1.bf16.msra.mxu0 %v2620
    %3263 = vmatprep.subr.bf16.mxu0 %v2625
    %3264 = vmatpush1.bf16.msra.mxu0 %v2624
    %3265 = vmatprep.subr.bf16.mxu0 %v2629
    %3266 = vmatpush1.bf16.msra.mxu0 %v2628
    %3267 = vmatprep.subr.bf16.mxu0 %v2633
    %3268 = vmatpush1.bf16.msra.mxu0 %v2632
    %3269 = vmatprep.subr.bf16.mxu0 %v2637
    %3270 = vmatpush1.bf16.msra.mxu0 %v2636
    %3271 = vmatprep.subr.bf16.mxu0 %v2641
    %3272 = vmatpush1.bf16.msra.mxu0 %v2640
    %3273 = vmatprep.subr.bf16.mxu0 %v2645
    %3274 = vmatpush1.bf16.msra.mxu0 %v2644
    %3275 = vmatprep.subr.bf16.mxu0 %v2649
    %3276 = vmatpush1.bf16.msra.mxu0 %v2648
    %3277 = vmatprep.subr.bf16.mxu0 %v2653
    %3278 = vmatpush1.bf16.msra.mxu0 %v2652
    %3279 = vmatprep.subr.bf16.mxu0 %v2657
    %3280 = vmatpush1.bf16.msra.mxu0 %v2656
    %3281 = vmatprep.subr.bf16.mxu0 %v2661
    %3282 = vmatpush1.bf16.msra.mxu0 %v2660
    %3283 = vmatprep.subr.bf16.mxu0 %v2665
    %3284 = vmatpush1.bf16.msra.mxu0 %v2664
    %3285 = vmatprep.subr.bf16.mxu0 %v2669
    %3286 = vmatpush1.bf16.msra.mxu0 %v2668
    %3287 = vmatprep.subr.bf16.mxu0 %v2673
    %3288 = vmatpush1.bf16.msra.mxu0 %v2672
    %3289 = vmatprep.subr.bf16.mxu0 %v2677
    %3290 = vmatpush1.bf16.msra.mxu0 %v2676
    %3291 = vmatprep.subr.bf16.mxu0 %v2681
    %3292 = vmatpush1.bf16.msra.mxu0 %v2680
    %3293 = vmatprep.mubr.bf16.mxu0 %v1385
    %3294 = vmatmul.mubr.bf16.gmra.mrb[0].mxu0 %v1384
    %v3295 = vpop.f32.mrb[0].mxu0
    %v3296 = vadd.f32 %v3103, %v3295
    %v3297 = vpop.f32.mrb[0].mxu0
    %v3298 = vadd.f32 %v3105, %v3297
    %v3299 = vpop.f32.mrb[0].mxu0
    %v3300 = vadd.f32 %v3107, %v3299
    %v3301 = vpop.f32.mrb[0].mxu0
    %v3302 = vadd.f32 %v3109, %v3301
    %3303 = vmatprep.mubr.bf16.mxu0 %v1393
    %3304 = vmatmul.mubr.bf16.gmra.mrb[0].mxu0 %v1392
    %v3305 = vpop.f32.mrb[0].mxu0
    %v3306 = vadd.f32 %v3113, %v3305
    %v3307 = vpop.f32.mrb[0].mxu0
    %v3308 = vadd.f32 %v3115, %v3307
    %v3309 = vpop.f32.mrb[0].mxu0
    %v3310 = vadd.f32 %v3117, %v3309
    %v3311 = vpop.f32.mrb[0].mxu0
    %v3312 = vadd.f32 %v3119, %v3311
    %3313 = vmatprep.mubr.bf16.mxu0 %v1401
    %3314 = vmatmul.mubr.bf16.gmra.mrb[0].mxu0 %v1400
    %v3315 = vpop.f32.mrb[0].mxu0
    %v3316 = vadd.f32 %v3123, %v3315
    %v3317 = vpop.f32.mrb[0].mxu0
    %v3318 = vadd.f32 %v3125, %v3317
    %v3319 = vpop.f32.mrb[0].mxu0
    %v3320 = vadd.f32 %v3127, %v3319
    %v3321 = vpop.f32.mrb[0].mxu0
    %v3322 = vadd.f32 %v3129, %v3321
    %3323 = vmatprep.mubr.bf16.mxu0 %v1409
    %3324 = vmatmul.mubr.bf16.gmra.mrb[0].mxu0 %v1408
    %v3325 = vpop.f32.mrb[0].mxu0
    %v3326 = vadd.f32 %v3133, %v3325
    %v3327 = vpop.f32.mrb[0].mxu0
    %v3328 = vadd.f32 %v3135, %v3327
    %v3329 = vpop.f32.mrb[0].mxu0
    %v3330 = vadd.f32 %v3137, %v3329
    %v3331 = vpop.f32.mrb[0].mxu0
    %v3332 = vadd.f32 %v3139, %v3331
    %3333 = vmatprep.mubr.bf16.mxu0 %v1417
    %3334 = vmatmul.mubr.bf16.gmra.mrb[0].mxu0 %v1416
    %v3335 = vpop.f32.mrb[0].mxu0
    %v3336 = vadd.f32 %v3143, %v3335
    %v3337 = vpop.f32.mrb[0].mxu0
    %v3338 = vadd.f32 %v3145, %v3337
    %v3339 = vpop.f32.mrb[0].mxu0
    %v3340 = vadd.f32 %v3147, %v3339
    %v3341 = vpop.f32.mrb[0].mxu0
    %v3342 = vadd.f32 %v3149, %v3341
    %3343 = vmatprep.mubr.bf16.mxu0 %v1425
    %3344 = vmatmul.mubr.bf16.gmra.mrb[0].mxu0 %v1424
    %v3345 = vpop.f32.mrb[0].mxu0
    %v3346 = vadd.f32 %v3153, %v3345
    %v3347 = vpop.f32.mrb[0].mxu0
    %v3348 = vadd.f32 %v3155, %v3347
    %v3349 = vpop.f32.mrb[0].mxu0
    %v3350 = vadd.f32 %v3157, %v3349
    %v3351 = vpop.f32.mrb[0].mxu0
    %v3352 = vadd.f32 %v3159, %v3351
    %3353 = vmatprep.mubr.bf16.mxu0 %v1433
    %3354 = vmatmul.mubr.bf16.gmra.mrb[0].mxu0 %v1432
    %v3355 = vpop.f32.mrb[0].mxu0
    %v3356 = vadd.f32 %v3163, %v3355
    %v3357 = vpop.f32.mrb[0].mxu0
    %v3358 = vadd.f32 %v3165, %v3357
    %v3359 = vpop.f32.mrb[0].mxu0
    %v3360 = vadd.f32 %v3167, %v3359
    %v3361 = vpop.f32.mrb[0].mxu0
    %v3362 = vadd.f32 %v3169, %v3361
    %3363 = vmatprep.mubr.bf16.mxu0 %v1441
    %3364 = vmatmul.mubr.bf16.gmra.mrb[0].mxu0 %v1440
    %v3365 = vpop.f32.mrb[0].mxu0
    %v3366 = vadd.f32 %v3173, %v3365
    %v3367 = vpop.f32.mrb[0].mxu0
    %v3368 = vadd.f32 %v3175, %v3367
    %v3369 = vpop.f32.mrb[0].mxu0
    %v3370 = vadd.f32 %v3177, %v3369
    %v3371 = vpop.f32.mrb[0].mxu0
    %v3372 = vadd.f32 %v3179, %v3371
    %3373 = vmatprep.mubr.bf16.mxu0 %v1449
    %3374 = vmatmul.mubr.bf16.gmra.mrb[0].mxu0 %v1448
    %v3375 = vpop.f32.mrb[0].mxu0
    %v3376 = vadd.f32 %v3183, %v3375
    %v3377 = vpop.f32.mrb[0].mxu0
    %v3378 = vadd.f32 %v3185, %v3377
    %v3379 = vpop.f32.mrb[0].mxu0
    %v3380 = vadd.f32 %v3187, %v3379
    %v3381 = vpop.f32.mrb[0].mxu0
    %v3382 = vadd.f32 %v3189, %v3381
    %3383 = vmatprep.mubr.bf16.mxu0 %v1457
    %3384 = vmatmul.mubr.bf16.gmra.mrb[0].mxu0 %v1456
    %v3385 = vpop.f32.mrb[0].mxu0
    %v3386 = vadd.f32 %v3193, %v3385
    %v3387 = vpop.f32.mrb[0].mxu0
    %v3388 = vadd.f32 %v3195, %v3387
    %v3389 = vpop.f32.mrb[0].mxu0
    %v3390 = vadd.f32 %v3197, %v3389
    %v3391 = vpop.f32.mrb[0].mxu0
    %v3392 = vadd.f32 %v3199, %v3391
    %3393 = vmatprep.mubr.bf16.mxu0 %v1465
    %3394 = vmatmul.mubr.bf16.gmra.mrb[0].mxu0 %v1464
    %v3395 = vpop.f32.mrb[0].mxu0
    %v3396 = vadd.f32 %v3203, %v3395
    %v3397 = vpop.f32.mrb[0].mxu0
    %v3398 = vadd.f32 %v3205, %v3397
    %v3399 = vpop.f32.mrb[0].mxu0
    %v3400 = vadd.f32 %v3207, %v3399
    %v3401 = vpop.f32.mrb[0].mxu0
    %v3402 = vadd.f32 %v3209, %v3401
    %3403 = vmatprep.mubr.bf16.mxu0 %v1473
    %3404 = vmatmul.mubr.bf16.gmra.mrb[0].mxu0 %v1472
    %v3405 = vpop.f32.mrb[0].mxu0
    %v3406 = vadd.f32 %v3213, %v3405
    %v3407 = vpop.f32.mrb[0].mxu0
    %v3408 = vadd.f32 %v3215, %v3407
    %v3409 = vpop.f32.mrb[0].mxu0
    %v3410 = vadd.f32 %v3217, %v3409
    %v3411 = vpop.f32.mrb[0].mxu0
    %v3412 = vadd.f32 %v3219, %v3411
    %3413 = vmatprep.mubr.bf16.mxu0 %v1481
    %3414 = vmatmul.mubr.bf16.gmra.mrb[0].mxu0 %v1480
    %v3415 = vpop.f32.mrb[0].mxu0
    %v3416 = vadd.f32 %v3223, %v3415
    %v3417 = vpop.f32.mrb[0].mxu0
    %v3418 = vadd.f32 %v3225, %v3417
    %v3419 = vpop.f32.mrb[0].mxu0
    %v3420 = vadd.f32 %v3227, %v3419
    %v3421 = vpop.f32.mrb[0].mxu0
    %v3422 = vadd.f32 %v3229, %v3421
    %3423 = vmatprep.mubr.bf16.mxu0 %v1489
    %3424 = vmatmul.mubr.bf16.gmra.mrb[0].mxu0 %v1488
    %v3425 = vpop.f32.mrb[0].mxu0
    %v3426 = vadd.f32 %v3233, %v3425
    %v3427 = vpop.f32.mrb[0].mxu0
    %v3428 = vadd.f32 %v3235, %v3427
    %v3429 = vpop.f32.mrb[0].mxu0
    %v3430 = vadd.f32 %v3237, %v3429
    %v3431 = vpop.f32.mrb[0].mxu0
    %v3432 = vadd.f32 %v3239, %v3431
    %3433 = vmatprep.mubr.bf16.mxu0 %v1497
    %3434 = vmatmul.mubr.bf16.gmra.mrb[0].mxu0 %v1496
    %v3435 = vpop.f32.mrb[0].mxu0
    %v3436 = vadd.f32 %v3243, %v3435
    %v3437 = vpop.f32.mrb[0].mxu0
    %v3438 = vadd.f32 %v3245, %v3437
    %v3439 = vpop.f32.mrb[0].mxu0
    %v3440 = vadd.f32 %v3247, %v3439
    %v3441 = vpop.f32.mrb[0].mxu0
    %v3442 = vadd.f32 %v3249, %v3441
    %3443 = vmatprep.mubr.bf16.mxu0 %v1505
    %3444 = vmatmul.mubr.bf16.gmra.mrb[0].mxu0 %v1504
    %v3445 = vpop.f32.mrb[0].mxu0
    %v3446 = vadd.f32 %v3253, %v3445
    %v3447 = vpop.f32.mrb[0].mxu0
    %v3448 = vadd.f32 %v3255, %v3447
    %v3449 = vpop.f32.mrb[0].mxu0
    %v3450 = vadd.f32 %v3257, %v3449
    %v3451 = vpop.f32.mrb[0].mxu0
    %v3452 = vadd.f32 %v3259, %v3451
    %3453 = vdwg.mxu0
    %3454 = vmatprep.subr.bf16.mxu0 %v2685
    %3455 = vmatpush1.bf16.msra.mxu0 %v2684
    %3456 = vmatprep.subr.bf16.mxu0 %v2689
    %3457 = vmatpush1.bf16.msra.mxu0 %v2688
    %3458 = vmatprep.subr.bf16.mxu0 %v2693
    %3459 = vmatpush1.bf16.msra.mxu0 %v2692
    %3460 = vmatprep.subr.bf16.mxu0 %v2697
    %3461 = vmatpush1.bf16.msra.mxu0 %v2696
    %3462 = vmatprep.subr.bf16.mxu0 %v2701
    %3463 = vmatpush1.bf16.msra.mxu0 %v2700
    %3464 = vmatprep.subr.bf16.mxu0 %v2705
    %3465 = vmatpush1.bf16.msra.mxu0 %v2704
    %3466 = vmatprep.subr.bf16.mxu0 %v2709
    %3467 = vmatpush1.bf16.msra.mxu0 %v2708
    %3468 = vmatprep.subr.bf16.mxu0 %v2713
    %3469 = vmatpush1.bf16.msra.mxu0 %v2712
    %3470 = vmatprep.subr.bf16.mxu0 %v2717
    %3471 = vmatpush1.bf16.msra.mxu0 %v2716
    %3472 = vmatprep.subr.bf16.mxu0 %v2721
    %3473 = vmatpush1.bf16.msra.mxu0 %v2720
    %3474 = vmatprep.subr.bf16.mxu0 %v2725
    %3475 = vmatpush1.bf16.msra.mxu0 %v2724
    %3476 = vmatprep.subr.bf16.mxu0 %v2729
    %3477 = vmatpush1.bf16.msra.mxu0 %v2728
    %3478 = vmatprep.subr.bf16.mxu0 %v2733
    %3479 = vmatpush1.bf16.msra.mxu0 %v2732
    %3480 = vmatprep.subr.bf16.mxu0 %v2737
    %3481 = vmatpush1.bf16.msra.mxu0 %v2736
    %3482 = vmatprep.subr.bf16.mxu0 %v2741
    %3483 = vmatpush1.bf16.msra.mxu0 %v2740
    %3484 = vmatprep.subr.bf16.mxu0 %v2745
    %3485 = vmatpush1.bf16.msra.mxu0 %v2744
    %3486 = vmatprep.mubr.bf16.mxu0 %v1387
    %3487 = vmatmul.mubr.bf16.gmra.mrb[0].mxu0 %v1386
    %v3488 = vpop.f32.mrb[0].mxu0
    %v3489 = vadd.f32 %v3296, %v3488
    %v3490 = vpop.f32.mrb[0].mxu0
    %v3491 = vadd.f32 %v3298, %v3490
    %v3492 = vpop.f32.mrb[0].mxu0
    %v3493 = vadd.f32 %v3300, %v3492
    %v3494 = vpop.f32.mrb[0].mxu0
    %v3495 = vadd.f32 %v3302, %v3494
    %3496 = vmatprep.mubr.bf16.mxu0 %v1395
    %3497 = vmatmul.mubr.bf16.gmra.mrb[0].mxu0 %v1394
    %v3498 = vpop.f32.mrb[0].mxu0
    %v3499 = vadd.f32 %v3306, %v3498
    %v3500 = vpop.f32.mrb[0].mxu0
    %v3501 = vadd.f32 %v3308, %v3500
    %v3502 = vpop.f32.mrb[0].mxu0
    %v3503 = vadd.f32 %v3310, %v3502
    %v3504 = vpop.f32.mrb[0].mxu0
    %v3505 = vadd.f32 %v3312, %v3504
    %3506 = vmatprep.mubr.bf16.mxu0 %v1403
    %3507 = vmatmul.mubr.bf16.gmra.mrb[0].mxu0 %v1402
    %v3508 = vpop.f32.mrb[0].mxu0
    %v3509 = vadd.f32 %v3316, %v3508
    %v3510 = vpop.f32.mrb[0].mxu0
    %v3511 = vadd.f32 %v3318, %v3510
    %v3512 = vpop.f32.mrb[0].mxu0
    %v3513 = vadd.f32 %v3320, %v3512
    %v3514 = vpop.f32.mrb[0].mxu0
    %v3515 = vadd.f32 %v3322, %v3514
    %3516 = vmatprep.mubr.bf16.mxu0 %v1411
    %3517 = vmatmul.mubr.bf16.gmra.mrb[0].mxu0 %v1410
    %v3518 = vpop.f32.mrb[0].mxu0
    %v3519 = vadd.f32 %v3326, %v3518
    %v3520 = vpop.f32.mrb[0].mxu0
    %v3521 = vadd.f32 %v3328, %v3520
    %v3522 = vpop.f32.mrb[0].mxu0
    %v3523 = vadd.f32 %v3330, %v3522
    %v3524 = vpop.f32.mrb[0].mxu0
    %v3525 = vadd.f32 %v3332, %v3524
    %3526 = vmatprep.mubr.bf16.mxu0 %v1419
    %3527 = vmatmul.mubr.bf16.gmra.mrb[0].mxu0 %v1418
    %v3528 = vpop.f32.mrb[0].mxu0
    %v3529 = vadd.f32 %v3336, %v3528
    %v3530 = vpop.f32.mrb[0].mxu0
    %v3531 = vadd.f32 %v3338, %v3530
    %v3532 = vpop.f32.mrb[0].mxu0
    %v3533 = vadd.f32 %v3340, %v3532
    %v3534 = vpop.f32.mrb[0].mxu0
    %v3535 = vadd.f32 %v3342, %v3534
    %3536 = vmatprep.mubr.bf16.mxu0 %v1427
    %3537 = vmatmul.mubr.bf16.gmra.mrb[0].mxu0 %v1426
    %v3538 = vpop.f32.mrb[0].mxu0
    %v3539 = vadd.f32 %v3346, %v3538
    %v3540 = vpop.f32.mrb[0].mxu0
    %v3541 = vadd.f32 %v3348, %v3540
    %v3542 = vpop.f32.mrb[0].mxu0
    %v3543 = vadd.f32 %v3350, %v3542
    %v3544 = vpop.f32.mrb[0].mxu0
    %v3545 = vadd.f32 %v3352, %v3544
    %3546 = vmatprep.mubr.bf16.mxu0 %v1435
    %3547 = vmatmul.mubr.bf16.gmra.mrb[0].mxu0 %v1434
    %v3548 = vpop.f32.mrb[0].mxu0
    %v3549 = vadd.f32 %v3356, %v3548
    %v3550 = vpop.f32.mrb[0].mxu0
    %v3551 = vadd.f32 %v3358, %v3550
    %v3552 = vpop.f32.mrb[0].mxu0
    %v3553 = vadd.f32 %v3360, %v3552
    %v3554 = vpop.f32.mrb[0].mxu0
    %v3555 = vadd.f32 %v3362, %v3554
    %3556 = vmatprep.mubr.bf16.mxu0 %v1443
    %3557 = vmatmul.mubr.bf16.gmra.mrb[0].mxu0 %v1442
    %v3558 = vpop.f32.mrb[0].mxu0
    %v3559 = vadd.f32 %v3366, %v3558
    %v3560 = vpop.f32.mrb[0].mxu0
    %v3561 = vadd.f32 %v3368, %v3560
    %v3562 = vpop.f32.mrb[0].mxu0
    %v3563 = vadd.f32 %v3370, %v3562
    %v3564 = vpop.f32.mrb[0].mxu0
    %v3565 = vadd.f32 %v3372, %v3564
    %3566 = vmatprep.mubr.bf16.mxu0 %v1451
    %3567 = vmatmul.mubr.bf16.gmra.mrb[0].mxu0 %v1450
    %v3568 = vpop.f32.mrb[0].mxu0
    %v3569 = vadd.f32 %v3376, %v3568
    %v3570 = vpop.f32.mrb[0].mxu0
    %v3571 = vadd.f32 %v3378, %v3570
    %v3572 = vpop.f32.mrb[0].mxu0
    %v3573 = vadd.f32 %v3380, %v3572
    %v3574 = vpop.f32.mrb[0].mxu0
    %v3575 = vadd.f32 %v3382, %v3574
    %3576 = vmatprep.mubr.bf16.mxu0 %v1459
    %3577 = vmatmul.mubr.bf16.gmra.mrb[0].mxu0 %v1458
    %v3578 = vpop.f32.mrb[0].mxu0
    %v3579 = vadd.f32 %v3386, %v3578
    %v3580 = vpop.f32.mrb[0].mxu0
    %v3581 = vadd.f32 %v3388, %v3580
    %v3582 = vpop.f32.mrb[0].mxu0
    %v3583 = vadd.f32 %v3390, %v3582
    %v3584 = vpop.f32.mrb[0].mxu0
    %v3585 = vadd.f32 %v3392, %v3584
    %3586 = vmatprep.mubr.bf16.mxu0 %v1467
    %3587 = vmatmul.mubr.bf16.gmra.mrb[0].mxu0 %v1466
    %v3588 = vpop.f32.mrb[0].mxu0
    %v3589 = vadd.f32 %v3396, %v3588
    %v3590 = vpop.f32.mrb[0].mxu0
    %v3591 = vadd.f32 %v3398, %v3590
    %v3592 = vpop.f32.mrb[0].mxu0
    %v3593 = vadd.f32 %v3400, %v3592
    %v3594 = vpop.f32.mrb[0].mxu0
    %v3595 = vadd.f32 %v3402, %v3594
    %3596 = vmatprep.mubr.bf16.mxu0 %v1475
    %3597 = vmatmul.mubr.bf16.gmra.mrb[0].mxu0 %v1474
    %v3598 = vpop.f32.mrb[0].mxu0
    %v3599 = vadd.f32 %v3406, %v3598
    %v3600 = vpop.f32.mrb[0].mxu0
    %v3601 = vadd.f32 %v3408, %v3600
    %v3602 = vpop.f32.mrb[0].mxu0
    %v3603 = vadd.f32 %v3410, %v3602
    %v3604 = vpop.f32.mrb[0].mxu0
    %v3605 = vadd.f32 %v3412, %v3604
    %3606 = vmatprep.mubr.bf16.mxu0 %v1483
    %3607 = vmatmul.mubr.bf16.gmra.mrb[0].mxu0 %v1482
    %v3608 = vpop.f32.mrb[0].mxu0
    %v3609 = vadd.f32 %v3416, %v3608
    %v3610 = vpop.f32.mrb[0].mxu0
    %v3611 = vadd.f32 %v3418, %v3610
    %v3612 = vpop.f32.mrb[0].mxu0
    %v3613 = vadd.f32 %v3420, %v3612
    %v3614 = vpop.f32.mrb[0].mxu0
    %v3615 = vadd.f32 %v3422, %v3614
    %3616 = vmatprep.mubr.bf16.mxu0 %v1491
    %3617 = vmatmul.mubr.bf16.gmra.mrb[0].mxu0 %v1490
    %v3618 = vpop.f32.mrb[0].mxu0
    %v3619 = vadd.f32 %v3426, %v3618
    %v3620 = vpop.f32.mrb[0].mxu0
    %v3621 = vadd.f32 %v3428, %v3620
    %v3622 = vpop.f32.mrb[0].mxu0
    %v3623 = vadd.f32 %v3430, %v3622
    %v3624 = vpop.f32.mrb[0].mxu0
    %v3625 = vadd.f32 %v3432, %v3624
    %3626 = vmatprep.mubr.bf16.mxu0 %v1499
    %3627 = vmatmul.mubr.bf16.gmra.mrb[0].mxu0 %v1498
    %v3628 = vpop.f32.mrb[0].mxu0
    %v3629 = vadd.f32 %v3436, %v3628
    %v3630 = vpop.f32.mrb[0].mxu0
    %v3631 = vadd.f32 %v3438, %v3630
    %v3632 = vpop.f32.mrb[0].mxu0
    %v3633 = vadd.f32 %v3440, %v3632
    %v3634 = vpop.f32.mrb[0].mxu0
    %v3635 = vadd.f32 %v3442, %v3634
    %3636 = vmatprep.mubr.bf16.mxu0 %v1507
    %3637 = vmatmul.mubr.bf16.gmra.mrb[0].mxu0 %v1506
    %v3638 = vpop.f32.mrb[0].mxu0
    %v3639 = vadd.f32 %v3446, %v3638
    %v3640 = vpop.f32.mrb[0].mxu0
    %v3641 = vadd.f32 %v3448, %v3640
    %v3642 = vpop.f32.mrb[0].mxu0
    %v3643 = vadd.f32 %v3450, %v3642
    %v3644 = vpop.f32.mrb[0].mxu0
    %v3645 = vadd.f32 %v3452, %v3644
    %3646 = vdwg.mxu0
    %3647 = vmatprep.subr.bf16.mxu0 %v2749
    %3648 = vmatpush1.bf16.msra.mxu0 %v2748
    %3649 = vmatprep.subr.bf16.mxu0 %v2753
    %3650 = vmatpush1.bf16.msra.mxu0 %v2752
    %3651 = vmatprep.subr.bf16.mxu0 %v2757
    %3652 = vmatpush1.bf16.msra.mxu0 %v2756
    %3653 = vmatprep.subr.bf16.mxu0 %v2761
    %3654 = vmatpush1.bf16.msra.mxu0 %v2760
    %3655 = vmatprep.subr.bf16.mxu0 %v2765
    %3656 = vmatpush1.bf16.msra.mxu0 %v2764
    %3657 = vmatprep.subr.bf16.mxu0 %v2769
    %3658 = vmatpush1.bf16.msra.mxu0 %v2768
    %3659 = vmatprep.subr.bf16.mxu0 %v2773
    %3660 = vmatpush1.bf16.msra.mxu0 %v2772
    %3661 = vmatprep.subr.bf16.mxu0 %v2777
    %3662 = vmatpush1.bf16.msra.mxu0 %v2776
    %3663 = vmatprep.subr.bf16.mxu0 %v2781
    %3664 = vmatpush1.bf16.msra.mxu0 %v2780
    %3665 = vmatprep.subr.bf16.mxu0 %v2785
    %3666 = vmatpush1.bf16.msra.mxu0 %v2784
    %3667 = vmatprep.subr.bf16.mxu0 %v2789
    %3668 = vmatpush1.bf16.msra.mxu0 %v2788
    %3669 = vmatprep.subr.bf16.mxu0 %v2793
    %3670 = vmatpush1.bf16.msra.mxu0 %v2792
    %3671 = vmatprep.subr.bf16.mxu0 %v2797
    %3672 = vmatpush1.bf16.msra.mxu0 %v2796
    %3673 = vmatprep.subr.bf16.mxu0 %v2801
    %3674 = vmatpush1.bf16.msra.mxu0 %v2800
    %3675 = vmatprep.subr.bf16.mxu0 %v2805
    %3676 = vmatpush1.bf16.msra.mxu0 %v2804
    %3677 = vmatprep.subr.bf16.mxu0 %v2809
    %3678 = vmatpush1.bf16.msra.mxu0 %v2808
    %3679 = vmatprep.mubr.bf16.mxu0 %v1389
    %3680 = vmatmul.mubr.bf16.gmra.mrb[0].mxu0 %v1388
    %v3681 = vpop.f32.mrb[0].mxu0
    %v3682 = vadd.f32 %v3489, %v3681
    %v3683 = vpop.f32.mrb[0].mxu0
    %v3684 = vadd.f32 %v3491, %v3683
    %v3685 = vpop.f32.mrb[0].mxu0
    %v3686 = vadd.f32 %v3493, %v3685
    %v3687 = vpop.f32.mrb[0].mxu0
    %v3688 = vadd.f32 %v3495, %v3687
    %3689 = vmatprep.mubr.bf16.mxu0 %v1397
    %3690 = vmatmul.mubr.bf16.gmra.mrb[0].mxu0 %v1396
    %v3691 = vpop.f32.mrb[0].mxu0
    %v3692 = vadd.f32 %v3499, %v3691
    %v3693 = vpop.f32.mrb[0].mxu0
    %v3694 = vadd.f32 %v3501, %v3693
    %v3695 = vpop.f32.mrb[0].mxu0
    %v3696 = vadd.f32 %v3503, %v3695
    %v3697 = vpop.f32.mrb[0].mxu0
    %v3698 = vadd.f32 %v3505, %v3697
    %3699 = vmatprep.mubr.bf16.mxu0 %v1405
    %3700 = vmatmul.mubr.bf16.gmra.mrb[0].mxu0 %v1404
    %v3701 = vpop.f32.mrb[0].mxu0
    %v3702 = vadd.f32 %v3509, %v3701
    %v3703 = vpop.f32.mrb[0].mxu0
    %v3704 = vadd.f32 %v3511, %v3703
    %v3705 = vpop.f32.mrb[0].mxu0
    %v3706 = vadd.f32 %v3513, %v3705
    %v3707 = vpop.f32.mrb[0].mxu0
    %v3708 = vadd.f32 %v3515, %v3707
    %3709 = vmatprep.mubr.bf16.mxu0 %v1413
    %3710 = vmatmul.mubr.bf16.gmra.mrb[0].mxu0 %v1412
    %v3711 = vpop.f32.mrb[0].mxu0
    %v3712 = vadd.f32 %v3519, %v3711
    %v3713 = vpop.f32.mrb[0].mxu0
    %v3714 = vadd.f32 %v3521, %v3713
    %v3715 = vpop.f32.mrb[0].mxu0
    %v3716 = vadd.f32 %v3523, %v3715
    %v3717 = vpop.f32.mrb[0].mxu0
    %v3718 = vadd.f32 %v3525, %v3717
    %3719 = vmatprep.mubr.bf16.mxu0 %v1421
    %3720 = vmatmul.mubr.bf16.gmra.mrb[0].mxu0 %v1420
    %v3721 = vpop.f32.mrb[0].mxu0
    %v3722 = vadd.f32 %v3529, %v3721
    %v3723 = vpop.f32.mrb[0].mxu0
    %v3724 = vadd.f32 %v3531, %v3723
    %v3725 = vpop.f32.mrb[0].mxu0
    %v3726 = vadd.f32 %v3533, %v3725
    %v3727 = vpop.f32.mrb[0].mxu0
    %v3728 = vadd.f32 %v3535, %v3727
    %3729 = vmatprep.mubr.bf16.mxu0 %v1429
    %3730 = vmatmul.mubr.bf16.gmra.mrb[0].mxu0 %v1428
    %v3731 = vpop.f32.mrb[0].mxu0
    %v3732 = vadd.f32 %v3539, %v3731
    %v3733 = vpop.f32.mrb[0].mxu0
    %v3734 = vadd.f32 %v3541, %v3733
    %v3735 = vpop.f32.mrb[0].mxu0
    %v3736 = vadd.f32 %v3543, %v3735
    %v3737 = vpop.f32.mrb[0].mxu0
    %v3738 = vadd.f32 %v3545, %v3737
    %3739 = vmatprep.mubr.bf16.mxu0 %v1437
    %3740 = vmatmul.mubr.bf16.gmra.mrb[0].mxu0 %v1436
    %v3741 = vpop.f32.mrb[0].mxu0
    %v3742 = vadd.f32 %v3549, %v3741
    %v3743 = vpop.f32.mrb[0].mxu0
    %v3744 = vadd.f32 %v3551, %v3743
    %v3745 = vpop.f32.mrb[0].mxu0
    %v3746 = vadd.f32 %v3553, %v3745
    %v3747 = vpop.f32.mrb[0].mxu0
    %v3748 = vadd.f32 %v3555, %v3747
    %3749 = vmatprep.mubr.bf16.mxu0 %v1445
    %3750 = vmatmul.mubr.bf16.gmra.mrb[0].mxu0 %v1444
    %v3751 = vpop.f32.mrb[0].mxu0
    %v3752 = vadd.f32 %v3559, %v3751
    %v3753 = vpop.f32.mrb[0].mxu0
    %v3754 = vadd.f32 %v3561, %v3753
    %v3755 = vpop.f32.mrb[0].mxu0
    %v3756 = vadd.f32 %v3563, %v3755
    %v3757 = vpop.f32.mrb[0].mxu0
    %v3758 = vadd.f32 %v3565, %v3757
    %3759 = vmatprep.mubr.bf16.mxu0 %v1453
    %3760 = vmatmul.mubr.bf16.gmra.mrb[0].mxu0 %v1452
    %v3761 = vpop.f32.mrb[0].mxu0
    %v3762 = vadd.f32 %v3569, %v3761
    %v3763 = vpop.f32.mrb[0].mxu0
    %v3764 = vadd.f32 %v3571, %v3763
    %v3765 = vpop.f32.mrb[0].mxu0
    %v3766 = vadd.f32 %v3573, %v3765
    %v3767 = vpop.f32.mrb[0].mxu0
    %v3768 = vadd.f32 %v3575, %v3767
    %3769 = vmatprep.mubr.bf16.mxu0 %v1461
    %3770 = vmatmul.mubr.bf16.gmra.mrb[0].mxu0 %v1460
    %v3771 = vpop.f32.mrb[0].mxu0
    %v3772 = vadd.f32 %v3579, %v3771
    %v3773 = vpop.f32.mrb[0].mxu0
    %v3774 = vadd.f32 %v3581, %v3773
    %v3775 = vpop.f32.mrb[0].mxu0
    %v3776 = vadd.f32 %v3583, %v3775
    %v3777 = vpop.f32.mrb[0].mxu0
    %v3778 = vadd.f32 %v3585, %v3777
    %3779 = vmatprep.mubr.bf16.mxu0 %v1469
    %3780 = vmatmul.mubr.bf16.gmra.mrb[0].mxu0 %v1468
    %v3781 = vpop.f32.mrb[0].mxu0
    %v3782 = vadd.f32 %v3589, %v3781
    %v3783 = vpop.f32.mrb[0].mxu0
    %v3784 = vadd.f32 %v3591, %v3783
    %v3785 = vpop.f32.mrb[0].mxu0
    %v3786 = vadd.f32 %v3593, %v3785
    %v3787 = vpop.f32.mrb[0].mxu0
    %v3788 = vadd.f32 %v3595, %v3787
    %3789 = vmatprep.mubr.bf16.mxu0 %v1477
    %3790 = vmatmul.mubr.bf16.gmra.mrb[0].mxu0 %v1476
    %v3791 = vpop.f32.mrb[0].mxu0
    %v3792 = vadd.f32 %v3599, %v3791
    %v3793 = vpop.f32.mrb[0].mxu0
    %v3794 = vadd.f32 %v3601, %v3793
    %v3795 = vpop.f32.mrb[0].mxu0
    %v3796 = vadd.f32 %v3603, %v3795
    %v3797 = vpop.f32.mrb[0].mxu0
    %v3798 = vadd.f32 %v3605, %v3797
    %3799 = vmatprep.mubr.bf16.mxu0 %v1485
    %3800 = vmatmul.mubr.bf16.gmra.mrb[0].mxu0 %v1484
    %v3801 = vpop.f32.mrb[0].mxu0
    %v3802 = vadd.f32 %v3609, %v3801
    %v3803 = vpop.f32.mrb[0].mxu0
    %v3804 = vadd.f32 %v3611, %v3803
    %v3805 = vpop.f32.mrb[0].mxu0
    %v3806 = vadd.f32 %v3613, %v3805
    %v3807 = vpop.f32.mrb[0].mxu0
    %v3808 = vadd.f32 %v3615, %v3807
    %3809 = vmatprep.mubr.bf16.mxu0 %v1493
    %3810 = vmatmul.mubr.bf16.gmra.mrb[0].mxu0 %v1492
    %v3811 = vpop.f32.mrb[0].mxu0
    %v3812 = vadd.f32 %v3619, %v3811
    %v3813 = vpop.f32.mrb[0].mxu0
    %v3814 = vadd.f32 %v3621, %v3813
    %v3815 = vpop.f32.mrb[0].mxu0
    %v3816 = vadd.f32 %v3623, %v3815
    %v3817 = vpop.f32.mrb[0].mxu0
    %v3818 = vadd.f32 %v3625, %v3817
    %3819 = vmatprep.mubr.bf16.mxu0 %v1501
    %3820 = vmatmul.mubr.bf16.gmra.mrb[0].mxu0 %v1500
    %v3821 = vpop.f32.mrb[0].mxu0
    %v3822 = vadd.f32 %v3629, %v3821
    %v3823 = vpop.f32.mrb[0].mxu0
    %v3824 = vadd.f32 %v3631, %v3823
    %v3825 = vpop.f32.mrb[0].mxu0
    %v3826 = vadd.f32 %v3633, %v3825
    %v3827 = vpop.f32.mrb[0].mxu0
    %v3828 = vadd.f32 %v3635, %v3827
    %3829 = vmatprep.mubr.bf16.mxu0 %v1509
    %3830 = vmatmul.mubr.bf16.gmra.mrb[0].mxu0 %v1508
    %v3831 = vpop.f32.mrb[0].mxu0
    %v3832 = vadd.f32 %v3639, %v3831
    %v3833 = vpop.f32.mrb[0].mxu0
    %v3834 = vadd.f32 %v3641, %v3833
    %v3835 = vpop.f32.mrb[0].mxu0
    %v3836 = vadd.f32 %v3643, %v3835
    %v3837 = vpop.f32.mrb[0].mxu0
    %v3838 = vadd.f32 %v3645, %v3837
    %3839 = vdwg.mxu0
    %3840 = vmatprep.subr.bf16.mxu0 %v2559
    %3841 = vmatpush1.bf16.msra.mxu0 %v2558
    %3842 = vmatprep.subr.bf16.mxu0 %v2563
    %3843 = vmatpush1.bf16.msra.mxu0 %v2562
    %3844 = vmatprep.subr.bf16.mxu0 %v2567
    %3845 = vmatpush1.bf16.msra.mxu0 %v2566
    %3846 = vmatprep.subr.bf16.mxu0 %v2571
    %3847 = vmatpush1.bf16.msra.mxu0 %v2570
    %3848 = vmatprep.subr.bf16.mxu0 %v2575
    %3849 = vmatpush1.bf16.msra.mxu0 %v2574
    %3850 = vmatprep.subr.bf16.mxu0 %v2579
    %3851 = vmatpush1.bf16.msra.mxu0 %v2578
    %3852 = vmatprep.subr.bf16.mxu0 %v2583
    %3853 = vmatpush1.bf16.msra.mxu0 %v2582
    %3854 = vmatprep.subr.bf16.mxu0 %v2587
    %3855 = vmatpush1.bf16.msra.mxu0 %v2586
    %3856 = vmatprep.subr.bf16.mxu0 %v2591
    %3857 = vmatpush1.bf16.msra.mxu0 %v2590
    %3858 = vmatprep.subr.bf16.mxu0 %v2595
    %3859 = vmatpush1.bf16.msra.mxu0 %v2594
    %3860 = vmatprep.subr.bf16.mxu0 %v2599
    %3861 = vmatpush1.bf16.msra.mxu0 %v2598
    %3862 = vmatprep.subr.bf16.mxu0 %v2603
    %3863 = vmatpush1.bf16.msra.mxu0 %v2602
    %3864 = vmatprep.subr.bf16.mxu0 %v2607
    %3865 = vmatpush1.bf16.msra.mxu0 %v2606
    %3866 = vmatprep.subr.bf16.mxu0 %v2611
    %3867 = vmatpush1.bf16.msra.mxu0 %v2610
    %3868 = vmatprep.subr.bf16.mxu0 %v2615
    %3869 = vmatpush1.bf16.msra.mxu0 %v2614
    %3870 = vmatprep.subr.bf16.mxu0 %v2619
    %3871 = vmatpush1.bf16.msra.mxu0 %v2618
    %3872 = vmatprep.mubr.bf16.mxu0 %v1383
    %3873 = vmatmul.mubr.bf16.gmra.mrb[0].mxu0 %v1382
    %v3874 = vpop.f32.mrb[0].mxu0
    %v3875 = vadd.f32 %v1779, %v3874
    %v3876 = vpop.f32.mrb[0].mxu0
    %v3877 = vadd.f32 %v1783, %v3876
    %v3878 = vpop.f32.mrb[0].mxu0
    %v3879 = vadd.f32 %v1779, %v3878
    %v3880 = vpop.f32.mrb[0].mxu0
    %v3881 = vadd.f32 %v1783, %v3880
    %3882 = vmatprep.mubr.bf16.mxu0 %v1391
    %3883 = vmatmul.mubr.bf16.gmra.mrb[0].mxu0 %v1390
    %v3884 = vpop.f32.mrb[0].mxu0
    %v3885 = vadd.f32 %v1779, %v3884
    %v3886 = vpop.f32.mrb[0].mxu0
    %v3887 = vadd.f32 %v1783, %v3886
    %v3888 = vpop.f32.mrb[0].mxu0
    %v3889 = vadd.f32 %v1779, %v3888
    %v3890 = vpop.f32.mrb[0].mxu0
    %v3891 = vadd.f32 %v1783, %v3890
    %3892 = vmatprep.mubr.bf16.mxu0 %v1399
    %3893 = vmatmul.mubr.bf16.gmra.mrb[0].mxu0 %v1398
    %v3894 = vpop.f32.mrb[0].mxu0
    %v3895 = vadd.f32 %v1779, %v3894
    %v3896 = vpop.f32.mrb[0].mxu0
    %v3897 = vadd.f32 %v1783, %v3896
    %v3898 = vpop.f32.mrb[0].mxu0
    %v3899 = vadd.f32 %v1779, %v3898
    %v3900 = vpop.f32.mrb[0].mxu0
    %v3901 = vadd.f32 %v1783, %v3900
    %3902 = vmatprep.mubr.bf16.mxu0 %v1407
    %3903 = vmatmul.mubr.bf16.gmra.mrb[0].mxu0 %v1406
    %v3904 = vpop.f32.mrb[0].mxu0
    %v3905 = vadd.f32 %v1779, %v3904
    %v3906 = vpop.f32.mrb[0].mxu0
    %v3907 = vadd.f32 %v1783, %v3906
    %v3908 = vpop.f32.mrb[0].mxu0
    %v3909 = vadd.f32 %v1779, %v3908
    %v3910 = vpop.f32.mrb[0].mxu0
    %v3911 = vadd.f32 %v1783, %v3910
    %3912 = vmatprep.mubr.bf16.mxu0 %v1415
    %3913 = vmatmul.mubr.bf16.gmra.mrb[0].mxu0 %v1414
    %v3914 = vpop.f32.mrb[0].mxu0
    %v3915 = vadd.f32 %v1779, %v3914
    %v3916 = vpop.f32.mrb[0].mxu0
    %v3917 = vadd.f32 %v1783, %v3916
    %v3918 = vpop.f32.mrb[0].mxu0
    %v3919 = vadd.f32 %v1779, %v3918
    %v3920 = vpop.f32.mrb[0].mxu0
    %v3921 = vadd.f32 %v1783, %v3920
    %3922 = vmatprep.mubr.bf16.mxu0 %v1423
    %3923 = vmatmul.mubr.bf16.gmra.mrb[0].mxu0 %v1422
    %v3924 = vpop.f32.mrb[0].mxu0
    %v3925 = vadd.f32 %v1779, %v3924
    %v3926 = vpop.f32.mrb[0].mxu0
    %v3927 = vadd.f32 %v1783, %v3926
    %v3928 = vpop.f32.mrb[0].mxu0
    %v3929 = vadd.f32 %v1779, %v3928
    %v3930 = vpop.f32.mrb[0].mxu0
    %v3931 = vadd.f32 %v1783, %v3930
    %3932 = vmatprep.mubr.bf16.mxu0 %v1431
    %3933 = vmatmul.mubr.bf16.gmra.mrb[0].mxu0 %v1430
    %v3934 = vpop.f32.mrb[0].mxu0
    %v3935 = vadd.f32 %v1779, %v3934
    %v3936 = vpop.f32.mrb[0].mxu0
    %v3937 = vadd.f32 %v1783, %v3936
    %v3938 = vpop.f32.mrb[0].mxu0
    %v3939 = vadd.f32 %v1779, %v3938
    %v3940 = vpop.f32.mrb[0].mxu0
    %v3941 = vadd.f32 %v1783, %v3940
    %3942 = vmatprep.mubr.bf16.mxu0 %v1439
    %3943 = vmatmul.mubr.bf16.gmra.mrb[0].mxu0 %v1438
    %v3944 = vpop.f32.mrb[0].mxu0
    %v3945 = vadd.f32 %v1779, %v3944
    %v3946 = vpop.f32.mrb[0].mxu0
    %v3947 = vadd.f32 %v1783, %v3946
    %v3948 = vpop.f32.mrb[0].mxu0
    %v3949 = vadd.f32 %v1779, %v3948
    %v3950 = vpop.f32.mrb[0].mxu0
    %v3951 = vadd.f32 %v1783, %v3950
    %3952 = vmatprep.mubr.bf16.mxu0 %v1447
    %3953 = vmatmul.mubr.bf16.gmra.mrb[0].mxu0 %v1446
    %v3954 = vpop.f32.mrb[0].mxu0
    %v3955 = vadd.f32 %v1779, %v3954
    %v3956 = vpop.f32.mrb[0].mxu0
    %v3957 = vadd.f32 %v1783, %v3956
    %v3958 = vpop.f32.mrb[0].mxu0
    %v3959 = vadd.f32 %v1779, %v3958
    %v3960 = vpop.f32.mrb[0].mxu0
    %v3961 = vadd.f32 %v1783, %v3960
    %3962 = vmatprep.mubr.bf16.mxu0 %v1455
    %3963 = vmatmul.mubr.bf16.gmra.mrb[0].mxu0 %v1454
    %v3964 = vpop.f32.mrb[0].mxu0
    %v3965 = vadd.f32 %v1779, %v3964
    %v3966 = vpop.f32.mrb[0].mxu0
    %v3967 = vadd.f32 %v1783, %v3966
    %v3968 = vpop.f32.mrb[0].mxu0
    %v3969 = vadd.f32 %v1779, %v3968
    %v3970 = vpop.f32.mrb[0].mxu0
    %v3971 = vadd.f32 %v1783, %v3970
    %3972 = vmatprep.mubr.bf16.mxu0 %v1463
    %3973 = vmatmul.mubr.bf16.gmra.mrb[0].mxu0 %v1462
    %v3974 = vpop.f32.mrb[0].mxu0
    %v3975 = vadd.f32 %v1779, %v3974
    %v3976 = vpop.f32.mrb[0].mxu0
    %v3977 = vadd.f32 %v1783, %v3976
    %v3978 = vpop.f32.mrb[0].mxu0
    %v3979 = vadd.f32 %v1779, %v3978
    %v3980 = vpop.f32.mrb[0].mxu0
    %v3981 = vadd.f32 %v1783, %v3980
    %3982 = vmatprep.mubr.bf16.mxu0 %v1471
    %3983 = vmatmul.mubr.bf16.gmra.mrb[0].mxu0 %v1470
    %v3984 = vpop.f32.mrb[0].mxu0
    %v3985 = vadd.f32 %v1779, %v3984
    %v3986 = vpop.f32.mrb[0].mxu0
    %v3987 = vadd.f32 %v1783, %v3986
    %v3988 = vpop.f32.mrb[0].mxu0
    %v3989 = vadd.f32 %v1779, %v3988
    %v3990 = vpop.f32.mrb[0].mxu0
    %v3991 = vadd.f32 %v1783, %v3990
    %3992 = vmatprep.mubr.bf16.mxu0 %v1479
    %3993 = vmatmul.mubr.bf16.gmra.mrb[0].mxu0 %v1478
    %v3994 = vpop.f32.mrb[0].mxu0
    %v3995 = vadd.f32 %v1779, %v3994
    %v3996 = vpop.f32.mrb[0].mxu0
    %v3997 = vadd.f32 %v1783, %v3996
    %v3998 = vpop.f32.mrb[0].mxu0
    %v3999 = vadd.f32 %v1779, %v3998
    %v4000 = vpop.f32.mrb[0].mxu0
    %v4001 = vadd.f32 %v1783, %v4000
    %4002 = vmatprep.mubr.bf16.mxu0 %v1487
    %4003 = vmatmul.mubr.bf16.gmra.mrb[0].mxu0 %v1486
    %v4004 = vpop.f32.mrb[0].mxu0
    %v4005 = vadd.f32 %v1779, %v4004
    %v4006 = vpop.f32.mrb[0].mxu0
    %v4007 = vadd.f32 %v1783, %v4006
    %v4008 = vpop.f32.mrb[0].mxu0
    %v4009 = vadd.f32 %v1779, %v4008
    %v4010 = vpop.f32.mrb[0].mxu0
    %v4011 = vadd.f32 %v1783, %v4010
    %4012 = vmatprep.mubr.bf16.mxu0 %v1495
    %4013 = vmatmul.mubr.bf16.gmra.mrb[0].mxu0 %v1494
    %v4014 = vpop.f32.mrb[0].mxu0
    %v4015 = vadd.f32 %v1779, %v4014
    %v4016 = vpop.f32.mrb[0].mxu0
    %v4017 = vadd.f32 %v1783, %v4016
    %v4018 = vpop.f32.mrb[0].mxu0
    %v4019 = vadd.f32 %v1779, %v4018
    %v4020 = vpop.f32.mrb[0].mxu0
    %v4021 = vadd.f32 %v1783, %v4020
    %4022 = vmatprep.mubr.bf16.mxu0 %v1503
    %4023 = vmatmul.mubr.bf16.gmra.mrb[0].mxu0 %v1502
    %v4024 = vpop.f32.mrb[0].mxu0
    %v4025 = vadd.f32 %v1779, %v4024
    %v4026 = vpop.f32.mrb[0].mxu0
    %v4027 = vadd.f32 %v1783, %v4026
    %v4028 = vpop.f32.mrb[0].mxu0
    %v4029 = vadd.f32 %v1779, %v4028
    %v4030 = vpop.f32.mrb[0].mxu0
    %v4031 = vadd.f32 %v1783, %v4030
    %4032 = vdwg.mxu0
    %4033 = vmatprep.subr.bf16.mxu0 %v2623
    %4034 = vmatpush1.bf16.msra.mxu0 %v2622
    %4035 = vmatprep.subr.bf16.mxu0 %v2627
    %4036 = vmatpush1.bf16.msra.mxu0 %v2626
    %4037 = vmatprep.subr.bf16.mxu0 %v2631
    %4038 = vmatpush1.bf16.msra.mxu0 %v2630
    %4039 = vmatprep.subr.bf16.mxu0 %v2635
    %4040 = vmatpush1.bf16.msra.mxu0 %v2634
    %4041 = vmatprep.subr.bf16.mxu0 %v2639
    %4042 = vmatpush1.bf16.msra.mxu0 %v2638
    %4043 = vmatprep.subr.bf16.mxu0 %v2643
    %4044 = vmatpush1.bf16.msra.mxu0 %v2642
    %4045 = vmatprep.subr.bf16.mxu0 %v2647
    %4046 = vmatpush1.bf16.msra.mxu0 %v2646
    %4047 = vmatprep.subr.bf16.mxu0 %v2651
    %4048 = vmatpush1.bf16.msra.mxu0 %v2650
    %4049 = vmatprep.subr.bf16.mxu0 %v2655
    %4050 = vmatpush1.bf16.msra.mxu0 %v2654
    %4051 = vmatprep.subr.bf16.mxu0 %v2659
    %4052 = vmatpush1.bf16.msra.mxu0 %v2658
    %4053 = vmatprep.subr.bf16.mxu0 %v2663
    %4054 = vmatpush1.bf16.msra.mxu0 %v2662
    %4055 = vmatprep.subr.bf16.mxu0 %v2667
    %4056 = vmatpush1.bf16.msra.mxu0 %v2666
    %4057 = vmatprep.subr.bf16.mxu0 %v2671
    %4058 = vmatpush1.bf16.msra.mxu0 %v2670
    %4059 = vmatprep.subr.bf16.mxu0 %v2675
    %4060 = vmatpush1.bf16.msra.mxu0 %v2674
    %4061 = vmatprep.subr.bf16.mxu0 %v2679
    %4062 = vmatpush1.bf16.msra.mxu0 %v2678
    %4063 = vmatprep.subr.bf16.mxu0 %v2683
    %4064 = vmatpush1.bf16.msra.mxu0 %v2682
    %4065 = vmatprep.mubr.bf16.mxu0 %v1385
    %4066 = vmatmul.mubr.bf16.gmra.mrb[0].mxu0 %v1384
    %v4067 = vpop.f32.mrb[0].mxu0
    %v4068 = vadd.f32 %v3875, %v4067
    %v4069 = vpop.f32.mrb[0].mxu0
    %v4070 = vadd.f32 %v3877, %v4069
    %v4071 = vpop.f32.mrb[0].mxu0
    %v4072 = vadd.f32 %v3879, %v4071
    %v4073 = vpop.f32.mrb[0].mxu0
    %v4074 = vadd.f32 %v3881, %v4073
    %4075 = vmatprep.mubr.bf16.mxu0 %v1393
    %4076 = vmatmul.mubr.bf16.gmra.mrb[0].mxu0 %v1392
    %v4077 = vpop.f32.mrb[0].mxu0
    %v4078 = vadd.f32 %v3885, %v4077
    %v4079 = vpop.f32.mrb[0].mxu0
    %v4080 = vadd.f32 %v3887, %v4079
    %v4081 = vpop.f32.mrb[0].mxu0
    %v4082 = vadd.f32 %v3889, %v4081
    %v4083 = vpop.f32.mrb[0].mxu0
    %v4084 = vadd.f32 %v3891, %v4083
    %4085 = vmatprep.mubr.bf16.mxu0 %v1401
    %4086 = vmatmul.mubr.bf16.gmra.mrb[0].mxu0 %v1400
    %v4087 = vpop.f32.mrb[0].mxu0
    %v4088 = vadd.f32 %v3895, %v4087
    %v4089 = vpop.f32.mrb[0].mxu0
    %v4090 = vadd.f32 %v3897, %v4089
    %v4091 = vpop.f32.mrb[0].mxu0
    %v4092 = vadd.f32 %v3899, %v4091
    %v4093 = vpop.f32.mrb[0].mxu0
    %v4094 = vadd.f32 %v3901, %v4093
    %4095 = vmatprep.mubr.bf16.mxu0 %v1409
    %4096 = vmatmul.mubr.bf16.gmra.mrb[0].mxu0 %v1408
    %v4097 = vpop.f32.mrb[0].mxu0
    %v4098 = vadd.f32 %v3905, %v4097
    %v4099 = vpop.f32.mrb[0].mxu0
    %v4100 = vadd.f32 %v3907, %v4099
    %v4101 = vpop.f32.mrb[0].mxu0
    %v4102 = vadd.f32 %v3909, %v4101
    %v4103 = vpop.f32.mrb[0].mxu0
    %v4104 = vadd.f32 %v3911, %v4103
    %4105 = vmatprep.mubr.bf16.mxu0 %v1417
    %4106 = vmatmul.mubr.bf16.gmra.mrb[0].mxu0 %v1416
    %v4107 = vpop.f32.mrb[0].mxu0
    %v4108 = vadd.f32 %v3915, %v4107
    %v4109 = vpop.f32.mrb[0].mxu0
    %v4110 = vadd.f32 %v3917, %v4109
    %v4111 = vpop.f32.mrb[0].mxu0
    %v4112 = vadd.f32 %v3919, %v4111
    %v4113 = vpop.f32.mrb[0].mxu0
    %v4114 = vadd.f32 %v3921, %v4113
    %4115 = vmatprep.mubr.bf16.mxu0 %v1425
    %4116 = vmatmul.mubr.bf16.gmra.mrb[0].mxu0 %v1424
    %v4117 = vpop.f32.mrb[0].mxu0
    %v4118 = vadd.f32 %v3925, %v4117
    %v4119 = vpop.f32.mrb[0].mxu0
    %v4120 = vadd.f32 %v3927, %v4119
    %v4121 = vpop.f32.mrb[0].mxu0
    %v4122 = vadd.f32 %v3929, %v4121
    %v4123 = vpop.f32.mrb[0].mxu0
    %v4124 = vadd.f32 %v3931, %v4123
    %4125 = vmatprep.mubr.bf16.mxu0 %v1433
    %4126 = vmatmul.mubr.bf16.gmra.mrb[0].mxu0 %v1432
    %v4127 = vpop.f32.mrb[0].mxu0
    %v4128 = vadd.f32 %v3935, %v4127
    %v4129 = vpop.f32.mrb[0].mxu0
    %v4130 = vadd.f32 %v3937, %v4129
    %v4131 = vpop.f32.mrb[0].mxu0
    %v4132 = vadd.f32 %v3939, %v4131
    %v4133 = vpop.f32.mrb[0].mxu0
    %v4134 = vadd.f32 %v3941, %v4133
    %4135 = vmatprep.mubr.bf16.mxu0 %v1441
    %4136 = vmatmul.mubr.bf16.gmra.mrb[0].mxu0 %v1440
    %v4137 = vpop.f32.mrb[0].mxu0
    %v4138 = vadd.f32 %v3945, %v4137
    %v4139 = vpop.f32.mrb[0].mxu0
    %v4140 = vadd.f32 %v3947, %v4139
    %v4141 = vpop.f32.mrb[0].mxu0
    %v4142 = vadd.f32 %v3949, %v4141
    %v4143 = vpop.f32.mrb[0].mxu0
    %v4144 = vadd.f32 %v3951, %v4143
    %4145 = vmatprep.mubr.bf16.mxu0 %v1449
    %4146 = vmatmul.mubr.bf16.gmra.mrb[0].mxu0 %v1448
    %v4147 = vpop.f32.mrb[0].mxu0
    %v4148 = vadd.f32 %v3955, %v4147
    %v4149 = vpop.f32.mrb[0].mxu0
    %v4150 = vadd.f32 %v3957, %v4149
    %v4151 = vpop.f32.mrb[0].mxu0
    %v4152 = vadd.f32 %v3959, %v4151
    %v4153 = vpop.f32.mrb[0].mxu0
    %v4154 = vadd.f32 %v3961, %v4153
    %4155 = vmatprep.mubr.bf16.mxu0 %v1457
    %4156 = vmatmul.mubr.bf16.gmra.mrb[0].mxu0 %v1456
    %v4157 = vpop.f32.mrb[0].mxu0
    %v4158 = vadd.f32 %v3965, %v4157
    %v4159 = vpop.f32.mrb[0].mxu0
    %v4160 = vadd.f32 %v3967, %v4159
    %v4161 = vpop.f32.mrb[0].mxu0
    %v4162 = vadd.f32 %v3969, %v4161
    %v4163 = vpop.f32.mrb[0].mxu0
    %v4164 = vadd.f32 %v3971, %v4163
    %4165 = vmatprep.mubr.bf16.mxu0 %v1465
    %4166 = vmatmul.mubr.bf16.gmra.mrb[0].mxu0 %v1464
    %v4167 = vpop.f32.mrb[0].mxu0
    %v4168 = vadd.f32 %v3975, %v4167
    %v4169 = vpop.f32.mrb[0].mxu0
    %v4170 = vadd.f32 %v3977, %v4169
    %v4171 = vpop.f32.mrb[0].mxu0
    %v4172 = vadd.f32 %v3979, %v4171
    %v4173 = vpop.f32.mrb[0].mxu0
    %v4174 = vadd.f32 %v3981, %v4173
    %4175 = vmatprep.mubr.bf16.mxu0 %v1473
    %4176 = vmatmul.mubr.bf16.gmra.mrb[0].mxu0 %v1472
    %v4177 = vpop.f32.mrb[0].mxu0
    %v4178 = vadd.f32 %v3985, %v4177
    %v4179 = vpop.f32.mrb[0].mxu0
    %v4180 = vadd.f32 %v3987, %v4179
    %v4181 = vpop.f32.mrb[0].mxu0
    %v4182 = vadd.f32 %v3989, %v4181
    %v4183 = vpop.f32.mrb[0].mxu0
    %v4184 = vadd.f32 %v3991, %v4183
    %4185 = vmatprep.mubr.bf16.mxu0 %v1481
    %4186 = vmatmul.mubr.bf16.gmra.mrb[0].mxu0 %v1480
    %v4187 = vpop.f32.mrb[0].mxu0
    %v4188 = vadd.f32 %v3995, %v4187
    %v4189 = vpop.f32.mrb[0].mxu0
    %v4190 = vadd.f32 %v3997, %v4189
    %v4191 = vpop.f32.mrb[0].mxu0
    %v4192 = vadd.f32 %v3999, %v4191
    %v4193 = vpop.f32.mrb[0].mxu0
    %v4194 = vadd.f32 %v4001, %v4193
    %4195 = vmatprep.mubr.bf16.mxu0 %v1489
    %4196 = vmatmul.mubr.bf16.gmra.mrb[0].mxu0 %v1488
    %v4197 = vpop.f32.mrb[0].mxu0
    %v4198 = vadd.f32 %v4005, %v4197
    %v4199 = vpop.f32.mrb[0].mxu0
    %v4200 = vadd.f32 %v4007, %v4199
    %v4201 = vpop.f32.mrb[0].mxu0
    %v4202 = vadd.f32 %v4009, %v4201
    %v4203 = vpop.f32.mrb[0].mxu0
    %v4204 = vadd.f32 %v4011, %v4203
    %4205 = vmatprep.mubr.bf16.mxu0 %v1497
    %4206 = vmatmul.mubr.bf16.gmra.mrb[0].mxu0 %v1496
    %v4207 = vpop.f32.mrb[0].mxu0
    %v4208 = vadd.f32 %v4015, %v4207
    %v4209 = vpop.f32.mrb[0].mxu0
    %v4210 = vadd.f32 %v4017, %v4209
    %v4211 = vpop.f32.mrb[0].mxu0
    %v4212 = vadd.f32 %v4019, %v4211
    %v4213 = vpop.f32.mrb[0].mxu0
    %v4214 = vadd.f32 %v4021, %v4213
    %4215 = vmatprep.mubr.bf16.mxu0 %v1505
    %4216 = vmatmul.mubr.bf16.gmra.mrb[0].mxu0 %v1504
    %v4217 = vpop.f32.mrb[0].mxu0
    %v4218 = vadd.f32 %v4025, %v4217
    %v4219 = vpop.f32.mrb[0].mxu0
    %v4220 = vadd.f32 %v4027, %v4219
    %v4221 = vpop.f32.mrb[0].mxu0
    %v4222 = vadd.f32 %v4029, %v4221
    %v4223 = vpop.f32.mrb[0].mxu0
    %v4224 = vadd.f32 %v4031, %v4223
    %4225 = vdwg.mxu0
    %4226 = vmatprep.subr.bf16.mxu0 %v2687
    %4227 = vmatpush1.bf16.msra.mxu0 %v2686
    %4228 = vmatprep.subr.bf16.mxu0 %v2691
    %4229 = vmatpush1.bf16.msra.mxu0 %v2690
    %4230 = vmatprep.subr.bf16.mxu0 %v2695
    %4231 = vmatpush1.bf16.msra.mxu0 %v2694
    %4232 = vmatprep.subr.bf16.mxu0 %v2699
    %4233 = vmatpush1.bf16.msra.mxu0 %v2698
    %4234 = vmatprep.subr.bf16.mxu0 %v2703
    %4235 = vmatpush1.bf16.msra.mxu0 %v2702
    %4236 = vmatprep.subr.bf16.mxu0 %v2707
    %4237 = vmatpush1.bf16.msra.mxu0 %v2706
    %4238 = vmatprep.subr.bf16.mxu0 %v2711
    %4239 = vmatpush1.bf16.msra.mxu0 %v2710
    %4240 = vmatprep.subr.bf16.mxu0 %v2715
    %4241 = vmatpush1.bf16.msra.mxu0 %v2714
    %4242 = vmatprep.subr.bf16.mxu0 %v2719
    %4243 = vmatpush1.bf16.msra.mxu0 %v2718
    %4244 = vmatprep.subr.bf16.mxu0 %v2723
    %4245 = vmatpush1.bf16.msra.mxu0 %v2722
    %4246 = vmatprep.subr.bf16.mxu0 %v2727
    %4247 = vmatpush1.bf16.msra.mxu0 %v2726
    %4248 = vmatprep.subr.bf16.mxu0 %v2731
    %4249 = vmatpush1.bf16.msra.mxu0 %v2730
    %4250 = vmatprep.subr.bf16.mxu0 %v2735
    %4251 = vmatpush1.bf16.msra.mxu0 %v2734
    %4252 = vmatprep.subr.bf16.mxu0 %v2739
    %4253 = vmatpush1.bf16.msra.mxu0 %v2738
    %4254 = vmatprep.subr.bf16.mxu0 %v2743
    %4255 = vmatpush1.bf16.msra.mxu0 %v2742
    %4256 = vmatprep.subr.bf16.mxu0 %v2747
    %4257 = vmatpush1.bf16.msra.mxu0 %v2746
    %4258 = vmatprep.mubr.bf16.mxu0 %v1387
    %4259 = vmatmul.mubr.bf16.gmra.mrb[0].mxu0 %v1386
    %v4260 = vpop.f32.mrb[0].mxu0
    %v4261 = vadd.f32 %v4068, %v4260
    %v4262 = vpop.f32.mrb[0].mxu0
    %v4263 = vadd.f32 %v4070, %v4262
    %v4264 = vpop.f32.mrb[0].mxu0
    %v4265 = vadd.f32 %v4072, %v4264
    %v4266 = vpop.f32.mrb[0].mxu0
    %v4267 = vadd.f32 %v4074, %v4266
    %4268 = vmatprep.mubr.bf16.mxu0 %v1395
    %4269 = vmatmul.mubr.bf16.gmra.mrb[0].mxu0 %v1394
    %v4270 = vpop.f32.mrb[0].mxu0
    %v4271 = vadd.f32 %v4078, %v4270
    %v4272 = vpop.f32.mrb[0].mxu0
    %v4273 = vadd.f32 %v4080, %v4272
    %v4274 = vpop.f32.mrb[0].mxu0
    %v4275 = vadd.f32 %v4082, %v4274
    %v4276 = vpop.f32.mrb[0].mxu0
    %v4277 = vadd.f32 %v4084, %v4276
    %4278 = vmatprep.mubr.bf16.mxu0 %v1403
    %4279 = vmatmul.mubr.bf16.gmra.mrb[0].mxu0 %v1402
    %v4280 = vpop.f32.mrb[0].mxu0
    %v4281 = vadd.f32 %v4088, %v4280
    %v4282 = vpop.f32.mrb[0].mxu0
    %v4283 = vadd.f32 %v4090, %v4282
    %v4284 = vpop.f32.mrb[0].mxu0
    %v4285 = vadd.f32 %v4092, %v4284
    %v4286 = vpop.f32.mrb[0].mxu0
    %v4287 = vadd.f32 %v4094, %v4286
    %4288 = vmatprep.mubr.bf16.mxu0 %v1411
    %4289 = vmatmul.mubr.bf16.gmra.mrb[0].mxu0 %v1410
    %v4290 = vpop.f32.mrb[0].mxu0
    %v4291 = vadd.f32 %v4098, %v4290
    %v4292 = vpop.f32.mrb[0].mxu0
    %v4293 = vadd.f32 %v4100, %v4292
    %v4294 = vpop.f32.mrb[0].mxu0
    %v4295 = vadd.f32 %v4102, %v4294
    %v4296 = vpop.f32.mrb[0].mxu0
    %v4297 = vadd.f32 %v4104, %v4296
    %4298 = vmatprep.mubr.bf16.mxu0 %v1419
    %4299 = vmatmul.mubr.bf16.gmra.mrb[0].mxu0 %v1418
    %v4300 = vpop.f32.mrb[0].mxu0
    %v4301 = vadd.f32 %v4108, %v4300
    %v4302 = vpop.f32.mrb[0].mxu0
    %v4303 = vadd.f32 %v4110, %v4302
    %v4304 = vpop.f32.mrb[0].mxu0
    %v4305 = vadd.f32 %v4112, %v4304
    %v4306 = vpop.f32.mrb[0].mxu0
    %v4307 = vadd.f32 %v4114, %v4306
    %4308 = vmatprep.mubr.bf16.mxu0 %v1427
    %4309 = vmatmul.mubr.bf16.gmra.mrb[0].mxu0 %v1426
    %v4310 = vpop.f32.mrb[0].mxu0
    %v4311 = vadd.f32 %v4118, %v4310
    %v4312 = vpop.f32.mrb[0].mxu0
    %v4313 = vadd.f32 %v4120, %v4312
    %v4314 = vpop.f32.mrb[0].mxu0
    %v4315 = vadd.f32 %v4122, %v4314
    %v4316 = vpop.f32.mrb[0].mxu0
    %v4317 = vadd.f32 %v4124, %v4316
    %4318 = vmatprep.mubr.bf16.mxu0 %v1435
    %4319 = vmatmul.mubr.bf16.gmra.mrb[0].mxu0 %v1434
    %v4320 = vpop.f32.mrb[0].mxu0
    %v4321 = vadd.f32 %v4128, %v4320
    %v4322 = vpop.f32.mrb[0].mxu0
    %v4323 = vadd.f32 %v4130, %v4322
    %v4324 = vpop.f32.mrb[0].mxu0
    %v4325 = vadd.f32 %v4132, %v4324
    %v4326 = vpop.f32.mrb[0].mxu0
    %v4327 = vadd.f32 %v4134, %v4326
    %4328 = vmatprep.mubr.bf16.mxu0 %v1443
    %4329 = vmatmul.mubr.bf16.gmra.mrb[0].mxu0 %v1442
    %v4330 = vpop.f32.mrb[0].mxu0
    %v4331 = vadd.f32 %v4138, %v4330
    %v4332 = vpop.f32.mrb[0].mxu0
    %v4333 = vadd.f32 %v4140, %v4332
    %v4334 = vpop.f32.mrb[0].mxu0
    %v4335 = vadd.f32 %v4142, %v4334
    %v4336 = vpop.f32.mrb[0].mxu0
    %v4337 = vadd.f32 %v4144, %v4336
    %4338 = vmatprep.mubr.bf16.mxu0 %v1451
    %4339 = vmatmul.mubr.bf16.gmra.mrb[0].mxu0 %v1450
    %v4340 = vpop.f32.mrb[0].mxu0
    %v4341 = vadd.f32 %v4148, %v4340
    %v4342 = vpop.f32.mrb[0].mxu0
    %v4343 = vadd.f32 %v4150, %v4342
    %v4344 = vpop.f32.mrb[0].mxu0
    %v4345 = vadd.f32 %v4152, %v4344
    %v4346 = vpop.f32.mrb[0].mxu0
    %v4347 = vadd.f32 %v4154, %v4346
    %4348 = vmatprep.mubr.bf16.mxu0 %v1459
    %4349 = vmatmul.mubr.bf16.gmra.mrb[0].mxu0 %v1458
    %v4350 = vpop.f32.mrb[0].mxu0
    %v4351 = vadd.f32 %v4158, %v4350
    %v4352 = vpop.f32.mrb[0].mxu0
    %v4353 = vadd.f32 %v4160, %v4352
    %v4354 = vpop.f32.mrb[0].mxu0
    %v4355 = vadd.f32 %v4162, %v4354
    %v4356 = vpop.f32.mrb[0].mxu0
    %v4357 = vadd.f32 %v4164, %v4356
    %4358 = vmatprep.mubr.bf16.mxu0 %v1467
    %4359 = vmatmul.mubr.bf16.gmra.mrb[0].mxu0 %v1466
    %v4360 = vpop.f32.mrb[0].mxu0
    %v4361 = vadd.f32 %v4168, %v4360
    %v4362 = vpop.f32.mrb[0].mxu0
    %v4363 = vadd.f32 %v4170, %v4362
    %v4364 = vpop.f32.mrb[0].mxu0
    %v4365 = vadd.f32 %v4172, %v4364
    %v4366 = vpop.f32.mrb[0].mxu0
    %v4367 = vadd.f32 %v4174, %v4366
    %4368 = vmatprep.mubr.bf16.mxu0 %v1475
    %4369 = vmatmul.mubr.bf16.gmra.mrb[0].mxu0 %v1474
    %v4370 = vpop.f32.mrb[0].mxu0
    %v4371 = vadd.f32 %v4178, %v4370
    %v4372 = vpop.f32.mrb[0].mxu0
    %v4373 = vadd.f32 %v4180, %v4372
    %v4374 = vpop.f32.mrb[0].mxu0
    %v4375 = vadd.f32 %v4182, %v4374
    %v4376 = vpop.f32.mrb[0].mxu0
    %v4377 = vadd.f32 %v4184, %v4376
    %4378 = vmatprep.mubr.bf16.mxu0 %v1483
    %4379 = vmatmul.mubr.bf16.gmra.mrb[0].mxu0 %v1482
    %v4380 = vpop.f32.mrb[0].mxu0
    %v4381 = vadd.f32 %v4188, %v4380
    %v4382 = vpop.f32.mrb[0].mxu0
    %v4383 = vadd.f32 %v4190, %v4382
    %v4384 = vpop.f32.mrb[0].mxu0
    %v4385 = vadd.f32 %v4192, %v4384
    %v4386 = vpop.f32.mrb[0].mxu0
    %v4387 = vadd.f32 %v4194, %v4386
    %4388 = vmatprep.mubr.bf16.mxu0 %v1491
    %4389 = vmatmul.mubr.bf16.gmra.mrb[0].mxu0 %v1490
    %v4390 = vpop.f32.mrb[0].mxu0
    %v4391 = vadd.f32 %v4198, %v4390
    %v4392 = vpop.f32.mrb[0].mxu0
    %v4393 = vadd.f32 %v4200, %v4392
    %v4394 = vpop.f32.mrb[0].mxu0
    %v4395 = vadd.f32 %v4202, %v4394
    %v4396 = vpop.f32.mrb[0].mxu0
    %v4397 = vadd.f32 %v4204, %v4396
    %4398 = vmatprep.mubr.bf16.mxu0 %v1499
    %4399 = vmatmul.mubr.bf16.gmra.mrb[0].mxu0 %v1498
    %v4400 = vpop.f32.mrb[0].mxu0
    %v4401 = vadd.f32 %v4208, %v4400
    %v4402 = vpop.f32.mrb[0].mxu0
    %v4403 = vadd.f32 %v4210, %v4402
    %v4404 = vpop.f32.mrb[0].mxu0
    %v4405 = vadd.f32 %v4212, %v4404
    %v4406 = vpop.f32.mrb[0].mxu0
    %v4407 = vadd.f32 %v4214, %v4406
    %4408 = vmatprep.mubr.bf16.mxu0 %v1507
    %4409 = vmatmul.mubr.bf16.gmra.mrb[0].mxu0 %v1506
    %v4410 = vpop.f32.mrb[0].mxu0
    %v4411 = vadd.f32 %v4218, %v4410
    %v4412 = vpop.f32.mrb[0].mxu0
    %v4413 = vadd.f32 %v4220, %v4412
    %v4414 = vpop.f32.mrb[0].mxu0
    %v4415 = vadd.f32 %v4222, %v4414
    %v4416 = vpop.f32.mrb[0].mxu0
    %v4417 = vadd.f32 %v4224, %v4416
    %4418 = vdwg.mxu0
    %4419 = vmatprep.subr.bf16.mxu0 %v2751
    %4420 = vmatpush1.bf16.msra.mxu0 %v2750
    %4421 = vmatprep.subr.bf16.mxu0 %v2755
    %4422 = vmatpush1.bf16.msra.mxu0 %v2754
    %4423 = vmatprep.subr.bf16.mxu0 %v2759
    %4424 = vmatpush1.bf16.msra.mxu0 %v2758
    %4425 = vmatprep.subr.bf16.mxu0 %v2763
    %4426 = vmatpush1.bf16.msra.mxu0 %v2762
    %4427 = vmatprep.subr.bf16.mxu0 %v2767
    %4428 = vmatpush1.bf16.msra.mxu0 %v2766
    %4429 = vmatprep.subr.bf16.mxu0 %v2771
    %4430 = vmatpush1.bf16.msra.mxu0 %v2770
    %4431 = vmatprep.subr.bf16.mxu0 %v2775
    %4432 = vmatpush1.bf16.msra.mxu0 %v2774
    %4433 = vmatprep.subr.bf16.mxu0 %v2779
    %4434 = vmatpush1.bf16.msra.mxu0 %v2778
    %4435 = vmatprep.subr.bf16.mxu0 %v2783
    %4436 = vmatpush1.bf16.msra.mxu0 %v2782
    %4437 = vmatprep.subr.bf16.mxu0 %v2787
    %4438 = vmatpush1.bf16.msra.mxu0 %v2786
    %4439 = vmatprep.subr.bf16.mxu0 %v2791
    %4440 = vmatpush1.bf16.msra.mxu0 %v2790
    %4441 = vmatprep.subr.bf16.mxu0 %v2795
    %4442 = vmatpush1.bf16.msra.mxu0 %v2794
    %4443 = vmatprep.subr.bf16.mxu0 %v2799
    %4444 = vmatpush1.bf16.msra.mxu0 %v2798
    %4445 = vmatprep.subr.bf16.mxu0 %v2803
    %4446 = vmatpush1.bf16.msra.mxu0 %v2802
    %4447 = vmatprep.subr.bf16.mxu0 %v2807
    %4448 = vmatpush1.bf16.msra.mxu0 %v2806
    %4449 = vmatprep.subr.bf16.mxu0 %v2811
    %4450 = vmatpush1.bf16.msra.mxu0 %v2810
    %4451 = vmatprep.mubr.bf16.mxu0 %v1389
    %4452 = vmatmul.mubr.bf16.gmra.mrb[0].mxu0 %v1388
    %v4453 = vpop.f32.mrb[0].mxu0
    %v4454 = vadd.f32 %v4261, %v4453
    %v4455 = vpop.f32.mrb[0].mxu0
    %v4456 = vadd.f32 %v4263, %v4455
    %v4457 = vpop.f32.mrb[0].mxu0
    %v4458 = vadd.f32 %v4265, %v4457
    %v4459 = vpop.f32.mrb[0].mxu0
    %v4460 = vadd.f32 %v4267, %v4459
    %4461 = vmatprep.mubr.bf16.mxu0 %v1397
    %4462 = vmatmul.mubr.bf16.gmra.mrb[0].mxu0 %v1396
    %v4463 = vpop.f32.mrb[0].mxu0
    %v4464 = vadd.f32 %v4271, %v4463
    %v4465 = vpop.f32.mrb[0].mxu0
    %v4466 = vadd.f32 %v4273, %v4465
    %v4467 = vpop.f32.mrb[0].mxu0
    %v4468 = vadd.f32 %v4275, %v4467
    %v4469 = vpop.f32.mrb[0].mxu0
    %v4470 = vadd.f32 %v4277, %v4469
    %4471 = vmatprep.mubr.bf16.mxu0 %v1405
    %4472 = vmatmul.mubr.bf16.gmra.mrb[0].mxu0 %v1404
    %v4473 = vpop.f32.mrb[0].mxu0
    %v4474 = vadd.f32 %v4281, %v4473
    %v4475 = vpop.f32.mrb[0].mxu0
    %v4476 = vadd.f32 %v4283, %v4475
    %v4477 = vpop.f32.mrb[0].mxu0
    %v4478 = vadd.f32 %v4285, %v4477
    %v4479 = vpop.f32.mrb[0].mxu0
    %v4480 = vadd.f32 %v4287, %v4479
    %4481 = vmatprep.mubr.bf16.mxu0 %v1413
    %4482 = vmatmul.mubr.bf16.gmra.mrb[0].mxu0 %v1412
    %v4483 = vpop.f32.mrb[0].mxu0
    %v4484 = vadd.f32 %v4291, %v4483
    %v4485 = vpop.f32.mrb[0].mxu0
    %v4486 = vadd.f32 %v4293, %v4485
    %v4487 = vpop.f32.mrb[0].mxu0
    %v4488 = vadd.f32 %v4295, %v4487
    %v4489 = vpop.f32.mrb[0].mxu0
    %v4490 = vadd.f32 %v4297, %v4489
    %4491 = vmatprep.mubr.bf16.mxu0 %v1421
    %4492 = vmatmul.mubr.bf16.gmra.mrb[0].mxu0 %v1420
    %v4493 = vpop.f32.mrb[0].mxu0
    %v4494 = vadd.f32 %v4301, %v4493
    %v4495 = vpop.f32.mrb[0].mxu0
    %v4496 = vadd.f32 %v4303, %v4495
    %v4497 = vpop.f32.mrb[0].mxu0
    %v4498 = vadd.f32 %v4305, %v4497
    %v4499 = vpop.f32.mrb[0].mxu0
    %v4500 = vadd.f32 %v4307, %v4499
    %4501 = vmatprep.mubr.bf16.mxu0 %v1429
    %4502 = vmatmul.mubr.bf16.gmra.mrb[0].mxu0 %v1428
    %v4503 = vpop.f32.mrb[0].mxu0
    %v4504 = vadd.f32 %v4311, %v4503
    %v4505 = vpop.f32.mrb[0].mxu0
    %v4506 = vadd.f32 %v4313, %v4505
    %v4507 = vpop.f32.mrb[0].mxu0
    %v4508 = vadd.f32 %v4315, %v4507
    %v4509 = vpop.f32.mrb[0].mxu0
    %v4510 = vadd.f32 %v4317, %v4509
    %4511 = vmatprep.mubr.bf16.mxu0 %v1437
    %4512 = vmatmul.mubr.bf16.gmra.mrb[0].mxu0 %v1436
    %v4513 = vpop.f32.mrb[0].mxu0
    %v4514 = vadd.f32 %v4321, %v4513
    %v4515 = vpop.f32.mrb[0].mxu0
    %v4516 = vadd.f32 %v4323, %v4515
    %v4517 = vpop.f32.mrb[0].mxu0
    %v4518 = vadd.f32 %v4325, %v4517
    %v4519 = vpop.f32.mrb[0].mxu0
    %v4520 = vadd.f32 %v4327, %v4519
    %4521 = vmatprep.mubr.bf16.mxu0 %v1445
    %4522 = vmatmul.mubr.bf16.gmra.mrb[0].mxu0 %v1444
    %v4523 = vpop.f32.mrb[0].mxu0
    %v4524 = vadd.f32 %v4331, %v4523
    %v4525 = vpop.f32.mrb[0].mxu0
    %v4526 = vadd.f32 %v4333, %v4525
    %v4527 = vpop.f32.mrb[0].mxu0
    %v4528 = vadd.f32 %v4335, %v4527
    %v4529 = vpop.f32.mrb[0].mxu0
    %v4530 = vadd.f32 %v4337, %v4529
    %4531 = vmatprep.mubr.bf16.mxu0 %v1453
    %4532 = vmatmul.mubr.bf16.gmra.mrb[0].mxu0 %v1452
    %v4533 = vpop.f32.mrb[0].mxu0
    %v4534 = vadd.f32 %v4341, %v4533
    %v4535 = vpop.f32.mrb[0].mxu0
    %v4536 = vadd.f32 %v4343, %v4535
    %v4537 = vpop.f32.mrb[0].mxu0
    %v4538 = vadd.f32 %v4345, %v4537
    %v4539 = vpop.f32.mrb[0].mxu0
    %v4540 = vadd.f32 %v4347, %v4539
    %4541 = vmatprep.mubr.bf16.mxu0 %v1461
    %4542 = vmatmul.mubr.bf16.gmra.mrb[0].mxu0 %v1460
    %v4543 = vpop.f32.mrb[0].mxu0
    %v4544 = vadd.f32 %v4351, %v4543
    %v4545 = vpop.f32.mrb[0].mxu0
    %v4546 = vadd.f32 %v4353, %v4545
    %v4547 = vpop.f32.mrb[0].mxu0
    %v4548 = vadd.f32 %v4355, %v4547
    %v4549 = vpop.f32.mrb[0].mxu0
    %v4550 = vadd.f32 %v4357, %v4549
    %4551 = vmatprep.mubr.bf16.mxu0 %v1469
    %4552 = vmatmul.mubr.bf16.gmra.mrb[0].mxu0 %v1468
    %v4553 = vpop.f32.mrb[0].mxu0
    %v4554 = vadd.f32 %v4361, %v4553
    %v4555 = vpop.f32.mrb[0].mxu0
    %v4556 = vadd.f32 %v4363, %v4555
    %v4557 = vpop.f32.mrb[0].mxu0
    %v4558 = vadd.f32 %v4365, %v4557
    %v4559 = vpop.f32.mrb[0].mxu0
    %v4560 = vadd.f32 %v4367, %v4559
    %4561 = vmatprep.mubr.bf16.mxu0 %v1477
    %4562 = vmatmul.mubr.bf16.gmra.mrb[0].mxu0 %v1476
    %v4563 = vpop.f32.mrb[0].mxu0
    %v4564 = vadd.f32 %v4371, %v4563
    %v4565 = vpop.f32.mrb[0].mxu0
    %v4566 = vadd.f32 %v4373, %v4565
    %v4567 = vpop.f32.mrb[0].mxu0
    %v4568 = vadd.f32 %v4375, %v4567
    %v4569 = vpop.f32.mrb[0].mxu0
    %v4570 = vadd.f32 %v4377, %v4569
    %4571 = vmatprep.mubr.bf16.mxu0 %v1485
    %4572 = vmatmul.mubr.bf16.gmra.mrb[0].mxu0 %v1484
    %v4573 = vpop.f32.mrb[0].mxu0
    %v4574 = vadd.f32 %v4381, %v4573
    %v4575 = vpop.f32.mrb[0].mxu0
    %v4576 = vadd.f32 %v4383, %v4575
    %v4577 = vpop.f32.mrb[0].mxu0
    %v4578 = vadd.f32 %v4385, %v4577
    %v4579 = vpop.f32.mrb[0].mxu0
    %v4580 = vadd.f32 %v4387, %v4579
    %4581 = vmatprep.mubr.bf16.mxu0 %v1493
    %4582 = vmatmul.mubr.bf16.gmra.mrb[0].mxu0 %v1492
    %v4583 = vpop.f32.mrb[0].mxu0
    %v4584 = vadd.f32 %v4391, %v4583
    %v4585 = vpop.f32.mrb[0].mxu0
    %v4586 = vadd.f32 %v4393, %v4585
    %v4587 = vpop.f32.mrb[0].mxu0
    %v4588 = vadd.f32 %v4395, %v4587
    %v4589 = vpop.f32.mrb[0].mxu0
    %v4590 = vadd.f32 %v4397, %v4589
    %4591 = vmatprep.mubr.bf16.mxu0 %v1501
    %4592 = vmatmul.mubr.bf16.gmra.mrb[0].mxu0 %v1500
    %v4593 = vpop.f32.mrb[0].mxu0
    %v4594 = vadd.f32 %v4401, %v4593
    %v4595 = vpop.f32.mrb[0].mxu0
    %v4596 = vadd.f32 %v4403, %v4595
    %v4597 = vpop.f32.mrb[0].mxu0
    %v4598 = vadd.f32 %v4405, %v4597
    %v4599 = vpop.f32.mrb[0].mxu0
    %v4600 = vadd.f32 %v4407, %v4599
    %4601 = vmatprep.mubr.bf16.mxu0 %v1509
    %4602 = vmatmul.mubr.bf16.gmra.mrb[0].mxu0 %v1508
    %v4603 = vpop.f32.mrb[0].mxu0
    %v4604 = vadd.f32 %v4411, %v4603
    %v4605 = vpop.f32.mrb[0].mxu0
    %v4606 = vadd.f32 %v4413, %v4605
    %v4607 = vpop.f32.mrb[0].mxu0
    %v4608 = vadd.f32 %v4415, %v4607
    %v4609 = vpop.f32.mrb[0].mxu0
    %v4610 = vadd.f32 %v4417, %v4609
    %4611 = vdwg.mxu0
    %v4612 = vmax.f32 %v3682, 0.0
    %v4613 = vmax.f32 %v3684, 0.0
    %v4614 = vmax.f32 %v4454, 0.0
    %v4615 = vmax.f32 %v4456, 0.0
    %v4616 = vmax.f32 %v3686, 0.0
    %v4617 = vmax.f32 %v3688, 0.0
    %v4618 = vmax.f32 %v4458, 0.0
    %v4619 = vmax.f32 %v4460, 0.0
    %v4620 = vmax.f32 %v3692, 0.0
    %v4621 = vmax.f32 %v3694, 0.0
    %v4622 = vmax.f32 %v4464, 0.0
    %v4623 = vmax.f32 %v4466, 0.0
    %v4624 = vmax.f32 %v3696, 0.0
    %v4625 = vmax.f32 %v3698, 0.0
    %v4626 = vmax.f32 %v4468, 0.0
    %v4627 = vmax.f32 %v4470, 0.0
    %v4628 = vmax.f32 %v3702, 0.0
    %v4629 = vmax.f32 %v3704, 0.0
    %v4630 = vmax.f32 %v4474, 0.0
    %v4631 = vmax.f32 %v4476, 0.0
    %v4632 = vmax.f32 %v3706, 0.0
    %v4633 = vmax.f32 %v3708, 0.0
    %v4634 = vmax.f32 %v4478, 0.0
    %v4635 = vmax.f32 %v4480, 0.0
    %v4636 = vmax.f32 %v3712, 0.0
    %v4637 = vmax.f32 %v3714, 0.0
    %v4638 = vmax.f32 %v4484, 0.0
    %v4639 = vmax.f32 %v4486, 0.0
    %v4640 = vmax.f32 %v3716, 0.0
    %v4641 = vmax.f32 %v3718, 0.0
    %v4642 = vmax.f32 %v4488, 0.0
    %v4643 = vmax.f32 %v4490, 0.0
    %v4644 = vmax.f32 %v3722, 0.0
    %v4645 = vmax.f32 %v3724, 0.0
    %v4646 = vmax.f32 %v4494, 0.0
    %v4647 = vmax.f32 %v4496, 0.0
    %v4648 = vmax.f32 %v3726, 0.0
    %v4649 = vmax.f32 %v3728, 0.0
    %v4650 = vmax.f32 %v4498, 0.0
    %v4651 = vmax.f32 %v4500, 0.0
    %v4652 = vmax.f32 %v3732, 0.0
    %v4653 = vmax.f32 %v3734, 0.0
    %v4654 = vmax.f32 %v4504, 0.0
    %v4655 = vmax.f32 %v4506, 0.0
    %v4656 = vmax.f32 %v3736, 0.0
    %v4657 = vmax.f32 %v3738, 0.0
    %v4658 = vmax.f32 %v4508, 0.0
    %v4659 = vmax.f32 %v4510, 0.0
    %v4660 = vmax.f32 %v3742, 0.0
    %v4661 = vmax.f32 %v3744, 0.0
    %v4662 = vmax.f32 %v4514, 0.0
    %v4663 = vmax.f32 %v4516, 0.0
    %v4664 = vmax.f32 %v3746, 0.0
    %v4665 = vmax.f32 %v3748, 0.0
    %v4666 = vmax.f32 %v4518, 0.0
    %v4667 = vmax.f32 %v4520, 0.0
    %v4668 = vmax.f32 %v3752, 0.0
    %v4669 = vmax.f32 %v3754, 0.0
    %v4670 = vmax.f32 %v4524, 0.0
    %v4671 = vmax.f32 %v4526, 0.0
    %v4672 = vmax.f32 %v3756, 0.0
    %v4673 = vmax.f32 %v3758, 0.0
    %v4674 = vmax.f32 %v4528, 0.0
    %v4675 = vmax.f32 %v4530, 0.0
    %v4676 = vmax.f32 %v3762, 0.0
    %v4677 = vmax.f32 %v3764, 0.0
    %v4678 = vmax.f32 %v4534, 0.0
    %v4679 = vmax.f32 %v4536, 0.0
    %v4680 = vmax.f32 %v3766, 0.0
    %v4681 = vmax.f32 %v3768, 0.0
    %v4682 = vmax.f32 %v4538, 0.0
    %v4683 = vmax.f32 %v4540, 0.0
    %v4684 = vmax.f32 %v3772, 0.0
    %v4685 = vmax.f32 %v3774, 0.0
    %v4686 = vmax.f32 %v4544, 0.0
    %v4687 = vmax.f32 %v4546, 0.0
    %v4688 = vmax.f32 %v3776, 0.0
    %v4689 = vmax.f32 %v3778, 0.0
    %v4690 = vmax.f32 %v4548, 0.0
    %v4691 = vmax.f32 %v4550, 0.0
    %v4692 = vmax.f32 %v3782, 0.0
    %v4693 = vmax.f32 %v3784, 0.0
    %v4694 = vmax.f32 %v4554, 0.0
    %v4695 = vmax.f32 %v4556, 0.0
    %v4696 = vmax.f32 %v3786, 0.0
    %v4697 = vmax.f32 %v3788, 0.0
    %v4698 = vmax.f32 %v4558, 0.0
    %v4699 = vmax.f32 %v4560, 0.0
    %v4700 = vmax.f32 %v3792, 0.0
    %v4701 = vmax.f32 %v3794, 0.0
    %v4702 = vmax.f32 %v4564, 0.0
    %v4703 = vmax.f32 %v4566, 0.0
    %v4704 = vmax.f32 %v3796, 0.0
    %v4705 = vmax.f32 %v3798, 0.0
    %v4706 = vmax.f32 %v4568, 0.0
    %v4707 = vmax.f32 %v4570, 0.0
    %v4708 = vmax.f32 %v3802, 0.0
    %v4709 = vmax.f32 %v3804, 0.0
    %v4710 = vmax.f32 %v4574, 0.0
    %v4711 = vmax.f32 %v4576, 0.0
    %v4712 = vmax.f32 %v3806, 0.0
    %v4713 = vmax.f32 %v3808, 0.0
    %v4714 = vmax.f32 %v4578, 0.0
    %v4715 = vmax.f32 %v4580, 0.0
    %v4716 = vmax.f32 %v3812, 0.0
    %v4717 = vmax.f32 %v3814, 0.0
    %v4718 = vmax.f32 %v4584, 0.0
    %v4719 = vmax.f32 %v4586, 0.0
    %v4720 = vmax.f32 %v3816, 0.0
    %v4721 = vmax.f32 %v3818, 0.0
    %v4722 = vmax.f32 %v4588, 0.0
    %v4723 = vmax.f32 %v4590, 0.0
    %v4724 = vmax.f32 %v3822, 0.0
    %v4725 = vmax.f32 %v3824, 0.0
    %v4726 = vmax.f32 %v4594, 0.0
    %v4727 = vmax.f32 %v4596, 0.0
    %v4728 = vmax.f32 %v3826, 0.0
    %v4729 = vmax.f32 %v3828, 0.0
    %v4730 = vmax.f32 %v4598, 0.0
    %v4731 = vmax.f32 %v4600, 0.0
    %v4732 = vmax.f32 %v3832, 0.0
    %v4733 = vmax.f32 %v3834, 0.0
    %v4734 = vmax.f32 %v4604, 0.0
    %v4735 = vmax.f32 %v4606, 0.0
    %v4736 = vmax.f32 %v3836, 0.0
    %v4737 = vmax.f32 %v3838, 0.0
    %v4738 = vmax.f32 %v4608, 0.0
    %v4739 = vmax.f32 %v4610, 0.0
    %v4740 = vpack.c.bf16 %v4616, %v4612
    %v4741 = vpack.c.bf16 %v4617, %v4613
    %v4742 = vpack.c.bf16 %v4618, %v4614
    %v4743 = vpack.c.bf16 %v4619, %v4615
    %v4744 = vpack.c.bf16 %v4624, %v4620
    %v4745 = vpack.c.bf16 %v4625, %v4621
    %v4746 = vpack.c.bf16 %v4626, %v4622
    %v4747 = vpack.c.bf16 %v4627, %v4623
    %v4748 = vpack.c.bf16 %v4632, %v4628
    %v4749 = vpack.c.bf16 %v4633, %v4629
    %v4750 = vpack.c.bf16 %v4634, %v4630
    %v4751 = vpack.c.bf16 %v4635, %v4631
    %v4752 = vpack.c.bf16 %v4640, %v4636
    %v4753 = vpack.c.bf16 %v4641, %v4637
    %v4754 = vpack.c.bf16 %v4642, %v4638
    %v4755 = vpack.c.bf16 %v4643, %v4639
    %v4756 = vpack.c.bf16 %v4648, %v4644
    %v4757 = vpack.c.bf16 %v4649, %v4645
    %v4758 = vpack.c.bf16 %v4650, %v4646
    %v4759 = vpack.c.bf16 %v4651, %v4647
    %v4760 = vpack.c.bf16 %v4656, %v4652
    %v4761 = vpack.c.bf16 %v4657, %v4653
    %v4762 = vpack.c.bf16 %v4658, %v4654
    %v4763 = vpack.c.bf16 %v4659, %v4655
    %v4764 = vpack.c.bf16 %v4664, %v4660
    %v4765 = vpack.c.bf16 %v4665, %v4661
    %v4766 = vpack.c.bf16 %v4666, %v4662
    %v4767 = vpack.c.bf16 %v4667, %v4663
    %v4768 = vpack.c.bf16 %v4672, %v4668
    %v4769 = vpack.c.bf16 %v4673, %v4669
    %v4770 = vpack.c.bf16 %v4674, %v4670
    %v4771 = vpack.c.bf16 %v4675, %v4671
    %v4772 = vpack.c.bf16 %v4680, %v4676
    %v4773 = vpack.c.bf16 %v4681, %v4677
    %v4774 = vpack.c.bf16 %v4682, %v4678
    %v4775 = vpack.c.bf16 %v4683, %v4679
    %v4776 = vpack.c.bf16 %v4688, %v4684
    %v4777 = vpack.c.bf16 %v4689, %v4685
    %v4778 = vpack.c.bf16 %v4690, %v4686
    %v4779 = vpack.c.bf16 %v4691, %v4687
    %v4780 = vpack.c.bf16 %v4696, %v4692
    %v4781 = vpack.c.bf16 %v4697, %v4693
    %v4782 = vpack.c.bf16 %v4698, %v4694
    %v4783 = vpack.c.bf16 %v4699, %v4695
    %v4784 = vpack.c.bf16 %v4704, %v4700
    %v4785 = vpack.c.bf16 %v4705, %v4701
    %v4786 = vpack.c.bf16 %v4706, %v4702
    %v4787 = vpack.c.bf16 %v4707, %v4703
    %v4788 = vpack.c.bf16 %v4712, %v4708
    %v4789 = vpack.c.bf16 %v4713, %v4709
    %v4790 = vpack.c.bf16 %v4714, %v4710
    %v4791 = vpack.c.bf16 %v4715, %v4711
    %v4792 = vpack.c.bf16 %v4720, %v4716
    %v4793 = vpack.c.bf16 %v4721, %v4717
    %v4794 = vpack.c.bf16 %v4722, %v4718
    %v4795 = vpack.c.bf16 %v4723, %v4719
    %v4796 = vpack.c.bf16 %v4728, %v4724
    %v4797 = vpack.c.bf16 %v4729, %v4725
    %v4798 = vpack.c.bf16 %v4730, %v4726
    %v4799 = vpack.c.bf16 %v4731, %v4727
    %v4800 = vpack.c.bf16 %v4736, %v4732
    %v4801 = vpack.c.bf16 %v4737, %v4733
    %v4802 = vpack.c.bf16 %v4738, %v4734
    %v4803 = vpack.c.bf16 %v4739, %v4735
    %v4804 = vld [vmem:[%s5] sm:$0xf]
    %v4805 = vld [vmem:[%s5 + $0x4] sm:$0xf]
    %v4806 = vld [vmem:[%s5 + $0x8] sm:$0xf]
    %v4807 = vld [vmem:[%s5 + $0xc] sm:$0xf]
    %v4808 = vld [vmem:[%s5 + $0x10] sm:$0xf]
    %v4809 = vld [vmem:[%s5 + $0x14] sm:$0xf]
    %v4810 = vld [vmem:[%s5 + $0x18] sm:$0xf]
    %v4811 = vld [vmem:[%s5 + $0x1c] sm:$0xf]
    %v4812 = vld [vmem:[%s5 + $0x20] sm:$0xf]
    %v4813 = vld [vmem:[%s5 + $0x24] sm:$0xf]
    %v4814 = vld [vmem:[%s5 + $0x28] sm:$0xf]
    %v4815 = vld [vmem:[%s5 + $0x2c] sm:$0xf]
    %v4816 = vld [vmem:[%s5 + $0x30] sm:$0xf]
    %v4817 = vld [vmem:[%s5 + $0x34] sm:$0xf]
    %v4818 = vld [vmem:[%s5 + $0x38] sm:$0xf]
    %v4819 = vld [vmem:[%s5 + $0x3c] sm:$0xf]
    %v4820 = vld [vmem:[%s5 + $0x40] sm:$0xf]
    %v4821 = vld [vmem:[%s5 + $0x44] sm:$0xf]
    %v4822 = vld [vmem:[%s5 + $0x48] sm:$0xf]
    %v4823 = vld [vmem:[%s5 + $0x4c] sm:$0xf]
    %v4824 = vld [vmem:[%s5 + $0x50] sm:$0xf]
    %v4825 = vld [vmem:[%s5 + $0x54] sm:$0xf]
    %v4826 = vld [vmem:[%s5 + $0x58] sm:$0xf]
    %v4827 = vld [vmem:[%s5 + $0x5c] sm:$0xf]
    %v4828 = vld [vmem:[%s5 + $0x60] sm:$0xf]
    %v4829 = vld [vmem:[%s5 + $0x64] sm:$0xf]
    %v4830 = vld [vmem:[%s5 + $0x68] sm:$0xf]
    %v4831 = vld [vmem:[%s5 + $0x6c] sm:$0xf]
    %v4832 = vld [vmem:[%s5 + $0x70] sm:$0xf]
    %v4833 = vld [vmem:[%s5 + $0x74] sm:$0xf]
    %v4834 = vld [vmem:[%s5 + $0x78] sm:$0xf]
    %v4835 = vld [vmem:[%s5 + $0x7c] sm:$0xf]
    %v4836 = vld [vmem:[%s5 + $0x80] sm:$0xf]
    %v4837 = vld [vmem:[%s5 + $0x84] sm:$0xf]
    %v4838 = vld [vmem:[%s5 + $0x88] sm:$0xf]
    %v4839 = vld [vmem:[%s5 + $0x8c] sm:$0xf]
    %v4840 = vld [vmem:[%s5 + $0x90] sm:$0xf]
    %v4841 = vld [vmem:[%s5 + $0x94] sm:$0xf]
    %v4842 = vld [vmem:[%s5 + $0x98] sm:$0xf]
    %v4843 = vld [vmem:[%s5 + $0x9c] sm:$0xf]
    %v4844 = vld [vmem:[%s5 + $0xa0] sm:$0xf]
    %v4845 = vld [vmem:[%s5 + $0xa4] sm:$0xf]
    %v4846 = vld [vmem:[%s5 + $0xa8] sm:$0xf]
    %v4847 = vld [vmem:[%s5 + $0xac] sm:$0xf]
    %v4848 = vld [vmem:[%s5 + $0xb0] sm:$0xf]
    %v4849 = vld [vmem:[%s5 + $0xb4] sm:$0xf]
    %v4850 = vld [vmem:[%s5 + $0xb8] sm:$0xf]
    %v4851 = vld [vmem:[%s5 + $0xbc] sm:$0xf]
    %v4852 = vld [vmem:[%s5 + $0xc0] sm:$0xf]
    %v4853 = vld [vmem:[%s5 + $0xc4] sm:$0xf]
    %v4854 = vld [vmem:[%s5 + $0xc8] sm:$0xf]
    %v4855 = vld [vmem:[%s5 + $0xcc] sm:$0xf]
    %v4856 = vld [vmem:[%s5 + $0xd0] sm:$0xf]
    %v4857 = vld [vmem:[%s5 + $0xd4] sm:$0xf]
    %v4858 = vld [vmem:[%s5 + $0xd8] sm:$0xf]
    %v4859 = vld [vmem:[%s5 + $0xdc] sm:$0xf]
    %v4860 = vld [vmem:[%s5 + $0xe0] sm:$0xf]
    %v4861 = vld [vmem:[%s5 + $0xe4] sm:$0xf]
    %v4862 = vld [vmem:[%s5 + $0xe8] sm:$0xf]
    %v4863 = vld [vmem:[%s5 + $0xec] sm:$0xf]
    %v4864 = vld [vmem:[%s5 + $0xf0] sm:$0xf]
    %v4865 = vld [vmem:[%s5 + $0xf4] sm:$0xf]
    %v4866 = vld [vmem:[%s5 + $0xf8] sm:$0xf]
    %v4867 = vld [vmem:[%s5 + $0xfc] sm:$0xf]
    %v4868 = vld [vmem:[%s6] sm:$0x1]
    %v4870 = vlaneseq
    %v4871 = vshrl.u32 %v4870, 7
    %v4872 = vsub.s32 0, %v4871
    %v4873 = vrot.slane %v4868, %v4872
    %v4939 = vunpack.c.l.b16 %v4804
    %v4940 = vunpack.c.l.b16 %v4805
    %v4941 = vunpack.c.l.b16 %v4806
    %v4942 = vunpack.c.l.b16 %v4807
    %v4943 = vunpack.c.l.b16 %v4808
    %v4944 = vunpack.c.l.b16 %v4809
    %v4945 = vunpack.c.l.b16 %v4810
    %v4946 = vunpack.c.l.b16 %v4811
    %v4947 = vunpack.c.l.b16 %v4812
    %v4948 = vunpack.c.l.b16 %v4813
    %v4949 = vunpack.c.l.b16 %v4814
    %v4950 = vunpack.c.l.b16 %v4815
    %v4951 = vunpack.c.l.b16 %v4816
    %v4952 = vunpack.c.l.b16 %v4817
    %v4953 = vunpack.c.l.b16 %v4818
    %v4954 = vunpack.c.l.b16 %v4819
    %v4955 = vunpack.c.l.b16 %v4820
    %v4956 = vunpack.c.l.b16 %v4821
    %v4957 = vunpack.c.l.b16 %v4822
    %v4958 = vunpack.c.l.b16 %v4823
    %v4959 = vunpack.c.l.b16 %v4824
    %v4960 = vunpack.c.l.b16 %v4825
    %v4961 = vunpack.c.l.b16 %v4826
    %v4962 = vunpack.c.l.b16 %v4827
    %v4963 = vunpack.c.l.b16 %v4828
    %v4964 = vunpack.c.l.b16 %v4829
    %v4965 = vunpack.c.l.b16 %v4830
    %v4966 = vunpack.c.l.b16 %v4831
    %v4967 = vunpack.c.l.b16 %v4832
    %v4968 = vunpack.c.l.b16 %v4833
    %v4969 = vunpack.c.l.b16 %v4834
    %v4970 = vunpack.c.l.b16 %v4835
    %v4971 = vunpack.c.l.b16 %v4836
    %v4972 = vunpack.c.l.b16 %v4837
    %v4973 = vunpack.c.l.b16 %v4838
    %v4974 = vunpack.c.l.b16 %v4839
    %v4975 = vunpack.c.l.b16 %v4840
    %v4976 = vunpack.c.l.b16 %v4841
    %v4977 = vunpack.c.l.b16 %v4842
    %v4978 = vunpack.c.l.b16 %v4843
    %v4979 = vunpack.c.l.b16 %v4844
    %v4980 = vunpack.c.l.b16 %v4845
    %v4981 = vunpack.c.l.b16 %v4846
    %v4982 = vunpack.c.l.b16 %v4847
    %v4983 = vunpack.c.l.b16 %v4848
    %v4984 = vunpack.c.l.b16 %v4849
    %v4985 = vunpack.c.l.b16 %v4850
    %v4986 = vunpack.c.l.b16 %v4851
    %v4987 = vunpack.c.l.b16 %v4852
    %v4988 = vunpack.c.l.b16 %v4853
    %v4989 = vunpack.c.l.b16 %v4854
    %v4990 = vunpack.c.l.b16 %v4855
    %v4991 = vunpack.c.l.b16 %v4856
    %v4992 = vunpack.c.l.b16 %v4857
    %v4993 = vunpack.c.l.b16 %v4858
    %v4994 = vunpack.c.l.b16 %v4859
    %v4995 = vunpack.c.l.b16 %v4860
    %v4996 = vunpack.c.l.b16 %v4861
    %v4997 = vunpack.c.l.b16 %v4862
    %v4998 = vunpack.c.l.b16 %v4863
    %v4999 = vunpack.c.l.b16 %v4864
    %v5000 = vunpack.c.l.b16 %v4865
    %v5001 = vunpack.c.l.b16 %v4866
    %v5002 = vunpack.c.l.b16 %v4867
    %v5003 = vpack.c.b16 %v4940, %v4939
    %v5004 = vpack.c.b16 %v4942, %v4941
    %v5005 = vpack.c.b16 %v4944, %v4943
    %v5006 = vpack.c.b16 %v4946, %v4945
    %v5007 = vpack.c.b16 %v4948, %v4947
    %v5008 = vpack.c.b16 %v4950, %v4949
    %v5009 = vpack.c.b16 %v4952, %v4951
    %v5010 = vpack.c.b16 %v4954, %v4953
    %v5011 = vpack.c.b16 %v4956, %v4955
    %v5012 = vpack.c.b16 %v4958, %v4957
    %v5013 = vpack.c.b16 %v4960, %v4959
    %v5014 = vpack.c.b16 %v4962, %v4961
    %v5015 = vpack.c.b16 %v4964, %v4963
    %v5016 = vpack.c.b16 %v4966, %v4965
    %v5017 = vpack.c.b16 %v4968, %v4967
    %v5018 = vpack.c.b16 %v4970, %v4969
    %v5019 = vpack.c.b16 %v4972, %v4971
    %v5020 = vpack.c.b16 %v4974, %v4973
    %v5021 = vpack.c.b16 %v4976, %v4975
    %v5022 = vpack.c.b16 %v4978, %v4977
    %v5023 = vpack.c.b16 %v4980, %v4979
    %v5024 = vpack.c.b16 %v4982, %v4981
    %v5025 = vpack.c.b16 %v4984, %v4983
    %v5026 = vpack.c.b16 %v4986, %v4985
    %v5027 = vpack.c.b16 %v4988, %v4987
    %v5028 = vpack.c.b16 %v4990, %v4989
    %v5029 = vpack.c.b16 %v4992, %v4991
    %v5030 = vpack.c.b16 %v4994, %v4993
    %v5031 = vpack.c.b16 %v4996, %v4995
    %v5032 = vpack.c.b16 %v4998, %v4997
    %v5033 = vpack.c.b16 %v5000, %v4999
    %v5034 = vpack.c.b16 %v5002, %v5001
    %5067 = vmatprep.subr.bf16.mxu0 0
    %5068 = vmatpush1.bf16.msra.mxu0 %v5003
    %5069 = vmatprep.subr.bf16.mxu0 0
    %5070 = vmatpush1.bf16.msra.mxu0 %v5004
    %5071 = vmatprep.subr.bf16.mxu0 0
    %5072 = vmatpush1.bf16.msra.mxu0 %v5005
    %5073 = vmatprep.subr.bf16.mxu0 0
    %5074 = vmatpush1.bf16.msra.mxu0 %v5006
    %5075 = vmatprep.subr.bf16.mxu0 0
    %5076 = vmatpush1.bf16.msra.mxu0 %v5007
    %5077 = vmatprep.subr.bf16.mxu0 0
    %5078 = vmatpush1.bf16.msra.mxu0 %v5008
    %5079 = vmatprep.subr.bf16.mxu0 0
    %5080 = vmatpush1.bf16.msra.mxu0 %v5009
    %5081 = vmatprep.subr.bf16.mxu0 0
    %5082 = vmatpush1.bf16.msra.mxu0 %v5010
    %5083 = vmatprep.subr.bf16.mxu0 0
    %5084 = vmatpush1.bf16.msra.mxu0 %v5011
    %5085 = vmatprep.subr.bf16.mxu0 0
    %5086 = vmatpush1.bf16.msra.mxu0 %v5012
    %5087 = vmatprep.subr.bf16.mxu0 0
    %5088 = vmatpush1.bf16.msra.mxu0 %v5013
    %5089 = vmatprep.subr.bf16.mxu0 0
    %5090 = vmatpush1.bf16.msra.mxu0 %v5014
    %5091 = vmatprep.subr.bf16.mxu0 0
    %5092 = vmatpush1.bf16.msra.mxu0 %v5015
    %5093 = vmatprep.subr.bf16.mxu0 0
    %5094 = vmatpush1.bf16.msra.mxu0 %v5016
    %5095 = vmatprep.subr.bf16.mxu0 0
    %5096 = vmatpush1.bf16.msra.mxu0 %v5017
    %5097 = vmatprep.subr.bf16.mxu0 0
    %5098 = vmatpush1.bf16.msra.mxu0 %v5018
    %5099 = vmatprep.mubr.bf16.mxu0 %v4741
    %5100 = vmatmul.mubr.bf16.gmra.mrb[0].mxu0 %v4740
    %v5101 = vpop.f32.mrb[0].mxu0
    %v5102 = vadd.f32 %v4873, %v5101
    %v5103 = vpop.f32.mrb[0].mxu0
    %v5104 = vpop.f32.mrb[0].mxu0
    %v5105 = vadd.f32 %v4873, %v5104
    %v5106 = vpop.f32.mrb[0].mxu0
    %5107 = vmatprep.mubr.bf16.mxu0 %v4745
    %5108 = vmatmul.mubr.bf16.gmra.mrb[0].mxu0 %v4744
    %v5109 = vpop.f32.mrb[0].mxu0
    %v5110 = vadd.f32 %v4873, %v5109
    %v5111 = vpop.f32.mrb[0].mxu0
    %v5112 = vpop.f32.mrb[0].mxu0
    %v5113 = vadd.f32 %v4873, %v5112
    %v5114 = vpop.f32.mrb[0].mxu0
    %5115 = vmatprep.mubr.bf16.mxu0 %v4749
    %5116 = vmatmul.mubr.bf16.gmra.mrb[0].mxu0 %v4748
    %v5117 = vpop.f32.mrb[0].mxu0
    %v5118 = vadd.f32 %v4873, %v5117
    %v5119 = vpop.f32.mrb[0].mxu0
    %v5120 = vpop.f32.mrb[0].mxu0
    %v5121 = vadd.f32 %v4873, %v5120
    %v5122 = vpop.f32.mrb[0].mxu0
    %5123 = vmatprep.mubr.bf16.mxu0 %v4753
    %5124 = vmatmul.mubr.bf16.gmra.mrb[0].mxu0 %v4752
    %v5125 = vpop.f32.mrb[0].mxu0
    %v5126 = vadd.f32 %v4873, %v5125
    %v5127 = vpop.f32.mrb[0].mxu0
    %v5128 = vpop.f32.mrb[0].mxu0
    %v5129 = vadd.f32 %v4873, %v5128
    %v5130 = vpop.f32.mrb[0].mxu0
    %5131 = vmatprep.mubr.bf16.mxu0 %v4757
    %5132 = vmatmul.mubr.bf16.gmra.mrb[0].mxu0 %v4756
    %v5133 = vpop.f32.mrb[0].mxu0
    %v5134 = vadd.f32 %v4873, %v5133
    %v5135 = vpop.f32.mrb[0].mxu0
    %v5136 = vpop.f32.mrb[0].mxu0
    %v5137 = vadd.f32 %v4873, %v5136
    %v5138 = vpop.f32.mrb[0].mxu0
    %5139 = vmatprep.mubr.bf16.mxu0 %v4761
    %5140 = vmatmul.mubr.bf16.gmra.mrb[0].mxu0 %v4760
    %v5141 = vpop.f32.mrb[0].mxu0
    %v5142 = vadd.f32 %v4873, %v5141
    %v5143 = vpop.f32.mrb[0].mxu0
    %v5144 = vpop.f32.mrb[0].mxu0
    %v5145 = vadd.f32 %v4873, %v5144
    %v5146 = vpop.f32.mrb[0].mxu0
    %5147 = vmatprep.mubr.bf16.mxu0 %v4765
    %5148 = vmatmul.mubr.bf16.gmra.mrb[0].mxu0 %v4764
    %v5149 = vpop.f32.mrb[0].mxu0
    %v5150 = vadd.f32 %v4873, %v5149
    %v5151 = vpop.f32.mrb[0].mxu0
    %v5152 = vpop.f32.mrb[0].mxu0
    %v5153 = vadd.f32 %v4873, %v5152
    %v5154 = vpop.f32.mrb[0].mxu0
    %5155 = vmatprep.mubr.bf16.mxu0 %v4769
    %5156 = vmatmul.mubr.bf16.gmra.mrb[0].mxu0 %v4768
    %v5157 = vpop.f32.mrb[0].mxu0
    %v5158 = vadd.f32 %v4873, %v5157
    %v5159 = vpop.f32.mrb[0].mxu0
    %v5160 = vpop.f32.mrb[0].mxu0
    %v5161 = vadd.f32 %v4873, %v5160
    %v5162 = vpop.f32.mrb[0].mxu0
    %5163 = vmatprep.mubr.bf16.mxu0 %v4773
    %5164 = vmatmul.mubr.bf16.gmra.mrb[0].mxu0 %v4772
    %v5165 = vpop.f32.mrb[0].mxu0
    %v5166 = vadd.f32 %v4873, %v5165
    %v5167 = vpop.f32.mrb[0].mxu0
    %v5168 = vpop.f32.mrb[0].mxu0
    %v5169 = vadd.f32 %v4873, %v5168
    %v5170 = vpop.f32.mrb[0].mxu0
    %5171 = vmatprep.mubr.bf16.mxu0 %v4777
    %5172 = vmatmul.mubr.bf16.gmra.mrb[0].mxu0 %v4776
    %v5173 = vpop.f32.mrb[0].mxu0
    %v5174 = vadd.f32 %v4873, %v5173
    %v5175 = vpop.f32.mrb[0].mxu0
    %v5176 = vpop.f32.mrb[0].mxu0
    %v5177 = vadd.f32 %v4873, %v5176
    %v5178 = vpop.f32.mrb[0].mxu0
    %5179 = vmatprep.mubr.bf16.mxu0 %v4781
    %5180 = vmatmul.mubr.bf16.gmra.mrb[0].mxu0 %v4780
    %v5181 = vpop.f32.mrb[0].mxu0
    %v5182 = vadd.f32 %v4873, %v5181
    %v5183 = vpop.f32.mrb[0].mxu0
    %v5184 = vpop.f32.mrb[0].mxu0
    %v5185 = vadd.f32 %v4873, %v5184
    %v5186 = vpop.f32.mrb[0].mxu0
    %5187 = vmatprep.mubr.bf16.mxu0 %v4785
    %5188 = vmatmul.mubr.bf16.gmra.mrb[0].mxu0 %v4784
    %v5189 = vpop.f32.mrb[0].mxu0
    %v5190 = vadd.f32 %v4873, %v5189
    %v5191 = vpop.f32.mrb[0].mxu0
    %v5192 = vpop.f32.mrb[0].mxu0
    %v5193 = vadd.f32 %v4873, %v5192
    %v5194 = vpop.f32.mrb[0].mxu0
    %5195 = vmatprep.mubr.bf16.mxu0 %v4789
    %5196 = vmatmul.mubr.bf16.gmra.mrb[0].mxu0 %v4788
    %v5197 = vpop.f32.mrb[0].mxu0
    %v5198 = vadd.f32 %v4873, %v5197
    %v5199 = vpop.f32.mrb[0].mxu0
    %v5200 = vpop.f32.mrb[0].mxu0
    %v5201 = vadd.f32 %v4873, %v5200
    %v5202 = vpop.f32.mrb[0].mxu0
    %5203 = vmatprep.mubr.bf16.mxu0 %v4793
    %5204 = vmatmul.mubr.bf16.gmra.mrb[0].mxu0 %v4792
    %v5205 = vpop.f32.mrb[0].mxu0
    %v5206 = vadd.f32 %v4873, %v5205
    %v5207 = vpop.f32.mrb[0].mxu0
    %v5208 = vpop.f32.mrb[0].mxu0
    %v5209 = vadd.f32 %v4873, %v5208
    %v5210 = vpop.f32.mrb[0].mxu0
    %5211 = vmatprep.mubr.bf16.mxu0 %v4797
    %5212 = vmatmul.mubr.bf16.gmra.mrb[0].mxu0 %v4796
    %v5213 = vpop.f32.mrb[0].mxu0
    %v5214 = vadd.f32 %v4873, %v5213
    %v5215 = vpop.f32.mrb[0].mxu0
    %v5216 = vpop.f32.mrb[0].mxu0
    %v5217 = vadd.f32 %v4873, %v5216
    %v5218 = vpop.f32.mrb[0].mxu0
    %5219 = vmatprep.mubr.bf16.mxu0 %v4801
    %5220 = vmatmul.mubr.bf16.gmra.mrb[0].mxu0 %v4800
    %v5221 = vpop.f32.mrb[0].mxu0
    %v5222 = vadd.f32 %v4873, %v5221
    %v5223 = vpop.f32.mrb[0].mxu0
    %v5224 = vpop.f32.mrb[0].mxu0
    %v5225 = vadd.f32 %v4873, %v5224
    %v5226 = vpop.f32.mrb[0].mxu0
    %5227 = vdwg.mxu0
    %5228 = vmatprep.subr.bf16.mxu0 0
    %5229 = vmatpush1.bf16.msra.mxu0 %v5019
    %5230 = vmatprep.subr.bf16.mxu0 0
    %5231 = vmatpush1.bf16.msra.mxu0 %v5020
    %5232 = vmatprep.subr.bf16.mxu0 0
    %5233 = vmatpush1.bf16.msra.mxu0 %v5021
    %5234 = vmatprep.subr.bf16.mxu0 0
    %5235 = vmatpush1.bf16.msra.mxu0 %v5022
    %5236 = vmatprep.subr.bf16.mxu0 0
    %5237 = vmatpush1.bf16.msra.mxu0 %v5023
    %5238 = vmatprep.subr.bf16.mxu0 0
    %5239 = vmatpush1.bf16.msra.mxu0 %v5024
    %5240 = vmatprep.subr.bf16.mxu0 0
    %5241 = vmatpush1.bf16.msra.mxu0 %v5025
    %5242 = vmatprep.subr.bf16.mxu0 0
    %5243 = vmatpush1.bf16.msra.mxu0 %v5026
    %5244 = vmatprep.subr.bf16.mxu0 0
    %5245 = vmatpush1.bf16.msra.mxu0 %v5027
    %5246 = vmatprep.subr.bf16.mxu0 0
    %5247 = vmatpush1.bf16.msra.mxu0 %v5028
    %5248 = vmatprep.subr.bf16.mxu0 0
    %5249 = vmatpush1.bf16.msra.mxu0 %v5029
    %5250 = vmatprep.subr.bf16.mxu0 0
    %5251 = vmatpush1.bf16.msra.mxu0 %v5030
    %5252 = vmatprep.subr.bf16.mxu0 0
    %5253 = vmatpush1.bf16.msra.mxu0 %v5031
    %5254 = vmatprep.subr.bf16.mxu0 0
    %5255 = vmatpush1.bf16.msra.mxu0 %v5032
    %5256 = vmatprep.subr.bf16.mxu0 0
    %5257 = vmatpush1.bf16.msra.mxu0 %v5033
    %5258 = vmatprep.subr.bf16.mxu0 0
    %5259 = vmatpush1.bf16.msra.mxu0 %v5034
    %5260 = vmatprep.mubr.bf16.mxu0 %v4743
    %5261 = vmatmul.mubr.bf16.gmra.mrb[0].mxu0 %v4742
    %v5262 = vpop.f32.mrb[0].mxu0
    %v5263 = vadd.f32 %v5102, %v5262
    %v5264 = vpop.f32.mrb[0].mxu0
    %v5265 = vpop.f32.mrb[0].mxu0
    %v5266 = vadd.f32 %v5105, %v5265
    %v5267 = vpop.f32.mrb[0].mxu0
    %5268 = vmatprep.mubr.bf16.mxu0 %v4747
    %5269 = vmatmul.mubr.bf16.gmra.mrb[0].mxu0 %v4746
    %v5270 = vpop.f32.mrb[0].mxu0
    %v5271 = vadd.f32 %v5110, %v5270
    %v5272 = vpop.f32.mrb[0].mxu0
    %v5273 = vpop.f32.mrb[0].mxu0
    %v5274 = vadd.f32 %v5113, %v5273
    %v5275 = vpop.f32.mrb[0].mxu0
    %5276 = vmatprep.mubr.bf16.mxu0 %v4751
    %5277 = vmatmul.mubr.bf16.gmra.mrb[0].mxu0 %v4750
    %v5278 = vpop.f32.mrb[0].mxu0
    %v5279 = vadd.f32 %v5118, %v5278
    %v5280 = vpop.f32.mrb[0].mxu0
    %v5281 = vpop.f32.mrb[0].mxu0
    %v5282 = vadd.f32 %v5121, %v5281
    %v5283 = vpop.f32.mrb[0].mxu0
    %5284 = vmatprep.mubr.bf16.mxu0 %v4755
    %5285 = vmatmul.mubr.bf16.gmra.mrb[0].mxu0 %v4754
    %v5286 = vpop.f32.mrb[0].mxu0
    %v5287 = vadd.f32 %v5126, %v5286
    %v5288 = vpop.f32.mrb[0].mxu0
    %v5289 = vpop.f32.mrb[0].mxu0
    %v5290 = vadd.f32 %v5129, %v5289
    %v5291 = vpop.f32.mrb[0].mxu0
    %5292 = vmatprep.mubr.bf16.mxu0 %v4759
    %5293 = vmatmul.mubr.bf16.gmra.mrb[0].mxu0 %v4758
    %v5294 = vpop.f32.mrb[0].mxu0
    %v5295 = vadd.f32 %v5134, %v5294
    %v5296 = vpop.f32.mrb[0].mxu0
    %v5297 = vpop.f32.mrb[0].mxu0
    %v5298 = vadd.f32 %v5137, %v5297
    %v5299 = vpop.f32.mrb[0].mxu0
    %5300 = vmatprep.mubr.bf16.mxu0 %v4763
    %5301 = vmatmul.mubr.bf16.gmra.mrb[0].mxu0 %v4762
    %v5302 = vpop.f32.mrb[0].mxu0
    %v5303 = vadd.f32 %v5142, %v5302
    %v5304 = vpop.f32.mrb[0].mxu0
    %v5305 = vpop.f32.mrb[0].mxu0
    %v5306 = vadd.f32 %v5145, %v5305
    %v5307 = vpop.f32.mrb[0].mxu0
    %5308 = vmatprep.mubr.bf16.mxu0 %v4767
    %5309 = vmatmul.mubr.bf16.gmra.mrb[0].mxu0 %v4766
    %v5310 = vpop.f32.mrb[0].mxu0
    %v5311 = vadd.f32 %v5150, %v5310
    %v5312 = vpop.f32.mrb[0].mxu0
    %v5313 = vpop.f32.mrb[0].mxu0
    %v5314 = vadd.f32 %v5153, %v5313
    %v5315 = vpop.f32.mrb[0].mxu0
    %5316 = vmatprep.mubr.bf16.mxu0 %v4771
    %5317 = vmatmul.mubr.bf16.gmra.mrb[0].mxu0 %v4770
    %v5318 = vpop.f32.mrb[0].mxu0
    %v5319 = vadd.f32 %v5158, %v5318
    %v5320 = vpop.f32.mrb[0].mxu0
    %v5321 = vpop.f32.mrb[0].mxu0
    %v5322 = vadd.f32 %v5161, %v5321
    %v5323 = vpop.f32.mrb[0].mxu0
    %5324 = vmatprep.mubr.bf16.mxu0 %v4775
    %5325 = vmatmul.mubr.bf16.gmra.mrb[0].mxu0 %v4774
    %v5326 = vpop.f32.mrb[0].mxu0
    %v5327 = vadd.f32 %v5166, %v5326
    %v5328 = vpop.f32.mrb[0].mxu0
    %v5329 = vpop.f32.mrb[0].mxu0
    %v5330 = vadd.f32 %v5169, %v5329
    %v5331 = vpop.f32.mrb[0].mxu0
    %5332 = vmatprep.mubr.bf16.mxu0 %v4779
    %5333 = vmatmul.mubr.bf16.gmra.mrb[0].mxu0 %v4778
    %v5334 = vpop.f32.mrb[0].mxu0
    %v5335 = vadd.f32 %v5174, %v5334
    %v5336 = vpop.f32.mrb[0].mxu0
    %v5337 = vpop.f32.mrb[0].mxu0
    %v5338 = vadd.f32 %v5177, %v5337
    %v5339 = vpop.f32.mrb[0].mxu0
    %5340 = vmatprep.mubr.bf16.mxu0 %v4783
    %5341 = vmatmul.mubr.bf16.gmra.mrb[0].mxu0 %v4782
    %v5342 = vpop.f32.mrb[0].mxu0
    %v5343 = vadd.f32 %v5182, %v5342
    %v5344 = vpop.f32.mrb[0].mxu0
    %v5345 = vpop.f32.mrb[0].mxu0
    %v5346 = vadd.f32 %v5185, %v5345
    %v5347 = vpop.f32.mrb[0].mxu0
    %5348 = vmatprep.mubr.bf16.mxu0 %v4787
    %5349 = vmatmul.mubr.bf16.gmra.mrb[0].mxu0 %v4786
    %v5350 = vpop.f32.mrb[0].mxu0
    %v5351 = vadd.f32 %v5190, %v5350
    %v5352 = vpop.f32.mrb[0].mxu0
    %v5353 = vpop.f32.mrb[0].mxu0
    %v5354 = vadd.f32 %v5193, %v5353
    %v5355 = vpop.f32.mrb[0].mxu0
    %5356 = vmatprep.mubr.bf16.mxu0 %v4791
    %5357 = vmatmul.mubr.bf16.gmra.mrb[0].mxu0 %v4790
    %v5358 = vpop.f32.mrb[0].mxu0
    %v5359 = vadd.f32 %v5198, %v5358
    %v5360 = vpop.f32.mrb[0].mxu0
    %v5361 = vpop.f32.mrb[0].mxu0
    %v5362 = vadd.f32 %v5201, %v5361
    %v5363 = vpop.f32.mrb[0].mxu0
    %5364 = vmatprep.mubr.bf16.mxu0 %v4795
    %5365 = vmatmul.mubr.bf16.gmra.mrb[0].mxu0 %v4794
    %v5366 = vpop.f32.mrb[0].mxu0
    %v5367 = vadd.f32 %v5206, %v5366
    %v5368 = vpop.f32.mrb[0].mxu0
    %v5369 = vpop.f32.mrb[0].mxu0
    %v5370 = vadd.f32 %v5209, %v5369
    %v5371 = vpop.f32.mrb[0].mxu0
    %5372 = vmatprep.mubr.bf16.mxu0 %v4799
    %5373 = vmatmul.mubr.bf16.gmra.mrb[0].mxu0 %v4798
    %v5374 = vpop.f32.mrb[0].mxu0
    %v5375 = vadd.f32 %v5214, %v5374
    %v5376 = vpop.f32.mrb[0].mxu0
    %v5377 = vpop.f32.mrb[0].mxu0
    %v5378 = vadd.f32 %v5217, %v5377
    %v5379 = vpop.f32.mrb[0].mxu0
    %5380 = vmatprep.mubr.bf16.mxu0 %v4803
    %5381 = vmatmul.mubr.bf16.gmra.mrb[0].mxu0 %v4802
    %v5382 = vpop.f32.mrb[0].mxu0
    %v5383 = vadd.f32 %v5222, %v5382
    %v5384 = vpop.f32.mrb[0].mxu0
    %v5385 = vpop.f32.mrb[0].mxu0
    %v5386 = vadd.f32 %v5225, %v5385
    %v5387 = vpop.f32.mrb[0].mxu0
    %5388 = vdwg.mxu0
    %5389 = vst [vmem:[%s7] sm:$0xff] %v5263
    %5390 = vst [vmem:[%s7 + $0x8] sm:$0xff] %v5266
    %5391 = vst [vmem:[%s7 + $0x10] sm:$0xff] %v5271
    %5392 = vst [vmem:[%s7 + $0x18] sm:$0xff] %v5274
    %5393 = vst [vmem:[%s7 + $0x20] sm:$0xff] %v5279
    %5394 = vst [vmem:[%s7 + $0x28] sm:$0xff] %v5282
    %5395 = vst [vmem:[%s7 + $0x30] sm:$0xff] %v5287
    %5396 = vst [vmem:[%s7 + $0x38] sm:$0xff] %v5290
    %5397 = vst [vmem:[%s7 + $0x40] sm:$0xff] %v5295
    %5398 = vst [vmem:[%s7 + $0x48] sm:$0xff] %v5298
    %5399 = vst [vmem:[%s7 + $0x50] sm:$0xff] %v5303
    %5400 = vst [vmem:[%s7 + $0x58] sm:$0xff] %v5306
    %5401 = vst [vmem:[%s7 + $0x60] sm:$0xff] %v5311
    %5402 = vst [vmem:[%s7 + $0x68] sm:$0xff] %v5314
    %5403 = vst [vmem:[%s7 + $0x70] sm:$0xff] %v5319
    %5404 = vst [vmem:[%s7 + $0x78] sm:$0xff] %v5322
    %5405 = vst [vmem:[%s7 + $0x80] sm:$0xff] %v5327
    %5406 = vst [vmem:[%s7 + $0x88] sm:$0xff] %v5330
    %5407 = vst [vmem:[%s7 + $0x90] sm:$0xff] %v5335
    %5408 = vst [vmem:[%s7 + $0x98] sm:$0xff] %v5338
    %5409 = vst [vmem:[%s7 + $0xa0] sm:$0xff] %v5343
    %5410 = vst [vmem:[%s7 + $0xa8] sm:$0xff] %v5346
    %5411 = vst [vmem:[%s7 + $0xb0] sm:$0xff] %v5351
    %5412 = vst [vmem:[%s7 + $0xb8] sm:$0xff] %v5354
    %5413 = vst [vmem:[%s7 + $0xc0] sm:$0xff] %v5359
    %5414 = vst [vmem:[%s7 + $0xc8] sm:$0xff] %v5362
    %5415 = vst [vmem:[%s7 + $0xd0] sm:$0xff] %v5367
    %5416 = vst [vmem:[%s7 + $0xd8] sm:$0xff] %v5370
    %5417 = vst [vmem:[%s7 + $0xe0] sm:$0xff] %v5375
    %5418 = vst [vmem:[%s7 + $0xe8] sm:$0xff] %v5378
    %5419 = vst [vmem:[%s7 + $0xf0] sm:$0xff] %v5383
    %5420 = vst [vmem:[%s7 + $0xf8] sm:$0xff] %v5386
    // Predicated region
    $region38: #{_forward.1} parent=1 // pred_check
      _
    $region39: #{_forward.1} parent=1 // pred_check_branch
      %5422 = sbr.rel (0) target = $region41
    $region40: #{_forward.1} parent=1 // pred_region
      _
    $region41: #{_forward.1} parent=1 // pred_fallthru
      _
    // Predicated region
    $region42: #{_forward.1} parent=1 // pred_check
      _
    $region43: #{_forward.1} parent=1 // pred_check_branch
      %5424 = sbr.rel (0) target = $region45
    $region44: #{_forward.1} parent=1 // pred_region
      _
    $region45: #{_forward.1} parent=1 // pred_fallthru
      _
    %5425 = vsyncpa [#allocation3], 1
    %5426 = vsyncpa [#allocation5], 1

</llo_original>
